<compile_context>
chip_gen: v6e
topology: v6e:2x2x1
jax: 0.10.0
libtpu: 0.0.40
codegen_flags: <defaults>
</compile_context>

<pallas_src>
import numpy as np

import jax
import jax.numpy as jnp
from jax import lax
from jax.experimental import pallas as pl
from jax.experimental.pallas import tpu as pltpu

BN_EPS = 1e-5
_CPAD = 8  # pad input-channel counts to a multiple of 8 so W*Cin is a 128-lane multiple


def _round_up(x, m):
    return (x + m - 1) // m * m


# --------------------- kernel-layout parameter preparation --------------------- #

def _conv_band_weights(w_hwio, W, cin_pad):
    """Fold ALL nine taps + W-direction zero padding of a 3x3 SAME conv into one
    (3*W*cin_pad, W*Co) matrix:
        band[(kh*W + jin)*cin_pad + ci, j*Co + co] = w[kh, jin - j + 1, ci, co]."""
    KH, KW, Cin, Co = w_hwio.shape
    w = np.asarray(w_hwio, np.float32)
    band = np.zeros((KH * W * cin_pad, W * Co), np.float32)
    for kh in range(KH):
        for kw in range(KW):
            for j in range(W):
                jin = j + kw - 1                      # input column feeding output column j
                if 0 <= jin < W:
                    r0 = (kh * W + jin) * cin_pad
                    band[r0:r0 + Cin, j * Co:(j + 1) * Co] = w[kh, kw]
    return jnp.asarray(band, jnp.bfloat16)


def _lane_tile(v, W):
    """(1, C) per-channel vector -> (1, W*C) in the interleaved (w, c) lane layout."""
    v = np.asarray(v, np.float32).reshape(1, -1)
    return jnp.asarray(np.tile(v, (1, W)), jnp.float32)


def prepare_kernel_params(params, H, W):
    """One-time host-side conversion of PyTorch-layout params to kernel layout."""
    convs = []
    for (w, g, b) in params["convs"]:
        cin_pad = _round_up(int(w.shape[2]), _CPAD)
        convs.append((_conv_band_weights(w, W, cin_pad),
                      _lane_tile(g, W),
                      _lane_tile(b, W)))
    C = int(params["convs"][-1][0].shape[-1])
    D = int(params["lin_w"].shape[-1])
    assert params["lin_w"].shape[0] == C * H * W
    # PyTorch flattens NCHW -> (c, h, w); activations live as (row=(n,h), lane=w*C+c),
    # so permute the Linear weight rows once to (h, w, c) order instead of
    # transposing the activations at run time.
    lw = np.asarray(params["lin_w"], np.float32)                 # (C*H*W, D)
    lw = lw.reshape(C, H, W, D).transpose(1, 2, 0, 3).reshape(H * W * C, D)
    return {
        "convs": convs,
        "lin_w": jnp.asarray(lw, jnp.bfloat16),
        "lin_b": jnp.asarray(params["lin_b"], jnp.float32),
    }


# ------------------------------ fused Pallas kernel ----------------------------- #

def _full_spec(shape):
    zeros = (0,) * len(shape)
    return pl.BlockSpec(shape, lambda i: zeros)


def _build_encoder_kernel(N, H, W, cins, C, halo_index):
    n_conv = len(cins)
    n_halo = max(halo_index) + 1
    WC = W * C
    NH = N * H
    inv_m = 1.0 / float(N * H * W)
    w_log2 = W.bit_length() - 1
    assert (1 << w_log2) == W, "roll-add BN reduction needs W to be a power of two"

    def kernel(*refs):
        x_ref = refs[0]
        conv_refs = refs[1:1 + 3 * n_conv]
        linw_ref = refs[1 + 3 * n_conv]
        linb_ref = refs[2 + 3 * n_conv]
        o_ref = refs[3 + 3 * n_conv]
        scratch = refs[4 + 3 * n_conv:]
        halo_refs = scratch[:n_halo]
        rowbuf = scratch[n_halo]        # (N*H, W*C) f32
        flatbuf = scratch[n_halo + 1]   # (N, H*W*C) f32

        # Zero ONLY the two halo rows of each image block, once; the interior is
        # rewritten every layer.
        for hr in halo_refs:
            zrow = jnp.zeros((N, 1, hr.shape[-1]), jnp.float32)
            hr[:, 0:1, :] = zrow
            hr[:, H + 1:H + 2, :] = zrow

        cur = x_ref[...]                                     # (N*H, W*cin0) f32
        for l in range(n_conv):
            band_ref = conv_refs[3 * l]
            g_ref = conv_refs[3 * l + 1]
            b_ref = conv_refs[3 * l + 2]
            cin = cins[l]
            wcin = W * cin
            halo = halo_refs[halo_index[l]]

            # H-direction halo padding, entirely in VMEM (interior rows 1..H).
            halo[:, 1:H + 1, :] = cur.reshape(N, H, wcin)

            # 3x3 conv == ONE matmul: lane-concatenate the three kh-shifted row
            # windows (K = 3*W*cin) against the merged band matrix.
            taps = [halo[:, kh:kh + H, :].reshape(NH, wcin).astype(jnp.bfloat16)
                    for kh in range(3)]
            lhs = jnp.concatenate(taps, axis=-1)             # (N*H, 3*W*cin) bf16
            acc = jnp.dot(lhs, band_ref[...],
                          preferred_element_type=jnp.float32)  # (N*H, W*C) f32

            # BatchNorm2d (training-mode batch stats, one pass) + ReLU, in f32.
            # Per-channel reduce + broadcast across the interleaved (w, c) lane
            # layout is a log2(W) roll-add tree on the XLU (no tiny matmuls).
            s1 = jnp.sum(acc, axis=0, keepdims=True)          # (1, W*C)
            s2 = jnp.sum(acc * acc, axis=0, keepdims=True)    # (1, W*C)
            for k in range(w_log2):
                sh = C << k
                s1 = s1 + pltpu.roll(s1, shift=sh, axis=1)
                s2 = s2 + pltpu.roll(s2, shift=sh, axis=1)
            mean = s1 * inv_m                                 # per-channel, lane-replicated
            var = jnp.maximum(s2 * inv_m - mean * mean, 0.0)  # clamp one-pass variance
            scale = g_ref[...] * lax.rsqrt(var + BN_EPS)      # (1, W*C)
            shift = b_ref[...] - mean * scale                 # (1, W*C)
            cur = jnp.maximum(acc * scale + shift, 0.0)       # (N*H, W*C)

        # Flatten (PyTorch (c,h,w) order folded into lin_w rows) + Linear as ONE
        # (N, H*W*C) x (H*W*C, D) matmul: bounce the rows through VMEM to build a
        # lane-dense (N, H*W*C) slab.
        rowbuf[...] = cur                                     # aligned full store
        for n in range(N):
            for h in range(H):
                flatbuf[pl.ds(n, 1), pl.ds(h * WC, WC)] = rowbuf[pl.ds(n * H + h, 1), :]
        flat = flatbuf[...].astype(jnp.bfloat16)              # (N, H*W*C) bf16
        out = jnp.dot(flat, linw_ref[...], preferred_element_type=jnp.float32)
        o_ref[...] = out + linb_ref[...]

    return kernel


def encoder_forward(x_nchw, kparams):
    """Encoder.forward(x) for NCHW input, as one fused Pallas TPU kernel."""
    N, Cin0, H, W = x_nchw.shape
    bands = [band for (band, _, _) in kparams["convs"]]
    C = bands[-1].shape[1] // W
    cins = [band.shape[0] // (3 * W) for band in bands]       # padded per-layer Cin
    out_dim = int(kparams["lin_b"].shape[-1])

    # Boundary layout change: NCHW -> (N*H, W*Cin) lane-dense rows, with the
    # input channels zero-padded so W*Cin fills whole 128-lane tiles.
    cin_pad0 = cins[0]
    x_nhwc = jnp.transpose(x_nchw, (0, 2, 3, 1)).astype(jnp.float32)
    if cin_pad0 > Cin0:
        x_nhwc = jnp.pad(x_nhwc, ((0, 0), (0, 0), (0, 0), (0, cin_pad0 - Cin0)))
    x_rows = x_nhwc.reshape(N * H, W * cin_pad0)

    inputs = [x_rows]
    for (band, g, b) in kparams["convs"]:
        inputs += [band, g, b]
    inputs += [kparams["lin_w"], kparams["lin_b"]]

    # One halo scratch per distinct layer-input lane width (usually just one,
    # since layer-0 channels are padded up to C).
    widths, halo_index = [], []
    for c in cins:
        wdt = W * c
        if wdt not in widths:
            widths.append(wdt)
        halo_index.append(widths.index(wdt))
    scratch_shapes = [pltpu.VMEM((N, H + 2, wdt), jnp.float32) for wdt in widths]
    scratch_shapes += [pltpu.VMEM((N * H, W * C), jnp.float32),     # rowbuf
                       pltpu.VMEM((N, H * W * C), jnp.float32)]     # flatbuf

    kernel = _build_encoder_kernel(N, H, W, cins, C, halo_index)
    return pl.pallas_call(
        kernel,
        out_shape=jax.ShapeDtypeStruct((N, out_dim), jnp.float32),
        grid=(1,),
        in_specs=[_full_spec(tuple(a.shape)) for a in inputs],
        out_specs=_full_spec((N, out_dim)),
        scratch_shapes=scratch_shapes,
        compiler_params=pltpu.CompilerParams(
            dimension_semantics=("arbitrary",)),
    )(*inputs)


# ------------------------ deterministic parameter init -------------------------- #

def init_params(key, num_layers, in_channels, channels, out_dim, fin_size):
    convs = []
    cin = in_channels
    for _ in range(num_layers + 1):
        key, kw, kg, kb = jax.random.split(key, 4)
        w = jax.random.normal(kw, (3, 3, cin, channels), jnp.float32) / jnp.sqrt(9.0 * cin)
        g = 1.0 + 0.1 * jax.random.normal(kg, (1, channels), jnp.float32)
        b = 0.1 * jax.random.normal(kb, (1, channels), jnp.float32)
        convs.append((w, g, b))
        cin = channels
    F = channels * fin_size ** 2
    key, kw, kb = jax.random.split(key, 3)
    lin_w = jax.random.normal(kw, (F, out_dim), jnp.float32) / jnp.sqrt(float(F))
    lin_b = 0.1 * jax.random.normal(kb, (1, out_dim), jnp.float32)
    return {"convs": convs, "lin_w": lin_w, "lin_b": lin_b}


# ------------------------------ plain-JAX reference ------------------------------ #

def ref_forward(x_nchw, params):
    h = jnp.transpose(x_nchw, (0, 2, 3, 1))
    for (w, g, b) in params["convs"]:
        y = lax.conv_general_dilated(
            h, w, window_strides=(1, 1), padding="SAME",
            dimension_numbers=("NHWC", "HWIO", "NHWC"))
        mean = y.mean(axis=(0, 1, 2), keepdims=True)
        var = ((y - mean) ** 2).mean(axis=(0, 1, 2), keepdims=True)
        y = (y - mean) * lax.rsqrt(var + BN_EPS) * g.reshape(1, 1, 1, -1) \
            + b.reshape(1, 1, 1, -1)
        h = jnp.maximum(y, 0.0)
    flat = jnp.transpose(h, (0, 3, 1, 2)).reshape(h.shape[0], -1)
    return flat @ params["lin_w"] + params["lin_b"]


# ------------------------------------- main -------------------------------------- #

if __name__ == "__main__":
    # Encoder(num_layers=2, in_channels=4, channels=8, out_dim=32, fin_size=16,
    #         downsample=False, norm_name='bn', act_name='relu')
    num_layers, in_channels, channels, out_dim, fin_size = 2, 4, 8, 32, 16
    N, H, W = 2, fin_size, fin_size

    root = jax.random.PRNGKey(0)
    kx, kp_key = jax.random.split(root)
    x = jax.random.normal(kx, (N, in_channels, H, W), jnp.float32)  # NCHW like PyTorch
    params = init_params(kp_key, num_layers, in_channels, channels, out_dim, fin_size)

    # One-time host-side conversion (merged-tap band matrices, lane-tiled gamma/beta,
    # permuted Linear weight).
    kparams = prepare_kernel_params(params, H, W)

    fwd = jax.jit(encoder_forward)
    out = jax.block_until_ready(fwd(x, kparams))

    assert out.shape == (N, out_dim), out.shape
    assert bool(jnp.all(jnp.isfinite(out)))
    ref = ref_forward(x, params)
    assert jnp.allclose(out, ref, rtol=5e-2, atol=5e-2), \
        f"max abs err {jnp.max(jnp.abs(out - ref))}"

    print("KERNEL_OK")
</pallas_src>

<mosaic_0001>
module attributes {stable_mosaic.version = 11 : i64} {
  func.func @kernel(%arg0: i32, %arg1: memref<32x128xf32, #tpu.memory_space<vmem>>, %arg2: memref<384x128xbf16, #tpu.memory_space<vmem>>, %arg3: memref<1x128xf32, #tpu.memory_space<vmem>>, %arg4: memref<1x128xf32, #tpu.memory_space<vmem>>, %arg5: memref<384x128xbf16, #tpu.memory_space<vmem>>, %arg6: memref<1x128xf32, #tpu.memory_space<vmem>>, %arg7: memref<1x128xf32, #tpu.memory_space<vmem>>, %arg8: memref<384x128xbf16, #tpu.memory_space<vmem>>, %arg9: memref<1x128xf32, #tpu.memory_space<vmem>>, %arg10: memref<1x128xf32, #tpu.memory_space<vmem>>, %arg11: memref<2048x32xbf16, #tpu.memory_space<vmem>>, %arg12: memref<1x32xf32, #tpu.memory_space<vmem>>, %arg13: memref<2x32xf32, #tpu.memory_space<vmem>>, %arg14: memref<2x18x128xf32, #tpu.memory_space<vmem>>, %arg15: memref<32x128xf32, #tpu.memory_space<vmem>>, %arg16: memref<2x2048xf32, #tpu.memory_space<vmem>>) attributes {dimension_semantics = [#tpu.dimension_semantics<arbitrary>], iteration_bounds = array<i64: 1>, scalar_prefetch = 0 : i64, scratch_operands = 3 : i64, tpu.core_type = #tpu.core_type<tc>, window_params = [{pipeline_mode = #tpu.pipeline_mode<synchronous>, transform_indices = @transform_0, window_bounds = array<i64: 32, 128>}, {pipeline_mode = #tpu.pipeline_mode<synchronous>, transform_indices = @transform_1, window_bounds = array<i64: 384, 128>}, {pipeline_mode = #tpu.pipeline_mode<synchronous>, transform_indices = @transform_2, window_bounds = array<i64: 1, 128>}, {pipeline_mode = #tpu.pipeline_mode<synchronous>, transform_indices = @transform_3, window_bounds = array<i64: 1, 128>}, {pipeline_mode = #tpu.pipeline_mode<synchronous>, transform_indices = @transform_4, window_bounds = array<i64: 384, 128>}, {pipeline_mode = #tpu.pipeline_mode<synchronous>, transform_indices = @transform_5, window_bounds = array<i64: 1, 128>}, {pipeline_mode = #tpu.pipeline_mode<synchronous>, transform_indices = @transform_6, window_bounds = array<i64: 1, 128>}, {pipeline_mode = #tpu.pipeline_mode<synchronous>, transform_indices = @transform_7, window_bounds = array<i64: 384, 128>}, {pipeline_mode = #tpu.pipeline_mode<synchronous>, transform_indices = @transform_8, window_bounds = array<i64: 1, 128>}, {pipeline_mode = #tpu.pipeline_mode<synchronous>, transform_indices = @transform_9, window_bounds = array<i64: 1, 128>}, {pipeline_mode = #tpu.pipeline_mode<synchronous>, transform_indices = @transform_10, window_bounds = array<i64: 2048, 32>}, {pipeline_mode = #tpu.pipeline_mode<synchronous>, transform_indices = @transform_11, window_bounds = array<i64: 1, 32>}, {pipeline_mode = #tpu.pipeline_mode<synchronous>, transform_indices = @transform_12, window_bounds = array<i64: 2, 32>}]} {
    %cst = arith.constant 0.000000e+00 : f32
    %0 = vector.broadcast %cst : f32 to vector<2x1x128xf32>
    %c0 = arith.constant 0 : index
    %c0_0 = arith.constant 0 : index
    %c0_1 = arith.constant 0 : index
    %1 = vector.load %arg14[%c0, %c0_0, %c0_1] : memref<2x18x128xf32, #tpu.memory_space<vmem>>, vector<2x1x128xf32>
    tpu.vector_store %arg14[%c0, %c0_0, %c0_1], %0 {strides = array<i32>} : memref<2x18x128xf32, #tpu.memory_space<vmem>>, vector<2x1x128xf32>,
    %c0_2 = arith.constant 0 : index
    %c17 = arith.constant 17 : index
    %c0_3 = arith.constant 0 : index
    %2 = vector.load %arg14[%c0_2, %c17, %c0_3] : memref<2x18x128xf32, #tpu.memory_space<vmem>>, vector<2x1x128xf32>
    tpu.vector_store %arg14[%c0_2, %c17, %c0_3], %0 {strides = array<i32>} : memref<2x18x128xf32, #tpu.memory_space<vmem>>, vector<2x1x128xf32>,
    %c0_4 = arith.constant 0 : index
    %c0_5 = arith.constant 0 : index
    %3 = vector.load %arg1[%c0_4, %c0_5] : memref<32x128xf32, #tpu.memory_space<vmem>>, vector<32x128xf32>
    %4 = vector.shape_cast %3 : vector<32x128xf32> to vector<2x16x128xf32>
    %c0_6 = arith.constant 0 : index
    %c1 = arith.constant 1 : index
    %c0_7 = arith.constant 0 : index
    %5 = vector.load %arg14[%c0_6, %c1, %c0_7] : memref<2x18x128xf32, #tpu.memory_space<vmem>>, vector<2x16x128xf32>
    tpu.vector_store %arg14[%c0_6, %c1, %c0_7], %4 {strides = array<i32>} : memref<2x18x128xf32, #tpu.memory_space<vmem>>, vector<2x16x128xf32>,
    %c0_8 = arith.constant 0 : index
    %c0_9 = arith.constant 0 : index
    %c0_10 = arith.constant 0 : index
    %6 = vector.load %arg14[%c0_8, %c0_9, %c0_10] : memref<2x18x128xf32, #tpu.memory_space<vmem>>, vector<2x16x128xf32>
    %7 = vector.shape_cast %6 : vector<2x16x128xf32> to vector<32x128xf32>
    %8 = arith.truncf %7 : vector<32x128xf32> to vector<32x128xbf16>
    %c0_11 = arith.constant 0 : index
    %c1_12 = arith.constant 1 : index
    %c0_13 = arith.constant 0 : index
    %9 = vector.load %arg14[%c0_11, %c1_12, %c0_13] : memref<2x18x128xf32, #tpu.memory_space<vmem>>, vector<2x16x128xf32>
    %10 = vector.shape_cast %9 : vector<2x16x128xf32> to vector<32x128xf32>
    %11 = arith.truncf %10 : vector<32x128xf32> to vector<32x128xbf16>
    %c0_14 = arith.constant 0 : index
    %c2 = arith.constant 2 : index
    %c0_15 = arith.constant 0 : index
    %12 = vector.load %arg14[%c0_14, %c2, %c0_15] : memref<2x18x128xf32, #tpu.memory_space<vmem>>, vector<2x16x128xf32>
    %13 = vector.shape_cast %12 : vector<2x16x128xf32> to vector<32x128xf32>
    %14 = arith.truncf %13 : vector<32x128xf32> to vector<32x128xbf16>
    %15 = tpu.concatenate %8, %11, %14 in 1 : vector<32x128xbf16>, vector<32x128xbf16>, vector<32x128xbf16> -> vector<32x384xbf16>
    %c0_16 = arith.constant 0 : index
    %c0_17 = arith.constant 0 : index
    %16 = vector.load %arg2[%c0_16, %c0_17] : memref<384x128xbf16, #tpu.memory_space<vmem>>, vector<384x128xbf16>
    %cst_18 = arith.constant dense<0.000000e+00> : vector<32x128xf32>
    %17 = tpu.matmul %15, %16, %cst_18 {dimension_numbers = #tpu.dot_dimension_numbers<[1], [0], [0], [1], [0, 0, 1, 1], [], []>} : vector<32x384xbf16>, vector<384x128xbf16>, vector<32x128xf32> -> vector<32x128xf32>
    %cst_19 = arith.constant dense<0.000000e+00> : vector<128xf32>
    %18 = vector.multi_reduction <add>, %17, %cst_19 [0] : vector<32x128xf32> to vector<128xf32>
    %19 = vector.shape_cast %18 : vector<128xf32> to vector<1x128xf32>
    %20 = arith.mulf %17, %17 : vector<32x128xf32>
    %cst_20 = arith.constant dense<0.000000e+00> : vector<128xf32>
    %21 = vector.multi_reduction <add>, %20, %cst_20 [0] : vector<32x128xf32> to vector<128xf32>
    %22 = vector.shape_cast %21 : vector<128xf32> to vector<1x128xf32>
    %c8_i32 = arith.constant 8 : i32
    %23 = tpu.dynamic_rotate %19 by %c8_i32 dim 1 : vector<1x128xf32>, i32 -> vector<1x128xf32>
    %24 = arith.addf %19, %23 : vector<1x128xf32>
    %c8_i32_21 = arith.constant 8 : i32
    %25 = tpu.dynamic_rotate %22 by %c8_i32_21 dim 1 : vector<1x128xf32>, i32 -> vector<1x128xf32>
    %26 = arith.addf %22, %25 : vector<1x128xf32>
    %c16_i32 = arith.constant 16 : i32
    %27 = tpu.dynamic_rotate %24 by %c16_i32 dim 1 : vector<1x128xf32>, i32 -> vector<1x128xf32>
    %28 = arith.addf %24, %27 : vector<1x128xf32>
    %c16_i32_22 = arith.constant 16 : i32
    %29 = tpu.dynamic_rotate %26 by %c16_i32_22 dim 1 : vector<1x128xf32>, i32 -> vector<1x128xf32>
    %30 = arith.addf %26, %29 : vector<1x128xf32>
    %c32_i32 = arith.constant 32 : i32
    %31 = tpu.dynamic_rotate %28 by %c32_i32 dim 1 : vector<1x128xf32>, i32 -> vector<1x128xf32>
    %32 = arith.addf %28, %31 : vector<1x128xf32>
    %c32_i32_23 = arith.constant 32 : i32
    %33 = tpu.dynamic_rotate %30 by %c32_i32_23 dim 1 : vector<1x128xf32>, i32 -> vector<1x128xf32>
    %34 = arith.addf %30, %33 : vector<1x128xf32>
    %c64_i32 = arith.constant 64 : i32
    %35 = tpu.dynamic_rotate %32 by %c64_i32 dim 1 : vector<1x128xf32>, i32 -> vector<1x128xf32>
    %36 = arith.addf %32, %35 : vector<1x128xf32>
    %c64_i32_24 = arith.constant 64 : i32
    %37 = tpu.dynamic_rotate %34 by %c64_i32_24 dim 1 : vector<1x128xf32>, i32 -> vector<1x128xf32>
    %38 = arith.addf %34, %37 : vector<1x128xf32>
    %cst_25 = arith.constant 0.001953125 : f32
    %39 = vector.broadcast %cst_25 : f32 to vector<1x128xf32>
    %40 = arith.mulf %36, %39 : vector<1x128xf32>
    %cst_26 = arith.constant 0.001953125 : f32
    %41 = vector.broadcast %cst_26 : f32 to vector<1x128xf32>
    %42 = arith.mulf %38, %41 : vector<1x128xf32>
    %43 = arith.mulf %40, %40 : vector<1x128xf32>
    %44 = arith.subf %42, %43 : vector<1x128xf32>
    %cst_27 = arith.constant 0.000000e+00 : f32
    %45 = vector.broadcast %cst_27 : f32 to vector<1x128xf32>
    %46 = arith.maximumf %44, %45 : vector<1x128xf32>
    %c0_28 = arith.constant 0 : index
    %c0_29 = arith.constant 0 : index
    %47 = vector.load %arg3[%c0_28, %c0_29] : memref<1x128xf32, #tpu.memory_space<vmem>>, vector<1x128xf32>
    %cst_30 = arith.constant 9.99999974E-6 : f32
    %48 = vector.broadcast %cst_30 : f32 to vector<1x128xf32>
    %49 = arith.addf %46, %48 : vector<1x128xf32>
    %50 = math.rsqrt %49 : vector<1x128xf32>
    %51 = arith.mulf %47, %50 : vector<1x128xf32>
    %c0_31 = arith.constant 0 : index
    %c0_32 = arith.constant 0 : index
    %52 = vector.load %arg4[%c0_31, %c0_32] : memref<1x128xf32, #tpu.memory_space<vmem>>, vector<1x128xf32>
    %53 = arith.mulf %40, %51 : vector<1x128xf32>
    %54 = arith.subf %52, %53 : vector<1x128xf32>
    %55 = vector.broadcast %51 : vector<1x128xf32> to vector<32x128xf32>
    %56 = arith.mulf %17, %55 : vector<32x128xf32>
    %57 = vector.broadcast %54 : vector<1x128xf32> to vector<32x128xf32>
    %58 = arith.addf %56, %57 : vector<32x128xf32>
    %cst_33 = arith.constant 0.000000e+00 : f32
    %59 = vector.broadcast %cst_33 : f32 to vector<32x128xf32>
    %60 = arith.maximumf %58, %59 : vector<32x128xf32>
    %61 = vector.shape_cast %60 : vector<32x128xf32> to vector<2x16x128xf32>
    %c0_34 = arith.constant 0 : index
    %c1_35 = arith.constant 1 : index
    %c0_36 = arith.constant 0 : index
    %62 = vector.load %arg14[%c0_34, %c1_35, %c0_36] : memref<2x18x128xf32, #tpu.memory_space<vmem>>, vector<2x16x128xf32>
    tpu.vector_store %arg14[%c0_34, %c1_35, %c0_36], %61 {strides = array<i32>} : memref<2x18x128xf32, #tpu.memory_space<vmem>>, vector<2x16x128xf32>,
    %c0_37 = arith.constant 0 : index
    %c0_38 = arith.constant 0 : index
    %c0_39 = arith.constant 0 : index
    %63 = vector.load %arg14[%c0_37, %c0_38, %c0_39] : memref<2x18x128xf32, #tpu.memory_space<vmem>>, vector<2x16x128xf32>
    %64 = vector.shape_cast %63 : vector<2x16x128xf32> to vector<32x128xf32>
    %65 = arith.truncf %64 : vector<32x128xf32> to vector<32x128xbf16>
    %c0_40 = arith.constant 0 : index
    %c1_41 = arith.constant 1 : index
    %c0_42 = arith.constant 0 : index
    %66 = vector.load %arg14[%c0_40, %c1_41, %c0_42] : memref<2x18x128xf32, #tpu.memory_space<vmem>>, vector<2x16x128xf32>
    %67 = vector.shape_cast %66 : vector<2x16x128xf32> to vector<32x128xf32>
    %68 = arith.truncf %67 : vector<32x128xf32> to vector<32x128xbf16>
    %c0_43 = arith.constant 0 : index
    %c2_44 = arith.constant 2 : index
    %c0_45 = arith.constant 0 : index
    %69 = vector.load %arg14[%c0_43, %c2_44, %c0_45] : memref<2x18x128xf32, #tpu.memory_space<vmem>>, vector<2x16x128xf32>
    %70 = vector.shape_cast %69 : vector<2x16x128xf32> to vector<32x128xf32>
    %71 = arith.truncf %70 : vector<32x128xf32> to vector<32x128xbf16>
    %72 = tpu.concatenate %65, %68, %71 in 1 : vector<32x128xbf16>, vector<32x128xbf16>, vector<32x128xbf16> -> vector<32x384xbf16>
    %c0_46 = arith.constant 0 : index
    %c0_47 = arith.constant 0 : index
    %73 = vector.load %arg5[%c0_46, %c0_47] : memref<384x128xbf16, #tpu.memory_space<vmem>>, vector<384x128xbf16>
    %cst_48 = arith.constant dense<0.000000e+00> : vector<32x128xf32>
    %74 = tpu.matmul %72, %73, %cst_48 {dimension_numbers = #tpu.dot_dimension_numbers<[1], [0], [0], [1], [0, 0, 1, 1], [], []>} : vector<32x384xbf16>, vector<384x128xbf16>, vector<32x128xf32> -> vector<32x128xf32>
    %cst_49 = arith.constant dense<0.000000e+00> : vector<128xf32>
    %75 = vector.multi_reduction <add>, %74, %cst_49 [0] : vector<32x128xf32> to vector<128xf32>
    %76 = vector.shape_cast %75 : vector<128xf32> to vector<1x128xf32>
    %77 = arith.mulf %74, %74 : vector<32x128xf32>
    %cst_50 = arith.constant dense<0.000000e+00> : vector<128xf32>
    %78 = vector.multi_reduction <add>, %77, %cst_50 [0] : vector<32x128xf32> to vector<128xf32>
    %79 = vector.shape_cast %78 : vector<128xf32> to vector<1x128xf32>
    %c8_i32_51 = arith.constant 8 : i32
    %80 = tpu.dynamic_rotate %76 by %c8_i32_51 dim 1 : vector<1x128xf32>, i32 -> vector<1x128xf32>
    %81 = arith.addf %76, %80 : vector<1x128xf32>
    %c8_i32_52 = arith.constant 8 : i32
    %82 = tpu.dynamic_rotate %79 by %c8_i32_52 dim 1 : vector<1x128xf32>, i32 -> vector<1x128xf32>
    %83 = arith.addf %79, %82 : vector<1x128xf32>
    %c16_i32_53 = arith.constant 16 : i32
    %84 = tpu.dynamic_rotate %81 by %c16_i32_53 dim 1 : vector<1x128xf32>, i32 -> vector<1x128xf32>
    %85 = arith.addf %81, %84 : vector<1x128xf32>
    %c16_i32_54 = arith.constant 16 : i32
    %86 = tpu.dynamic_rotate %83 by %c16_i32_54 dim 1 : vector<1x128xf32>, i32 -> vector<1x128xf32>
    %87 = arith.addf %83, %86 : vector<1x128xf32>
    %c32_i32_55 = arith.constant 32 : i32
    %88 = tpu.dynamic_rotate %85 by %c32_i32_55 dim 1 : vector<1x128xf32>, i32 -> vector<1x128xf32>
    %89 = arith.addf %85, %88 : vector<1x128xf32>
    %c32_i32_56 = arith.constant 32 : i32
    %90 = tpu.dynamic_rotate %87 by %c32_i32_56 dim 1 : vector<1x128xf32>, i32 -> vector<1x128xf32>
    %91 = arith.addf %87, %90 : vector<1x128xf32>
    %c64_i32_57 = arith.constant 64 : i32
    %92 = tpu.dynamic_rotate %89 by %c64_i32_57 dim 1 : vector<1x128xf32>, i32 -> vector<1x128xf32>
    %93 = arith.addf %89, %92 : vector<1x128xf32>
    %c64_i32_58 = arith.constant 64 : i32
    %94 = tpu.dynamic_rotate %91 by %c64_i32_58 dim 1 : vector<1x128xf32>, i32 -> vector<1x128xf32>
    %95 = arith.addf %91, %94 : vector<1x128xf32>
    %cst_59 = arith.constant 0.001953125 : f32
    %96 = vector.broadcast %cst_59 : f32 to vector<1x128xf32>
    %97 = arith.mulf %93, %96 : vector<1x128xf32>
    %cst_60 = arith.constant 0.001953125 : f32
    %98 = vector.broadcast %cst_60 : f32 to vector<1x128xf32>
    %99 = arith.mulf %95, %98 : vector<1x128xf32>
    %100 = arith.mulf %97, %97 : vector<1x128xf32>
    %101 = arith.subf %99, %100 : vector<1x128xf32>
    %cst_61 = arith.constant 0.000000e+00 : f32
    %102 = vector.broadcast %cst_61 : f32 to vector<1x128xf32>
    %103 = arith.maximumf %101, %102 : vector<1x128xf32>
    %c0_62 = arith.constant 0 : index
    %c0_63 = arith.constant 0 : index
    %104 = vector.load %arg6[%c0_62, %c0_63] : memref<1x128xf32, #tpu.memory_space<vmem>>, vector<1x128xf32>
    %cst_64 = arith.constant 9.99999974E-6 : f32
    %105 = vector.broadcast %cst_64 : f32 to vector<1x128xf32>
    %106 = arith.addf %103, %105 : vector<1x128xf32>
    %107 = math.rsqrt %106 : vector<1x128xf32>
    %108 = arith.mulf %104, %107 : vector<1x128xf32>
    %c0_65 = arith.constant 0 : index
    %c0_66 = arith.constant 0 : index
    %109 = vector.load %arg7[%c0_65, %c0_66] : memref<1x128xf32, #tpu.memory_space<vmem>>, vector<1x128xf32>
    %110 = arith.mulf %97, %108 : vector<1x128xf32>
    %111 = arith.subf %109, %110 : vector<1x128xf32>
    %112 = vector.broadcast %108 : vector<1x128xf32> to vector<32x128xf32>
    %113 = arith.mulf %74, %112 : vector<32x128xf32>
    %114 = vector.broadcast %111 : vector<1x128xf32> to vector<32x128xf32>
    %115 = arith.addf %113, %114 : vector<32x128xf32>
    %cst_67 = arith.constant 0.000000e+00 : f32
    %116 = vector.broadcast %cst_67 : f32 to vector<32x128xf32>
    %117 = arith.maximumf %115, %116 : vector<32x128xf32>
    %118 = vector.shape_cast %117 : vector<32x128xf32> to vector<2x16x128xf32>
    %c0_68 = arith.constant 0 : index
    %c1_69 = arith.constant 1 : index
    %c0_70 = arith.constant 0 : index
    %119 = vector.load %arg14[%c0_68, %c1_69, %c0_70] : memref<2x18x128xf32, #tpu.memory_space<vmem>>, vector<2x16x128xf32>
    tpu.vector_store %arg14[%c0_68, %c1_69, %c0_70], %118 {strides = array<i32>} : memref<2x18x128xf32, #tpu.memory_space<vmem>>, vector<2x16x128xf32>,
    %c0_71 = arith.constant 0 : index
    %c0_72 = arith.constant 0 : index
    %c0_73 = arith.constant 0 : index
    %120 = vector.load %arg14[%c0_71, %c0_72, %c0_73] : memref<2x18x128xf32, #tpu.memory_space<vmem>>, vector<2x16x128xf32>
    %121 = vector.shape_cast %120 : vector<2x16x128xf32> to vector<32x128xf32>
    %122 = arith.truncf %121 : vector<32x128xf32> to vector<32x128xbf16>
    %c0_74 = arith.constant 0 : index
    %c1_75 = arith.constant 1 : index
    %c0_76 = arith.constant 0 : index
    %123 = vector.load %arg14[%c0_74, %c1_75, %c0_76] : memref<2x18x128xf32, #tpu.memory_space<vmem>>, vector<2x16x128xf32>
    %124 = vector.shape_cast %123 : vector<2x16x128xf32> to vector<32x128xf32>
    %125 = arith.truncf %124 : vector<32x128xf32> to vector<32x128xbf16>
    %c0_77 = arith.constant 0 : index
    %c2_78 = arith.constant 2 : index
    %c0_79 = arith.constant 0 : index
    %126 = vector.load %arg14[%c0_77, %c2_78, %c0_79] : memref<2x18x128xf32, #tpu.memory_space<vmem>>, vector<2x16x128xf32>
    %127 = vector.shape_cast %126 : vector<2x16x128xf32> to vector<32x128xf32>
    %128 = arith.truncf %127 : vector<32x128xf32> to vector<32x128xbf16>
    %129 = tpu.concatenate %122, %125, %128 in 1 : vector<32x128xbf16>, vector<32x128xbf16>, vector<32x128xbf16> -> vector<32x384xbf16>
    %c0_80 = arith.constant 0 : index
    %c0_81 = arith.constant 0 : index
    %130 = vector.load %arg8[%c0_80, %c0_81] : memref<384x128xbf16, #tpu.memory_space<vmem>>, vector<384x128xbf16>
    %cst_82 = arith.constant dense<0.000000e+00> : vector<32x128xf32>
    %131 = tpu.matmul %129, %130, %cst_82 {dimension_numbers = #tpu.dot_dimension_numbers<[1], [0], [0], [1], [0, 0, 1, 1], [], []>} : vector<32x384xbf16>, vector<384x128xbf16>, vector<32x128xf32> -> vector<32x128xf32>
    %cst_83 = arith.constant dense<0.000000e+00> : vector<128xf32>
    %132 = vector.multi_reduction <add>, %131, %cst_83 [0] : vector<32x128xf32> to vector<128xf32>
    %133 = vector.shape_cast %132 : vector<128xf32> to vector<1x128xf32>
    %134 = arith.mulf %131, %131 : vector<32x128xf32>
    %cst_84 = arith.constant dense<0.000000e+00> : vector<128xf32>
    %135 = vector.multi_reduction <add>, %134, %cst_84 [0] : vector<32x128xf32> to vector<128xf32>
    %136 = vector.shape_cast %135 : vector<128xf32> to vector<1x128xf32>
    %c8_i32_85 = arith.constant 8 : i32
    %137 = tpu.dynamic_rotate %133 by %c8_i32_85 dim 1 : vector<1x128xf32>, i32 -> vector<1x128xf32>
    %138 = arith.addf %133, %137 : vector<1x128xf32>
    %c8_i32_86 = arith.constant 8 : i32
    %139 = tpu.dynamic_rotate %136 by %c8_i32_86 dim 1 : vector<1x128xf32>, i32 -> vector<1x128xf32>
    %140 = arith.addf %136, %139 : vector<1x128xf32>
    %c16_i32_87 = arith.constant 16 : i32
    %141 = tpu.dynamic_rotate %138 by %c16_i32_87 dim 1 : vector<1x128xf32>, i32 -> vector<1x128xf32>
    %142 = arith.addf %138, %141 : vector<1x128xf32>
    %c16_i32_88 = arith.constant 16 : i32
    %143 = tpu.dynamic_rotate %140 by %c16_i32_88 dim 1 : vector<1x128xf32>, i32 -> vector<1x128xf32>
    %144 = arith.addf %140, %143 : vector<1x128xf32>
    %c32_i32_89 = arith.constant 32 : i32
    %145 = tpu.dynamic_rotate %142 by %c32_i32_89 dim 1 : vector<1x128xf32>, i32 -> vector<1x128xf32>
    %146 = arith.addf %142, %145 : vector<1x128xf32>
    %c32_i32_90 = arith.constant 32 : i32
    %147 = tpu.dynamic_rotate %144 by %c32_i32_90 dim 1 : vector<1x128xf32>, i32 -> vector<1x128xf32>
    %148 = arith.addf %144, %147 : vector<1x128xf32>
    %c64_i32_91 = arith.constant 64 : i32
    %149 = tpu.dynamic_rotate %146 by %c64_i32_91 dim 1 : vector<1x128xf32>, i32 -> vector<1x128xf32>
    %150 = arith.addf %146, %149 : vector<1x128xf32>
    %c64_i32_92 = arith.constant 64 : i32
    %151 = tpu.dynamic_rotate %148 by %c64_i32_92 dim 1 : vector<1x128xf32>, i32 -> vector<1x128xf32>
    %152 = arith.addf %148, %151 : vector<1x128xf32>
    %cst_93 = arith.constant 0.001953125 : f32
    %153 = vector.broadcast %cst_93 : f32 to vector<1x128xf32>
    %154 = arith.mulf %150, %153 : vector<1x128xf32>
    %cst_94 = arith.constant 0.001953125 : f32
    %155 = vector.broadcast %cst_94 : f32 to vector<1x128xf32>
    %156 = arith.mulf %152, %155 : vector<1x128xf32>
    %157 = arith.mulf %154, %154 : vector<1x128xf32>
    %158 = arith.subf %156, %157 : vector<1x128xf32>
    %cst_95 = arith.constant 0.000000e+00 : f32
    %159 = vector.broadcast %cst_95 : f32 to vector<1x128xf32>
    %160 = arith.maximumf %158, %159 : vector<1x128xf32>
    %c0_96 = arith.constant 0 : index
    %c0_97 = arith.constant 0 : index
    %161 = vector.load %arg9[%c0_96, %c0_97] : memref<1x128xf32, #tpu.memory_space<vmem>>, vector<1x128xf32>
    %cst_98 = arith.constant 9.99999974E-6 : f32
    %162 = vector.broadcast %cst_98 : f32 to vector<1x128xf32>
    %163 = arith.addf %160, %162 : vector<1x128xf32>
    %164 = math.rsqrt %163 : vector<1x128xf32>
    %165 = arith.mulf %161, %164 : vector<1x128xf32>
    %c0_99 = arith.constant 0 : index
    %c0_100 = arith.constant 0 : index
    %166 = vector.load %arg10[%c0_99, %c0_100] : memref<1x128xf32, #tpu.memory_space<vmem>>, vector<1x128xf32>
    %167 = arith.mulf %154, %165 : vector<1x128xf32>
    %168 = arith.subf %166, %167 : vector<1x128xf32>
    %169 = vector.broadcast %165 : vector<1x128xf32> to vector<32x128xf32>
    %170 = arith.mulf %131, %169 : vector<32x128xf32>
    %171 = vector.broadcast %168 : vector<1x128xf32> to vector<32x128xf32>
    %172 = arith.addf %170, %171 : vector<32x128xf32>
    %cst_101 = arith.constant 0.000000e+00 : f32
    %173 = vector.broadcast %cst_101 : f32 to vector<32x128xf32>
    %174 = arith.maximumf %172, %173 : vector<32x128xf32>
    %c0_102 = arith.constant 0 : index
    %c0_103 = arith.constant 0 : index
    %175 = vector.load %arg15[%c0_102, %c0_103] : memref<32x128xf32, #tpu.memory_space<vmem>>, vector<32x128xf32>
    tpu.vector_store %arg15[%c0_102, %c0_103], %174 {strides = array<i32>} : memref<32x128xf32, #tpu.memory_space<vmem>>, vector<32x128xf32>,
    %c0_104 = arith.constant 0 : index
    %c0_105 = arith.constant 0 : index
    %176 = vector.load %arg15[%c0_104, %c0_105] : memref<32x128xf32, #tpu.memory_space<vmem>>, vector<1x128xf32>
    %c0_106 = arith.constant 0 : index
    %c0_107 = arith.constant 0 : index
    %177 = vector.load %arg16[%c0_106, %c0_107] : memref<2x2048xf32, #tpu.memory_space<vmem>>, vector<1x128xf32>
    tpu.vector_store %arg16[%c0_106, %c0_107], %176 {strides = array<i32>} : memref<2x2048xf32, #tpu.memory_space<vmem>>, vector<1x128xf32>,
    %c1_108 = arith.constant 1 : index
    %c0_109 = arith.constant 0 : index
    %178 = vector.load %arg15[%c1_108, %c0_109] : memref<32x128xf32, #tpu.memory_space<vmem>>, vector<1x128xf32>
    %c0_110 = arith.constant 0 : index
    %c128 = arith.constant 128 : index
    %179 = vector.load %arg16[%c0_110, %c128] : memref<2x2048xf32, #tpu.memory_space<vmem>>, vector<1x128xf32>
    tpu.vector_store %arg16[%c0_110, %c128], %178 {strides = array<i32>} : memref<2x2048xf32, #tpu.memory_space<vmem>>, vector<1x128xf32>,
    %c2_111 = arith.constant 2 : index
    %c0_112 = arith.constant 0 : index
    %180 = vector.load %arg15[%c2_111, %c0_112] : memref<32x128xf32, #tpu.memory_space<vmem>>, vector<1x128xf32>
    %c0_113 = arith.constant 0 : index
    %c256 = arith.constant 256 : index
    %181 = vector.load %arg16[%c0_113, %c256] : memref<2x2048xf32, #tpu.memory_space<vmem>>, vector<1x128xf32>
    tpu.vector_store %arg16[%c0_113, %c256], %180 {strides = array<i32>} : memref<2x2048xf32, #tpu.memory_space<vmem>>, vector<1x128xf32>,
    %c3 = arith.constant 3 : index
    %c0_114 = arith.constant 0 : index
    %182 = vector.load %arg15[%c3, %c0_114] : memref<32x128xf32, #tpu.memory_space<vmem>>, vector<1x128xf32>
    %c0_115 = arith.constant 0 : index
    %c384 = arith.constant 384 : index
    %183 = vector.load %arg16[%c0_115, %c384] : memref<2x2048xf32, #tpu.memory_space<vmem>>, vector<1x128xf32>
    tpu.vector_store %arg16[%c0_115, %c384], %182 {strides = array<i32>} : memref<2x2048xf32, #tpu.memory_space<vmem>>, vector<1x128xf32>,
    %c4 = arith.constant 4 : index
    %c0_116 = arith.constant 0 : index
    %184 = vector.load %arg15[%c4, %c0_116] : memref<32x128xf32, #tpu.memory_space<vmem>>, vector<1x128xf32>
    %c0_117 = arith.constant 0 : index
    %c512 = arith.constant 512 : index
    %185 = vector.load %arg16[%c0_117, %c512] : memref<2x2048xf32, #tpu.memory_space<vmem>>, vector<1x128xf32>
    tpu.vector_store %arg16[%c0_117, %c512], %184 {strides = array<i32>} : memref<2x2048xf32, #tpu.memory_space<vmem>>, vector<1x128xf32>,
    %c5 = arith.constant 5 : index
    %c0_118 = arith.constant 0 : index
    %186 = vector.load %arg15[%c5, %c0_118] : memref<32x128xf32, #tpu.memory_space<vmem>>, vector<1x128xf32>
    %c0_119 = arith.constant 0 : index
    %c640 = arith.constant 640 : index
    %187 = vector.load %arg16[%c0_119, %c640] : memref<2x2048xf32, #tpu.memory_space<vmem>>, vector<1x128xf32>
    tpu.vector_store %arg16[%c0_119, %c640], %186 {strides = array<i32>} : memref<2x2048xf32, #tpu.memory_space<vmem>>, vector<1x128xf32>,
    %c6 = arith.constant 6 : index
    %c0_120 = arith.constant 0 : index
    %188 = vector.load %arg15[%c6, %c0_120] : memref<32x128xf32, #tpu.memory_space<vmem>>, vector<1x128xf32>
    %c0_121 = arith.constant 0 : index
    %c768 = arith.constant 768 : index
    %189 = vector.load %arg16[%c0_121, %c768] : memref<2x2048xf32, #tpu.memory_space<vmem>>, vector<1x128xf32>
    tpu.vector_store %arg16[%c0_121, %c768], %188 {strides = array<i32>} : memref<2x2048xf32, #tpu.memory_space<vmem>>, vector<1x128xf32>,
    %c7 = arith.constant 7 : index
    %c0_122 = arith.constant 0 : index
    %190 = vector.load %arg15[%c7, %c0_122] : memref<32x128xf32, #tpu.memory_space<vmem>>, vector<1x128xf32>
    %c0_123 = arith.constant 0 : index
    %c896 = arith.constant 896 : index
    %191 = vector.load %arg16[%c0_123, %c896] : memref<2x2048xf32, #tpu.memory_space<vmem>>, vector<1x128xf32>
    tpu.vector_store %arg16[%c0_123, %c896], %190 {strides = array<i32>} : memref<2x2048xf32, #tpu.memory_space<vmem>>, vector<1x128xf32>,
    %c8 = arith.constant 8 : index
    %c0_124 = arith.constant 0 : index
    %192 = vector.load %arg15[%c8, %c0_124] : memref<32x128xf32, #tpu.memory_space<vmem>>, vector<1x128xf32>
    %c0_125 = arith.constant 0 : index
    %c1024 = arith.constant 1024 : index
    %193 = vector.load %arg16[%c0_125, %c1024] : memref<2x2048xf32, #tpu.memory_space<vmem>>, vector<1x128xf32>
    tpu.vector_store %arg16[%c0_125, %c1024], %192 {strides = array<i32>} : memref<2x2048xf32, #tpu.memory_space<vmem>>, vector<1x128xf32>,
    %c9 = arith.constant 9 : index
    %c0_126 = arith.constant 0 : index
    %194 = vector.load %arg15[%c9, %c0_126] : memref<32x128xf32, #tpu.memory_space<vmem>>, vector<1x128xf32>
    %c0_127 = arith.constant 0 : index
    %c1152 = arith.constant 1152 : index
    %195 = vector.load %arg16[%c0_127, %c1152] : memref<2x2048xf32, #tpu.memory_space<vmem>>, vector<1x128xf32>
    tpu.vector_store %arg16[%c0_127, %c1152], %194 {strides = array<i32>} : memref<2x2048xf32, #tpu.memory_space<vmem>>, vector<1x128xf32>,
    %c10 = arith.constant 10 : index
    %c0_128 = arith.constant 0 : index
    %196 = vector.load %arg15[%c10, %c0_128] : memref<32x128xf32, #tpu.memory_space<vmem>>, vector<1x128xf32>
    %c0_129 = arith.constant 0 : index
    %c1280 = arith.constant 1280 : index
    %197 = vector.load %arg16[%c0_129, %c1280] : memref<2x2048xf32, #tpu.memory_space<vmem>>, vector<1x128xf32>
    tpu.vector_store %arg16[%c0_129, %c1280], %196 {strides = array<i32>} : memref<2x2048xf32, #tpu.memory_space<vmem>>, vector<1x128xf32>,
    %c11 = arith.constant 11 : index
    %c0_130 = arith.constant 0 : index
    %198 = vector.load %arg15[%c11, %c0_130] : memref<32x128xf32, #tpu.memory_space<vmem>>, vector<1x128xf32>
    %c0_131 = arith.constant 0 : index
    %c1408 = arith.constant 1408 : index
    %199 = vector.load %arg16[%c0_131, %c1408] : memref<2x2048xf32, #tpu.memory_space<vmem>>, vector<1x128xf32>
    tpu.vector_store %arg16[%c0_131, %c1408], %198 {strides = array<i32>} : memref<2x2048xf32, #tpu.memory_space<vmem>>, vector<1x128xf32>,
    %c12 = arith.constant 12 : index
    %c0_132 = arith.constant 0 : index
    %200 = vector.load %arg15[%c12, %c0_132] : memref<32x128xf32, #tpu.memory_space<vmem>>, vector<1x128xf32>
    %c0_133 = arith.constant 0 : index
    %c1536 = arith.constant 1536 : index
    %201 = vector.load %arg16[%c0_133, %c1536] : memref<2x2048xf32, #tpu.memory_space<vmem>>, vector<1x128xf32>
    tpu.vector_store %arg16[%c0_133, %c1536], %200 {strides = array<i32>} : memref<2x2048xf32, #tpu.memory_space<vmem>>, vector<1x128xf32>,
    %c13 = arith.constant 13 : index
    %c0_134 = arith.constant 0 : index
    %202 = vector.load %arg15[%c13, %c0_134] : memref<32x128xf32, #tpu.memory_space<vmem>>, vector<1x128xf32>
    %c0_135 = arith.constant 0 : index
    %c1664 = arith.constant 1664 : index
    %203 = vector.load %arg16[%c0_135, %c1664] : memref<2x2048xf32, #tpu.memory_space<vmem>>, vector<1x128xf32>
    tpu.vector_store %arg16[%c0_135, %c1664], %202 {strides = array<i32>} : memref<2x2048xf32, #tpu.memory_space<vmem>>, vector<1x128xf32>,
    %c14 = arith.constant 14 : index
    %c0_136 = arith.constant 0 : index
    %204 = vector.load %arg15[%c14, %c0_136] : memref<32x128xf32, #tpu.memory_space<vmem>>, vector<1x128xf32>
    %c0_137 = arith.constant 0 : index
    %c1792 = arith.constant 1792 : index
    %205 = vector.load %arg16[%c0_137, %c1792] : memref<2x2048xf32, #tpu.memory_space<vmem>>, vector<1x128xf32>
    tpu.vector_store %arg16[%c0_137, %c1792], %204 {strides = array<i32>} : memref<2x2048xf32, #tpu.memory_space<vmem>>, vector<1x128xf32>,
    %c15 = arith.constant 15 : index
    %c0_138 = arith.constant 0 : index
    %206 = vector.load %arg15[%c15, %c0_138] : memref<32x128xf32, #tpu.memory_space<vmem>>, vector<1x128xf32>
    %c0_139 = arith.constant 0 : index
    %c1920 = arith.constant 1920 : index
    %207 = vector.load %arg16[%c0_139, %c1920] : memref<2x2048xf32, #tpu.memory_space<vmem>>, vector<1x128xf32>
    tpu.vector_store %arg16[%c0_139, %c1920], %206 {strides = array<i32>} : memref<2x2048xf32, #tpu.memory_space<vmem>>, vector<1x128xf32>,
    %c16 = arith.constant 16 : index
    %c0_140 = arith.constant 0 : index
    %208 = vector.load %arg15[%c16, %c0_140] : memref<32x128xf32, #tpu.memory_space<vmem>>, vector<1x128xf32>
    %c1_141 = arith.constant 1 : index
    %c0_142 = arith.constant 0 : index
    %209 = vector.load %arg16[%c1_141, %c0_142] : memref<2x2048xf32, #tpu.memory_space<vmem>>, vector<1x128xf32>
    tpu.vector_store %arg16[%c1_141, %c0_142], %208 {strides = array<i32>} : memref<2x2048xf32, #tpu.memory_space<vmem>>, vector<1x128xf32>,
    %c17_143 = arith.constant 17 : index
    %c0_144 = arith.constant 0 : index
    %210 = vector.load %arg15[%c17_143, %c0_144] : memref<32x128xf32, #tpu.memory_space<vmem>>, vector<1x128xf32>
    %c1_145 = arith.constant 1 : index
    %c128_146 = arith.constant 128 : index
    %211 = vector.load %arg16[%c1_145, %c128_146] : memref<2x2048xf32, #tpu.memory_space<vmem>>, vector<1x128xf32>
    tpu.vector_store %arg16[%c1_145, %c128_146], %210 {strides = array<i32>} : memref<2x2048xf32, #tpu.memory_space<vmem>>, vector<1x128xf32>,
    %c18 = arith.constant 18 : index
    %c0_147 = arith.constant 0 : index
    %212 = vector.load %arg15[%c18, %c0_147] : memref<32x128xf32, #tpu.memory_space<vmem>>, vector<1x128xf32>
    %c1_148 = arith.constant 1 : index
    %c256_149 = arith.constant 256 : index
    %213 = vector.load %arg16[%c1_148, %c256_149] : memref<2x2048xf32, #tpu.memory_space<vmem>>, vector<1x128xf32>
    tpu.vector_store %arg16[%c1_148, %c256_149], %212 {strides = array<i32>} : memref<2x2048xf32, #tpu.memory_space<vmem>>, vector<1x128xf32>,
    %c19 = arith.constant 19 : index
    %c0_150 = arith.constant 0 : index
    %214 = vector.load %arg15[%c19, %c0_150] : memref<32x128xf32, #tpu.memory_space<vmem>>, vector<1x128xf32>
    %c1_151 = arith.constant 1 : index
    %c384_152 = arith.constant 384 : index
    %215 = vector.load %arg16[%c1_151, %c384_152] : memref<2x2048xf32, #tpu.memory_space<vmem>>, vector<1x128xf32>
    tpu.vector_store %arg16[%c1_151, %c384_152], %214 {strides = array<i32>} : memref<2x2048xf32, #tpu.memory_space<vmem>>, vector<1x128xf32>,
    %c20 = arith.constant 20 : index
    %c0_153 = arith.constant 0 : index
    %216 = vector.load %arg15[%c20, %c0_153] : memref<32x128xf32, #tpu.memory_space<vmem>>, vector<1x128xf32>
    %c1_154 = arith.constant 1 : index
    %c512_155 = arith.constant 512 : index
    %217 = vector.load %arg16[%c1_154, %c512_155] : memref<2x2048xf32, #tpu.memory_space<vmem>>, vector<1x128xf32>
    tpu.vector_store %arg16[%c1_154, %c512_155], %216 {strides = array<i32>} : memref<2x2048xf32, #tpu.memory_space<vmem>>, vector<1x128xf32>,
    %c21 = arith.constant 21 : index
    %c0_156 = arith.constant 0 : index
    %218 = vector.load %arg15[%c21, %c0_156] : memref<32x128xf32, #tpu.memory_space<vmem>>, vector<1x128xf32>
    %c1_157 = arith.constant 1 : index
    %c640_158 = arith.constant 640 : index
    %219 = vector.load %arg16[%c1_157, %c640_158] : memref<2x2048xf32, #tpu.memory_space<vmem>>, vector<1x128xf32>
    tpu.vector_store %arg16[%c1_157, %c640_158], %218 {strides = array<i32>} : memref<2x2048xf32, #tpu.memory_space<vmem>>, vector<1x128xf32>,
    %c22 = arith.constant 22 : index
    %c0_159 = arith.constant 0 : index
    %220 = vector.load %arg15[%c22, %c0_159] : memref<32x128xf32, #tpu.memory_space<vmem>>, vector<1x128xf32>
    %c1_160 = arith.constant 1 : index
    %c768_161 = arith.constant 768 : index
    %221 = vector.load %arg16[%c1_160, %c768_161] : memref<2x2048xf32, #tpu.memory_space<vmem>>, vector<1x128xf32>
    tpu.vector_store %arg16[%c1_160, %c768_161], %220 {strides = array<i32>} : memref<2x2048xf32, #tpu.memory_space<vmem>>, vector<1x128xf32>,
    %c23 = arith.constant 23 : index
    %c0_162 = arith.constant 0 : index
    %222 = vector.load %arg15[%c23, %c0_162] : memref<32x128xf32, #tpu.memory_space<vmem>>, vector<1x128xf32>
    %c1_163 = arith.constant 1 : index
    %c896_164 = arith.constant 896 : index
    %223 = vector.load %arg16[%c1_163, %c896_164] : memref<2x2048xf32, #tpu.memory_space<vmem>>, vector<1x128xf32>
    tpu.vector_store %arg16[%c1_163, %c896_164], %222 {strides = array<i32>} : memref<2x2048xf32, #tpu.memory_space<vmem>>, vector<1x128xf32>,
    %c24 = arith.constant 24 : index
    %c0_165 = arith.constant 0 : index
    %224 = vector.load %arg15[%c24, %c0_165] : memref<32x128xf32, #tpu.memory_space<vmem>>, vector<1x128xf32>
    %c1_166 = arith.constant 1 : index
    %c1024_167 = arith.constant 1024 : index
    %225 = vector.load %arg16[%c1_166, %c1024_167] : memref<2x2048xf32, #tpu.memory_space<vmem>>, vector<1x128xf32>
    tpu.vector_store %arg16[%c1_166, %c1024_167], %224 {strides = array<i32>} : memref<2x2048xf32, #tpu.memory_space<vmem>>, vector<1x128xf32>,
    %c25 = arith.constant 25 : index
    %c0_168 = arith.constant 0 : index
    %226 = vector.load %arg15[%c25, %c0_168] : memref<32x128xf32, #tpu.memory_space<vmem>>, vector<1x128xf32>
    %c1_169 = arith.constant 1 : index
    %c1152_170 = arith.constant 1152 : index
    %227 = vector.load %arg16[%c1_169, %c1152_170] : memref<2x2048xf32, #tpu.memory_space<vmem>>, vector<1x128xf32>
    tpu.vector_store %arg16[%c1_169, %c1152_170], %226 {strides = array<i32>} : memref<2x2048xf32, #tpu.memory_space<vmem>>, vector<1x128xf32>,
    %c26 = arith.constant 26 : index
    %c0_171 = arith.constant 0 : index
    %228 = vector.load %arg15[%c26, %c0_171] : memref<32x128xf32, #tpu.memory_space<vmem>>, vector<1x128xf32>
    %c1_172 = arith.constant 1 : index
    %c1280_173 = arith.constant 1280 : index
    %229 = vector.load %arg16[%c1_172, %c1280_173] : memref<2x2048xf32, #tpu.memory_space<vmem>>, vector<1x128xf32>
    tpu.vector_store %arg16[%c1_172, %c1280_173], %228 {strides = array<i32>} : memref<2x2048xf32, #tpu.memory_space<vmem>>, vector<1x128xf32>,
    %c27 = arith.constant 27 : index
    %c0_174 = arith.constant 0 : index
    %230 = vector.load %arg15[%c27, %c0_174] : memref<32x128xf32, #tpu.memory_space<vmem>>, vector<1x128xf32>
    %c1_175 = arith.constant 1 : index
    %c1408_176 = arith.constant 1408 : index
    %231 = vector.load %arg16[%c1_175, %c1408_176] : memref<2x2048xf32, #tpu.memory_space<vmem>>, vector<1x128xf32>
    tpu.vector_store %arg16[%c1_175, %c1408_176], %230 {strides = array<i32>} : memref<2x2048xf32, #tpu.memory_space<vmem>>, vector<1x128xf32>,
    %c28 = arith.constant 28 : index
    %c0_177 = arith.constant 0 : index
    %232 = vector.load %arg15[%c28, %c0_177] : memref<32x128xf32, #tpu.memory_space<vmem>>, vector<1x128xf32>
    %c1_178 = arith.constant 1 : index
    %c1536_179 = arith.constant 1536 : index
    %233 = vector.load %arg16[%c1_178, %c1536_179] : memref<2x2048xf32, #tpu.memory_space<vmem>>, vector<1x128xf32>
    tpu.vector_store %arg16[%c1_178, %c1536_179], %232 {strides = array<i32>} : memref<2x2048xf32, #tpu.memory_space<vmem>>, vector<1x128xf32>,
    %c29 = arith.constant 29 : index
    %c0_180 = arith.constant 0 : index
    %234 = vector.load %arg15[%c29, %c0_180] : memref<32x128xf32, #tpu.memory_space<vmem>>, vector<1x128xf32>
    %c1_181 = arith.constant 1 : index
    %c1664_182 = arith.constant 1664 : index
    %235 = vector.load %arg16[%c1_181, %c1664_182] : memref<2x2048xf32, #tpu.memory_space<vmem>>, vector<1x128xf32>
    tpu.vector_store %arg16[%c1_181, %c1664_182], %234 {strides = array<i32>} : memref<2x2048xf32, #tpu.memory_space<vmem>>, vector<1x128xf32>,
    %c30 = arith.constant 30 : index
    %c0_183 = arith.constant 0 : index
    %236 = vector.load %arg15[%c30, %c0_183] : memref<32x128xf32, #tpu.memory_space<vmem>>, vector<1x128xf32>
    %c1_184 = arith.constant 1 : index
    %c1792_185 = arith.constant 1792 : index
    %237 = vector.load %arg16[%c1_184, %c1792_185] : memref<2x2048xf32, #tpu.memory_space<vmem>>, vector<1x128xf32>
    tpu.vector_store %arg16[%c1_184, %c1792_185], %236 {strides = array<i32>} : memref<2x2048xf32, #tpu.memory_space<vmem>>, vector<1x128xf32>,
    %c31 = arith.constant 31 : index
    %c0_186 = arith.constant 0 : index
    %238 = vector.load %arg15[%c31, %c0_186] : memref<32x128xf32, #tpu.memory_space<vmem>>, vector<1x128xf32>
    %c1_187 = arith.constant 1 : index
    %c1920_188 = arith.constant 1920 : index
    %239 = vector.load %arg16[%c1_187, %c1920_188] : memref<2x2048xf32, #tpu.memory_space<vmem>>, vector<1x128xf32>
    tpu.vector_store %arg16[%c1_187, %c1920_188], %238 {strides = array<i32>} : memref<2x2048xf32, #tpu.memory_space<vmem>>, vector<1x128xf32>,
    %c0_189 = arith.constant 0 : index
    %c0_190 = arith.constant 0 : index
    %240 = vector.load %arg16[%c0_189, %c0_190] : memref<2x2048xf32, #tpu.memory_space<vmem>>, vector<2x2048xf32>
    %241 = arith.truncf %240 : vector<2x2048xf32> to vector<2x2048xbf16>
    %c0_191 = arith.constant 0 : index
    %c0_192 = arith.constant 0 : index
    %242 = vector.load %arg11[%c0_191, %c0_192] : memref<2048x32xbf16, #tpu.memory_space<vmem>>, vector<2048x32xbf16>
    %cst_193 = arith.constant dense<0.000000e+00> : vector<2x32xf32>
    %243 = tpu.matmul %241, %242, %cst_193 {dimension_numbers = #tpu.dot_dimension_numbers<[1], [0], [0], [1], [0, 0, 1, 1], [], []>} : vector<2x2048xbf16>, vector<2048x32xbf16>, vector<2x32xf32> -> vector<2x32xf32>
    %c0_194 = arith.constant 0 : index
    %c0_195 = arith.constant 0 : index
    %244 = vector.load %arg12[%c0_194, %c0_195] : memref<1x32xf32, #tpu.memory_space<vmem>>, vector<1x32xf32>
    %245 = vector.broadcast %244 : vector<1x32xf32> to vector<2x32xf32>
    %246 = arith.addf %243, %245 : vector<2x32xf32>
    %c0_196 = arith.constant 0 : index
    %c0_197 = arith.constant 0 : index
    %247 = vector.load %arg13[%c0_196, %c0_197] : memref<2x32xf32, #tpu.memory_space<vmem>>, vector<2x32xf32>
    tpu.vector_store %arg13[%c0_196, %c0_197], %246 {strides = array<i32>} : memref<2x32xf32, #tpu.memory_space<vmem>>, vector<2x32xf32>,
    return
  }
  func.func @transform_0(%arg0: i32) -> (i32, i32) {
    %c0_i32 = arith.constant 0 : i32
    %c0_i32_0 = arith.constant 0 : i32
    %c0_i32_1 = arith.constant 0 : i32
    return %c0_i32, %c0_i32_0 : i32, i32
  }
  func.func @transform_1(%arg0: i32) -> (i32, i32) {
    %c0_i32 = arith.constant 0 : i32
    %c0_i32_0 = arith.constant 0 : i32
    %c0_i32_1 = arith.constant 0 : i32
    return %c0_i32, %c0_i32_0 : i32, i32
  }
  func.func @transform_2(%arg0: i32) -> (i32, i32) {
    %c0_i32 = arith.constant 0 : i32
    %c0_i32_0 = arith.constant 0 : i32
    %c0_i32_1 = arith.constant 0 : i32
    return %c0_i32, %c0_i32_0 : i32, i32
  }
  func.func @transform_3(%arg0: i32) -> (i32, i32) {
    %c0_i32 = arith.constant 0 : i32
    %c0_i32_0 = arith.constant 0 : i32
    %c0_i32_1 = arith.constant 0 : i32
    return %c0_i32, %c0_i32_0 : i32, i32
  }
  func.func @transform_4(%arg0: i32) -> (i32, i32) {
    %c0_i32 = arith.constant 0 : i32
    %c0_i32_0 = arith.constant 0 : i32
    %c0_i32_1 = arith.constant 0 : i32
    return %c0_i32, %c0_i32_0 : i32, i32
  }
  func.func @transform_5(%arg0: i32) -> (i32, i32) {
    %c0_i32 = arith.constant 0 : i32
    %c0_i32_0 = arith.constant 0 : i32
    %c0_i32_1 = arith.constant 0 : i32
    return %c0_i32, %c0_i32_0 : i32, i32
  }
  func.func @transform_6(%arg0: i32) -> (i32, i32) {
    %c0_i32 = arith.constant 0 : i32
    %c0_i32_0 = arith.constant 0 : i32
    %c0_i32_1 = arith.constant 0 : i32
    return %c0_i32, %c0_i32_0 : i32, i32
  }
  func.func @transform_7(%arg0: i32) -> (i32, i32) {
    %c0_i32 = arith.constant 0 : i32
    %c0_i32_0 = arith.constant 0 : i32
    %c0_i32_1 = arith.constant 0 : i32
    return %c0_i32, %c0_i32_0 : i32, i32
  }
  func.func @transform_8(%arg0: i32) -> (i32, i32) {
    %c0_i32 = arith.constant 0 : i32
    %c0_i32_0 = arith.constant 0 : i32
    %c0_i32_1 = arith.constant 0 : i32
    return %c0_i32, %c0_i32_0 : i32, i32
  }
  func.func @transform_9(%arg0: i32) -> (i32, i32) {
    %c0_i32 = arith.constant 0 : i32
    %c0_i32_0 = arith.constant 0 : i32
    %c0_i32_1 = arith.constant 0 : i32
    return %c0_i32, %c0_i32_0 : i32, i32
  }
  func.func @transform_10(%arg0: i32) -> (i32, i32) {
    %c0_i32 = arith.constant 0 : i32
    %c0_i32_0 = arith.constant 0 : i32
    %c0_i32_1 = arith.constant 0 : i32
    return %c0_i32, %c0_i32_0 : i32, i32
  }
  func.func @transform_11(%arg0: i32) -> (i32, i32) {
    %c0_i32 = arith.constant 0 : i32
    %c0_i32_0 = arith.constant 0 : i32
    %c0_i32_1 = arith.constant 0 : i32
    return %c0_i32, %c0_i32_0 : i32, i32
  }
  func.func @transform_12(%arg0: i32) -> (i32, i32) {
    %c0_i32 = arith.constant 0 : i32
    %c0_i32_0 = arith.constant 0 : i32
    %c0_i32_1 = arith.constant 0 : i32
    return %c0_i32, %c0_i32_0 : i32, i32
  }
}

</mosaic_0001>

<llo_original>
// kernel: encoder_forward.1
$region0: #{encoder_forward.1}
  #allocation0 [shape = 'u32[]', space=smem, size = 0x4, offset = 0x4, fixed_abs, tag = 'smem constant byte address 0x4 - core index']
  #allocation1 [shape = 'u32[144,128]{1,0:T(1,128)}', space=vmem, size = 0x12000, scoped, tag = 'internal scratch']
  #allocation2 [shape = 'f32[2,18,128]{2,1,0:T(8,128)}', space=vmem, size = 0x6000, scoped, tag = 'scratch operand']
  #allocation3 [shape = 'f32[32,128]{1,0:T(8,128)}', space=vmem, size = 0x4000, scoped, tag = 'scratch operand']
  #allocation4 [shape = 'f32[2,2048]{1,0:T(2,128)}', space=vmem, size = 0x4000, scoped, tag = 'scratch operand']
  %s0 = inlined_call_operand.vmem [shape: f32[32,128], index: 0, kind: input, shape index: {}]
  %s1 = inlined_call_operand.vmem [shape: bf16[384,128], index: 1, kind: input, shape index: {}]
  %s2 = inlined_call_operand.vmem [shape: f32[1,128], index: 2, kind: input, shape index: {}]
  %s3 = inlined_call_operand.vmem [shape: f32[1,128], index: 3, kind: input, shape index: {}]
  %s4 = inlined_call_operand.vmem [shape: bf16[384,128], index: 4, kind: input, shape index: {}]
  %s5 = inlined_call_operand.vmem [shape: f32[1,128], index: 5, kind: input, shape index: {}]
  %s6 = inlined_call_operand.vmem [shape: f32[1,128], index: 6, kind: input, shape index: {}]
  %s7 = inlined_call_operand.vmem [shape: bf16[384,128], index: 7, kind: input, shape index: {}]
  %s8 = inlined_call_operand.vmem [shape: f32[1,128], index: 8, kind: input, shape index: {}]
  %s9 = inlined_call_operand.vmem [shape: f32[1,128], index: 9, kind: input, shape index: {}]
  %s10 = inlined_call_operand.vmem [shape: bf16[2048,32], index: 10, kind: input, shape index: {}]
  %s11 = inlined_call_operand.vmem [shape: f32[1,32], index: 11, kind: input, shape index: {}]
  %s12 = inlined_call_operand.hbm [shape: f32[2,32], index: 12, kind: output, shape index: {}]
  %s13 = sld [smem:[#allocation0]]
  $region58: #{encoder_forward.1} parent=0
    _
  %s15 = ssub.s32 1, %s13
  %s16 = scalar_select 0, %s15, %s13
  $region1: #{encoder_forward.1} parent=0
    #allocation5 [shape = 'u8[1024]{0}', space=vmem, size = 0x400, scoped, tag = 'output window, operand 0, single buffered']
    #allocation6 [shape = 's32[1]{0}', space=sflag, size = 0x4, scoped, tag = 'scoped memory for encoder_forward.1']
    %17 = vsyncpa [#allocation6], 0
    // Predicated region
    $region2: #{encoder_forward.1} parent=1 // pred_check
      _
    $region3: #{encoder_forward.1} parent=1 // pred_check_branch
      %19 = sbr.rel (0) target = $region5
    $region4: #{encoder_forward.1} parent=1 // pred_region
      _
    $region5: #{encoder_forward.1} parent=1 // pred_fallthru
      _
    // Predicated region
    $region6: #{encoder_forward.1} parent=1 // pred_check
      _
    $region7: #{encoder_forward.1} parent=1 // pred_check_branch
      %21 = sbr.rel (0) target = $region9
    $region8: #{encoder_forward.1} parent=1 // pred_region
      _
    $region9: #{encoder_forward.1} parent=1 // pred_fallthru
      _
    // Predicated region
    $region10: #{encoder_forward.1} parent=1 // pred_check
      _
    $region11: #{encoder_forward.1} parent=1 // pred_check_branch
      %23 = sbr.rel (0) target = $region13
    $region12: #{encoder_forward.1} parent=1 // pred_region
      _
    $region13: #{encoder_forward.1} parent=1 // pred_fallthru
      _
    // Predicated region
    $region14: #{encoder_forward.1} parent=1 // pred_check
      _
    $region15: #{encoder_forward.1} parent=1 // pred_check_branch
      %25 = sbr.rel (0) target = $region17
    $region16: #{encoder_forward.1} parent=1 // pred_region
      _
    $region17: #{encoder_forward.1} parent=1 // pred_fallthru
      _
    // Predicated region
    $region18: #{encoder_forward.1} parent=1 // pred_check
      _
    $region19: #{encoder_forward.1} parent=1 // pred_check_branch
      %27 = sbr.rel (0) target = $region21
    $region20: #{encoder_forward.1} parent=1 // pred_region
      _
    $region21: #{encoder_forward.1} parent=1 // pred_fallthru
      _
    // Predicated region
    $region22: #{encoder_forward.1} parent=1 // pred_check
      _
    $region23: #{encoder_forward.1} parent=1 // pred_check_branch
      %29 = sbr.rel (0) target = $region25
    $region24: #{encoder_forward.1} parent=1 // pred_region
      _
    $region25: #{encoder_forward.1} parent=1 // pred_fallthru
      _
    // Predicated region
    $region26: #{encoder_forward.1} parent=1 // pred_check
      _
    $region27: #{encoder_forward.1} parent=1 // pred_check_branch
      %31 = sbr.rel (0) target = $region29
    $region28: #{encoder_forward.1} parent=1 // pred_region
      _
    $region29: #{encoder_forward.1} parent=1 // pred_fallthru
      _
    // Predicated region
    $region30: #{encoder_forward.1} parent=1 // pred_check
      _
    $region31: #{encoder_forward.1} parent=1 // pred_check_branch
      %33 = sbr.rel (0) target = $region33
    $region32: #{encoder_forward.1} parent=1 // pred_region
      _
    $region33: #{encoder_forward.1} parent=1 // pred_fallthru
      _
    // Predicated region
    $region34: #{encoder_forward.1} parent=1 // pred_check
      _
    $region35: #{encoder_forward.1} parent=1 // pred_check_branch
      %35 = sbr.rel (0) target = $region37
    $region36: #{encoder_forward.1} parent=1 // pred_region
      _
    $region37: #{encoder_forward.1} parent=1 // pred_fallthru
      _
    // Predicated region
    $region38: #{encoder_forward.1} parent=1 // pred_check
      _
    $region39: #{encoder_forward.1} parent=1 // pred_check_branch
      %37 = sbr.rel (0) target = $region41
    $region40: #{encoder_forward.1} parent=1 // pred_region
      _
    $region41: #{encoder_forward.1} parent=1 // pred_fallthru
      _
    // Predicated region
    $region42: #{encoder_forward.1} parent=1 // pred_check
      _
    $region43: #{encoder_forward.1} parent=1 // pred_check_branch
      %39 = sbr.rel (0) target = $region45
    $region44: #{encoder_forward.1} parent=1 // pred_region
      _
    $region45: #{encoder_forward.1} parent=1 // pred_fallthru
      _
    // Predicated region
    $region46: #{encoder_forward.1} parent=1 // pred_check
      _
    $region47: #{encoder_forward.1} parent=1 // pred_check_branch
      %41 = sbr.rel (0) target = $region49
    $region48: #{encoder_forward.1} parent=1 // pred_region
      _
    $region49: #{encoder_forward.1} parent=1 // pred_fallthru
      _
    %43 = vst [vmem:[#allocation2] sm:$0x1] 0.0
    %44 = vst [vmem:[#allocation2 + $0x18] sm:$0x1] 0.0
    %45 = vst [vmem:[#allocation2 + $0x11] sm:$0x1] 0.0
    %46 = vst [vmem:[#allocation2 + $0x29] sm:$0x1] 0.0
    %v47 = vld [vmem:[%s0] sm:$0xff]
    %v48 = vld [vmem:[%s0 + $0x8] sm:$0xff]
    %v49 = vld [vmem:[%s0 + $0x10] sm:$0xff]
    %v50 = vld [vmem:[%s0 + $0x18] sm:$0xff]
    %51 = vst [vmem:[#allocation2 + $0x1] sm:$0xff] %v47
    %52 = vst [vmem:[#allocation2 + $0x9] sm:$0xff] %v48
    %53 = vst [vmem:[#allocation2 + $0x19] sm:$0xff] %v49
    %54 = vst [vmem:[#allocation2 + $0x21] sm:$0xff] %v50
    %v55 = vld [vmem:[#allocation2] sm:$0xff]
    %v56 = vld [vmem:[#allocation2 + $0x8] sm:$0xff]
    %v57 = vld [vmem:[#allocation2 + $0x18] sm:$0xff]
    %v58 = vld [vmem:[#allocation2 + $0x20] sm:$0xff]
    %v59 = vpack.c.bf16 %v56, %v55
    %v60 = vpack.c.bf16 %v58, %v57
    %v61 = vld [vmem:[#allocation2 + $0x1] sm:$0xff]
    %v62 = vld [vmem:[#allocation2 + $0x9] sm:$0xff]
    %v63 = vld [vmem:[#allocation2 + $0x19] sm:$0xff]
    %v64 = vld [vmem:[#allocation2 + $0x21] sm:$0xff]
    %v65 = vpack.c.bf16 %v62, %v61
    %v66 = vpack.c.bf16 %v64, %v63
    %v67 = vld [vmem:[#allocation2 + $0x2] sm:$0xff]
    %v68 = vld [vmem:[#allocation2 + $0xa] sm:$0xff]
    %v69 = vld [vmem:[#allocation2 + $0x1a] sm:$0xff]
    %v70 = vld [vmem:[#allocation2 + $0x22] sm:$0xff]
    %v71 = vpack.c.bf16 %v68, %v67
    %v72 = vpack.c.bf16 %v70, %v69
    %v73 = vld [vmem:[%s1] sm:$0xf]
    %v74 = vld [vmem:[%s1 + $0x4] sm:$0xf]
    %v75 = vld [vmem:[%s1 + $0x8] sm:$0xf]
    %v76 = vld [vmem:[%s1 + $0xc] sm:$0xf]
    %v77 = vld [vmem:[%s1 + $0x10] sm:$0xf]
    %v78 = vld [vmem:[%s1 + $0x14] sm:$0xf]
    %v79 = vld [vmem:[%s1 + $0x18] sm:$0xf]
    %v80 = vld [vmem:[%s1 + $0x1c] sm:$0xf]
    %v81 = vld [vmem:[%s1 + $0x20] sm:$0xf]
    %v82 = vld [vmem:[%s1 + $0x24] sm:$0xf]
    %v83 = vld [vmem:[%s1 + $0x28] sm:$0xf]
    %v84 = vld [vmem:[%s1 + $0x2c] sm:$0xf]
    %v85 = vld [vmem:[%s1 + $0x30] sm:$0xf]
    %v86 = vld [vmem:[%s1 + $0x34] sm:$0xf]
    %v87 = vld [vmem:[%s1 + $0x38] sm:$0xf]
    %v88 = vld [vmem:[%s1 + $0x3c] sm:$0xf]
    %v89 = vld [vmem:[%s1 + $0x40] sm:$0xf]
    %v90 = vld [vmem:[%s1 + $0x44] sm:$0xf]
    %v91 = vld [vmem:[%s1 + $0x48] sm:$0xf]
    %v92 = vld [vmem:[%s1 + $0x4c] sm:$0xf]
    %v93 = vld [vmem:[%s1 + $0x50] sm:$0xf]
    %v94 = vld [vmem:[%s1 + $0x54] sm:$0xf]
    %v95 = vld [vmem:[%s1 + $0x58] sm:$0xf]
    %v96 = vld [vmem:[%s1 + $0x5c] sm:$0xf]
    %v97 = vld [vmem:[%s1 + $0x60] sm:$0xf]
    %v98 = vld [vmem:[%s1 + $0x64] sm:$0xf]
    %v99 = vld [vmem:[%s1 + $0x68] sm:$0xf]
    %v100 = vld [vmem:[%s1 + $0x6c] sm:$0xf]
    %v101 = vld [vmem:[%s1 + $0x70] sm:$0xf]
    %v102 = vld [vmem:[%s1 + $0x74] sm:$0xf]
    %v103 = vld [vmem:[%s1 + $0x78] sm:$0xf]
    %v104 = vld [vmem:[%s1 + $0x7c] sm:$0xf]
    %v105 = vld [vmem:[%s1 + $0x80] sm:$0xf]
    %v106 = vld [vmem:[%s1 + $0x84] sm:$0xf]
    %v107 = vld [vmem:[%s1 + $0x88] sm:$0xf]
    %v108 = vld [vmem:[%s1 + $0x8c] sm:$0xf]
    %v109 = vld [vmem:[%s1 + $0x90] sm:$0xf]
    %v110 = vld [vmem:[%s1 + $0x94] sm:$0xf]
    %v111 = vld [vmem:[%s1 + $0x98] sm:$0xf]
    %v112 = vld [vmem:[%s1 + $0x9c] sm:$0xf]
    %v113 = vld [vmem:[%s1 + $0xa0] sm:$0xf]
    %v114 = vld [vmem:[%s1 + $0xa4] sm:$0xf]
    %v115 = vld [vmem:[%s1 + $0xa8] sm:$0xf]
    %v116 = vld [vmem:[%s1 + $0xac] sm:$0xf]
    %v117 = vld [vmem:[%s1 + $0xb0] sm:$0xf]
    %v118 = vld [vmem:[%s1 + $0xb4] sm:$0xf]
    %v119 = vld [vmem:[%s1 + $0xb8] sm:$0xf]
    %v120 = vld [vmem:[%s1 + $0xbc] sm:$0xf]
    %v169 = vunpack.c.l.b16 %v73
    %v170 = vunpack.c.l.b16 %v74
    %v171 = vunpack.c.l.b16 %v75
    %v172 = vunpack.c.l.b16 %v76
    %v173 = vunpack.c.l.b16 %v77
    %v174 = vunpack.c.l.b16 %v78
    %v175 = vunpack.c.l.b16 %v79
    %v176 = vunpack.c.l.b16 %v80
    %v177 = vunpack.c.l.b16 %v81
    %v178 = vunpack.c.l.b16 %v82
    %v179 = vunpack.c.l.b16 %v83
    %v180 = vunpack.c.l.b16 %v84
    %v181 = vunpack.c.l.b16 %v85
    %v182 = vunpack.c.l.b16 %v86
    %v183 = vunpack.c.l.b16 %v87
    %v184 = vunpack.c.l.b16 %v88
    %v185 = vunpack.c.l.b16 %v89
    %v186 = vunpack.c.l.b16 %v90
    %v187 = vunpack.c.l.b16 %v91
    %v188 = vunpack.c.l.b16 %v92
    %v189 = vunpack.c.l.b16 %v93
    %v190 = vunpack.c.l.b16 %v94
    %v191 = vunpack.c.l.b16 %v95
    %v192 = vunpack.c.l.b16 %v96
    %v193 = vunpack.c.l.b16 %v97
    %v194 = vunpack.c.l.b16 %v98
    %v195 = vunpack.c.l.b16 %v99
    %v196 = vunpack.c.l.b16 %v100
    %v197 = vunpack.c.l.b16 %v101
    %v198 = vunpack.c.l.b16 %v102
    %v199 = vunpack.c.l.b16 %v103
    %v200 = vunpack.c.l.b16 %v104
    %v201 = vunpack.c.l.b16 %v105
    %v202 = vunpack.c.l.b16 %v106
    %v203 = vunpack.c.l.b16 %v107
    %v204 = vunpack.c.l.b16 %v108
    %v205 = vunpack.c.l.b16 %v109
    %v206 = vunpack.c.l.b16 %v110
    %v207 = vunpack.c.l.b16 %v111
    %v208 = vunpack.c.l.b16 %v112
    %v209 = vunpack.c.l.b16 %v113
    %v210 = vunpack.c.l.b16 %v114
    %v211 = vunpack.c.l.b16 %v115
    %v212 = vunpack.c.l.b16 %v116
    %v213 = vunpack.c.l.b16 %v117
    %v214 = vunpack.c.l.b16 %v118
    %v215 = vunpack.c.l.b16 %v119
    %v216 = vunpack.c.l.b16 %v120
    %v217 = vpack.c.b16 %v170, %v169
    %v218 = vpack.c.b16 %v172, %v171
    %v219 = vpack.c.b16 %v174, %v173
    %v220 = vpack.c.b16 %v176, %v175
    %v221 = vpack.c.b16 %v178, %v177
    %v222 = vpack.c.b16 %v180, %v179
    %v223 = vpack.c.b16 %v182, %v181
    %v224 = vpack.c.b16 %v184, %v183
    %v225 = vpack.c.b16 %v186, %v185
    %v226 = vpack.c.b16 %v188, %v187
    %v227 = vpack.c.b16 %v190, %v189
    %v228 = vpack.c.b16 %v192, %v191
    %v229 = vpack.c.b16 %v194, %v193
    %v230 = vpack.c.b16 %v196, %v195
    %v231 = vpack.c.b16 %v198, %v197
    %v232 = vpack.c.b16 %v200, %v199
    %v233 = vpack.c.b16 %v202, %v201
    %v234 = vpack.c.b16 %v204, %v203
    %v235 = vpack.c.b16 %v206, %v205
    %v236 = vpack.c.b16 %v208, %v207
    %v237 = vpack.c.b16 %v210, %v209
    %v238 = vpack.c.b16 %v212, %v211
    %v239 = vpack.c.b16 %v214, %v213
    %v240 = vpack.c.b16 %v216, %v215
    %265 = vmatprep.subr.bf16.mxu0 0
    %266 = vmatpush1.bf16.msra.mxu0 %v224
    %267 = vmatprep.subr.bf16.mxu0 0
    %268 = vmatpush1.bf16.msra.mxu0 %v223
    %269 = vmatprep.subr.bf16.mxu0 0
    %270 = vmatpush1.bf16.msra.mxu0 %v222
    %271 = vmatprep.subr.bf16.mxu0 0
    %272 = vmatpush1.bf16.msra.mxu0 %v221
    %273 = vmatprep.subr.bf16.mxu0 0
    %274 = vmatpush1.bf16.msra.mxu0 %v220
    %275 = vmatprep.subr.bf16.mxu0 0
    %276 = vmatpush1.bf16.msra.mxu0 %v219
    %277 = vmatprep.subr.bf16.mxu0 0
    %278 = vmatpush1.bf16.msra.mxu0 %v218
    %279 = vmatprep.subr.bf16.mxu0 0
    %280 = vmatpush1.bf16.msra.mxu0 %v217
    %281 = vmatprep.subr.bf16.mxu0 0
    %282 = vmatpush2.bf16.msra.mxu0 %v232
    %283 = vmatprep.subr.bf16.mxu0 0
    %284 = vmatpush2.bf16.msra.mxu0 %v231
    %285 = vmatprep.subr.bf16.mxu0 0
    %286 = vmatpush2.bf16.msra.mxu0 %v230
    %287 = vmatprep.subr.bf16.mxu0 0
    %288 = vmatpush2.bf16.msra.mxu0 %v229
    %289 = vmatprep.subr.bf16.mxu0 0
    %290 = vmatpush2.bf16.msra.mxu0 %v228
    %291 = vmatprep.subr.bf16.mxu0 0
    %292 = vmatpush2.bf16.msra.mxu0 %v227
    %293 = vmatprep.subr.bf16.mxu0 0
    %294 = vmatpush2.bf16.msra.mxu0 %v226
    %295 = vmatprep.subr.bf16.mxu0 0
    %296 = vmatpush2.bf16.msra.mxu0 %v225
    %297 = vmatprep.mubr.bf16.mxu0 %v65
    %298 = vmatmul.mubr.bf16.gmra.mxu0 %v59
    %v299 = vpop.f32.mrf.mxu0
    %v300 = vadd.f32 0.0, %v299
    %v301 = vpop.f32.mrf.mxu0
    %v302 = vpop.f32.mrf.mxu0
    %v303 = vadd.f32 0.0, %v302
    %v304 = vpop.f32.mrf.mxu0
    %305 = vmatprep.mubr.bf16.mxu0 %v66
    %306 = vmatmul.mubr.bf16.gmra.mxu0 %v60
    %v307 = vpop.f32.mrf.mxu0
    %v308 = vadd.f32 0.0, %v307
    %v309 = vpop.f32.mrf.mxu0
    %v310 = vpop.f32.mrf.mxu0
    %v311 = vadd.f32 0.0, %v310
    %v312 = vpop.f32.mrf.mxu0
    %313 = vdwg.mxu0
    %314 = vmatprep.subr.bf16.mxu0 0
    %315 = vmatpush1.bf16.msra.mxu0 %v240
    %316 = vmatprep.subr.bf16.mxu0 0
    %317 = vmatpush1.bf16.msra.mxu0 %v239
    %318 = vmatprep.subr.bf16.mxu0 0
    %319 = vmatpush1.bf16.msra.mxu0 %v238
    %320 = vmatprep.subr.bf16.mxu0 0
    %321 = vmatpush1.bf16.msra.mxu0 %v237
    %322 = vmatprep.subr.bf16.mxu0 0
    %323 = vmatpush1.bf16.msra.mxu0 %v236
    %324 = vmatprep.subr.bf16.mxu0 0
    %325 = vmatpush1.bf16.msra.mxu0 %v235
    %326 = vmatprep.subr.bf16.mxu0 0
    %327 = vmatpush1.bf16.msra.mxu0 %v234
    %328 = vmatprep.subr.bf16.mxu0 0
    %329 = vmatpush1.bf16.msra.mxu0 %v233
    %330 = vmatprep.subr.bf16.mxu0 0
    %331 = vmatpush2.bf16.msra.mxu0 0
    %332 = vmatprep.subr.bf16.mxu0 0
    %333 = vmatpush2.bf16.msra.mxu0 0
    %334 = vmatprep.subr.bf16.mxu0 0
    %335 = vmatpush2.bf16.msra.mxu0 0
    %336 = vmatprep.subr.bf16.mxu0 0
    %337 = vmatpush2.bf16.msra.mxu0 0
    %338 = vmatprep.subr.bf16.mxu0 0
    %339 = vmatpush2.bf16.msra.mxu0 0
    %340 = vmatprep.subr.bf16.mxu0 0
    %341 = vmatpush2.bf16.msra.mxu0 0
    %342 = vmatprep.subr.bf16.mxu0 0
    %343 = vmatpush2.bf16.msra.mxu0 0
    %344 = vmatprep.subr.bf16.mxu0 0
    %345 = vmatpush2.bf16.msra.mxu0 0
    %346 = vmatprep.mubr.bf16.mxu0 0
    %347 = vmatmul.mubr.bf16.gmra.mxu0 %v71
    %v348 = vpop.f32.mrf.mxu0
    %v349 = vadd.f32 %v300, %v348
    %v350 = vpop.f32.mrf.mxu0
    %v351 = vpop.f32.mrf.mxu0
    %v352 = vadd.f32 %v303, %v351
    %v353 = vpop.f32.mrf.mxu0
    %354 = vmatprep.mubr.bf16.mxu0 0
    %355 = vmatmul.mubr.bf16.gmra.mxu0 %v72
    %v356 = vpop.f32.mrf.mxu0
    %v357 = vadd.f32 %v308, %v356
    %v358 = vpop.f32.mrf.mxu0
    %v359 = vpop.f32.mrf.mxu0
    %v360 = vadd.f32 %v311, %v359
    %v361 = vpop.f32.mrf.mxu0
    %362 = vdwg.mxu0
    %v363 = vadd.f32 %v349, %v352
    %v364 = vadd.f32 %v363, %v357
    %v365 = vadd.f32 %v364, %v360
    %v366 = vrot.slane %v365, 4
    %v367 = vadd.f32 %v365, %v366
    %v368 = vrot.slane %v367, 2
    %v369 = vadd.f32 %v367, %v368
    %v370 = vrot.slane %v369, 1
    %v371 = vadd.f32 %v369, %v370
    %v372 = vmul.f32 %v349, %v349
    %v373 = vmul.f32 %v352, %v352
    %v374 = vmul.f32 %v357, %v357
    %v375 = vmul.f32 %v360, %v360
    %v376 = vadd.f32 %v372, %v373
    %v377 = vadd.f32 %v376, %v374
    %v378 = vadd.f32 %v377, %v375
    %v379 = vrot.slane %v378, 4
    %v380 = vadd.f32 %v378, %v379
    %v381 = vrot.slane %v380, 2
    %v382 = vadd.f32 %v380, %v381
    %v383 = vrot.slane %v382, 1
    %v384 = vadd.f32 %v382, %v383
    %385 = vrot.lane.b32.xlu0 %v371, 8
    %v386 = vpop.permute.xlu0 %385
    %v387 = vadd.f32 %v371, %v386
    %388 = vrot.lane.b32.xlu0 %v384, 8
    %v389 = vpop.permute.xlu0 %388
    %v390 = vadd.f32 %v384, %v389
    %391 = vrot.lane.b32.xlu0 %v387, 16
    %v392 = vpop.permute.xlu0 %391
    %v393 = vadd.f32 %v387, %v392
    %394 = vrot.lane.b32.xlu0 %v390, 16
    %v395 = vpop.permute.xlu0 %394
    %v396 = vadd.f32 %v390, %v395
    %397 = vrot.lane.b32.xlu0 %v393, 32
    %v398 = vpop.permute.xlu0 %397
    %v399 = vadd.f32 %v393, %v398
    %400 = vrot.lane.b32.xlu0 %v396, 32
    %v401 = vpop.permute.xlu0 %400
    %v402 = vadd.f32 %v396, %v401
    %403 = vrot.lane.b32.xlu0 %v399, 64
    %v404 = vpop.permute.xlu0 %403
    %v405 = vadd.f32 %v399, %v404
    %406 = vrot.lane.b32.xlu0 %v402, 64
    %v407 = vpop.permute.xlu0 %406
    %v408 = vadd.f32 %v402, %v407
    %v409 = vmul.f32 %v405, 0.001953125
    %v410 = vmul.f32 %v408, 0.001953125
    %v411 = vmul.f32 %v409, %v409
    %v412 = vsub.f32 %v410, %v411
    %v413 = vmax.f32 %v412, 0.0
    %v414 = vld [vmem:[%s2] sm:$0x1]
    %v415 = vadd.f32 %v413, 1e-05
    %v416 = vrsqrt.pop %v415
    %v417 = vmul.f32 %v414, %v416
    %v418 = vld [vmem:[%s3] sm:$0x1]
    %v419 = vmul.f32 %v409, %v417
    %v420 = vsub.f32 %v418, %v419
    %v422 = vlaneseq
    %v423 = vshrl.u32 %v422, 7
    %v424 = vsub.s32 0, %v423
    %v425 = vrot.slane %v417, %v424
    %v427 = vmul.f32 %v349, %v425
    %v428 = vmul.f32 %v352, %v425
    %v429 = vmul.f32 %v357, %v425
    %v430 = vmul.f32 %v360, %v425
    %v432 = vlaneseq
    %v433 = vshrl.u32 %v432, 7
    %v434 = vsub.s32 0, %v433
    %v435 = vrot.slane %v420, %v434
    %v437 = vadd.f32 %v427, %v435
    %v438 = vadd.f32 %v428, %v435
    %v439 = vadd.f32 %v429, %v435
    %v440 = vadd.f32 %v430, %v435
    %v441 = vmax.f32 %v437, 0.0
    %v442 = vmax.f32 %v438, 0.0
    %v443 = vmax.f32 %v439, 0.0
    %v444 = vmax.f32 %v440, 0.0
    %445 = vst [vmem:[#allocation2 + $0x1] sm:$0xff] %v441
    %446 = vst [vmem:[#allocation2 + $0x9] sm:$0xff] %v442
    %447 = vst [vmem:[#allocation2 + $0x19] sm:$0xff] %v443
    %448 = vst [vmem:[#allocation2 + $0x21] sm:$0xff] %v444
    %v449 = vld [vmem:[#allocation2] sm:$0xff]
    %v450 = vld [vmem:[#allocation2 + $0x8] sm:$0xff]
    %v451 = vld [vmem:[#allocation2 + $0x18] sm:$0xff]
    %v452 = vld [vmem:[#allocation2 + $0x20] sm:$0xff]
    %v453 = vpack.c.bf16 %v450, %v449
    %v454 = vpack.c.bf16 %v452, %v451
    %v455 = vld [vmem:[#allocation2 + $0x1] sm:$0xff]
    %v456 = vld [vmem:[#allocation2 + $0x9] sm:$0xff]
    %v457 = vld [vmem:[#allocation2 + $0x19] sm:$0xff]
    %v458 = vld [vmem:[#allocation2 + $0x21] sm:$0xff]
    %v459 = vpack.c.bf16 %v456, %v455
    %v460 = vpack.c.bf16 %v458, %v457
    %v461 = vld [vmem:[#allocation2 + $0x2] sm:$0xff]
    %v462 = vld [vmem:[#allocation2 + $0xa] sm:$0xff]
    %v463 = vld [vmem:[#allocation2 + $0x1a] sm:$0xff]
    %v464 = vld [vmem:[#allocation2 + $0x22] sm:$0xff]
    %v465 = vpack.c.bf16 %v462, %v461
    %v466 = vpack.c.bf16 %v464, %v463
    %v467 = vld [vmem:[%s4] sm:$0xf]
    %v468 = vld [vmem:[%s4 + $0x4] sm:$0xf]
    %v469 = vld [vmem:[%s4 + $0x8] sm:$0xf]
    %v470 = vld [vmem:[%s4 + $0xc] sm:$0xf]
    %v471 = vld [vmem:[%s4 + $0x10] sm:$0xf]
    %v472 = vld [vmem:[%s4 + $0x14] sm:$0xf]
    %v473 = vld [vmem:[%s4 + $0x18] sm:$0xf]
    %v474 = vld [vmem:[%s4 + $0x1c] sm:$0xf]
    %v475 = vld [vmem:[%s4 + $0x20] sm:$0xf]
    %v476 = vld [vmem:[%s4 + $0x24] sm:$0xf]
    %v477 = vld [vmem:[%s4 + $0x28] sm:$0xf]
    %v478 = vld [vmem:[%s4 + $0x2c] sm:$0xf]
    %v479 = vld [vmem:[%s4 + $0x30] sm:$0xf]
    %v480 = vld [vmem:[%s4 + $0x34] sm:$0xf]
    %v481 = vld [vmem:[%s4 + $0x38] sm:$0xf]
    %v482 = vld [vmem:[%s4 + $0x3c] sm:$0xf]
    %v483 = vld [vmem:[%s4 + $0x40] sm:$0xf]
    %v484 = vld [vmem:[%s4 + $0x44] sm:$0xf]
    %v485 = vld [vmem:[%s4 + $0x48] sm:$0xf]
    %v486 = vld [vmem:[%s4 + $0x4c] sm:$0xf]
    %v487 = vld [vmem:[%s4 + $0x50] sm:$0xf]
    %v488 = vld [vmem:[%s4 + $0x54] sm:$0xf]
    %v489 = vld [vmem:[%s4 + $0x58] sm:$0xf]
    %v490 = vld [vmem:[%s4 + $0x5c] sm:$0xf]
    %v491 = vld [vmem:[%s4 + $0x60] sm:$0xf]
    %v492 = vld [vmem:[%s4 + $0x64] sm:$0xf]
    %v493 = vld [vmem:[%s4 + $0x68] sm:$0xf]
    %v494 = vld [vmem:[%s4 + $0x6c] sm:$0xf]
    %v495 = vld [vmem:[%s4 + $0x70] sm:$0xf]
    %v496 = vld [vmem:[%s4 + $0x74] sm:$0xf]
    %v497 = vld [vmem:[%s4 + $0x78] sm:$0xf]
    %v498 = vld [vmem:[%s4 + $0x7c] sm:$0xf]
    %v499 = vld [vmem:[%s4 + $0x80] sm:$0xf]
    %v500 = vld [vmem:[%s4 + $0x84] sm:$0xf]
    %v501 = vld [vmem:[%s4 + $0x88] sm:$0xf]
    %v502 = vld [vmem:[%s4 + $0x8c] sm:$0xf]
    %v503 = vld [vmem:[%s4 + $0x90] sm:$0xf]
    %v504 = vld [vmem:[%s4 + $0x94] sm:$0xf]
    %v505 = vld [vmem:[%s4 + $0x98] sm:$0xf]
    %v506 = vld [vmem:[%s4 + $0x9c] sm:$0xf]
    %v507 = vld [vmem:[%s4 + $0xa0] sm:$0xf]
    %v508 = vld [vmem:[%s4 + $0xa4] sm:$0xf]
    %v509 = vld [vmem:[%s4 + $0xa8] sm:$0xf]
    %v510 = vld [vmem:[%s4 + $0xac] sm:$0xf]
    %v511 = vld [vmem:[%s4 + $0xb0] sm:$0xf]
    %v512 = vld [vmem:[%s4 + $0xb4] sm:$0xf]
    %v513 = vld [vmem:[%s4 + $0xb8] sm:$0xf]
    %v514 = vld [vmem:[%s4 + $0xbc] sm:$0xf]
    %v563 = vunpack.c.l.b16 %v467
    %v564 = vunpack.c.l.b16 %v468
    %v565 = vunpack.c.l.b16 %v469
    %v566 = vunpack.c.l.b16 %v470
    %v567 = vunpack.c.l.b16 %v471
    %v568 = vunpack.c.l.b16 %v472
    %v569 = vunpack.c.l.b16 %v473
    %v570 = vunpack.c.l.b16 %v474
    %v571 = vunpack.c.l.b16 %v475
    %v572 = vunpack.c.l.b16 %v476
    %v573 = vunpack.c.l.b16 %v477
    %v574 = vunpack.c.l.b16 %v478
    %v575 = vunpack.c.l.b16 %v479
    %v576 = vunpack.c.l.b16 %v480
    %v577 = vunpack.c.l.b16 %v481
    %v578 = vunpack.c.l.b16 %v482
    %v579 = vunpack.c.l.b16 %v483
    %v580 = vunpack.c.l.b16 %v484
    %v581 = vunpack.c.l.b16 %v485
    %v582 = vunpack.c.l.b16 %v486
    %v583 = vunpack.c.l.b16 %v487
    %v584 = vunpack.c.l.b16 %v488
    %v585 = vunpack.c.l.b16 %v489
    %v586 = vunpack.c.l.b16 %v490
    %v587 = vunpack.c.l.b16 %v491
    %v588 = vunpack.c.l.b16 %v492
    %v589 = vunpack.c.l.b16 %v493
    %v590 = vunpack.c.l.b16 %v494
    %v591 = vunpack.c.l.b16 %v495
    %v592 = vunpack.c.l.b16 %v496
    %v593 = vunpack.c.l.b16 %v497
    %v594 = vunpack.c.l.b16 %v498
    %v595 = vunpack.c.l.b16 %v499
    %v596 = vunpack.c.l.b16 %v500
    %v597 = vunpack.c.l.b16 %v501
    %v598 = vunpack.c.l.b16 %v502
    %v599 = vunpack.c.l.b16 %v503
    %v600 = vunpack.c.l.b16 %v504
    %v601 = vunpack.c.l.b16 %v505
    %v602 = vunpack.c.l.b16 %v506
    %v603 = vunpack.c.l.b16 %v507
    %v604 = vunpack.c.l.b16 %v508
    %v605 = vunpack.c.l.b16 %v509
    %v606 = vunpack.c.l.b16 %v510
    %v607 = vunpack.c.l.b16 %v511
    %v608 = vunpack.c.l.b16 %v512
    %v609 = vunpack.c.l.b16 %v513
    %v610 = vunpack.c.l.b16 %v514
    %v611 = vpack.c.b16 %v564, %v563
    %v612 = vpack.c.b16 %v566, %v565
    %v613 = vpack.c.b16 %v568, %v567
    %v614 = vpack.c.b16 %v570, %v569
    %v615 = vpack.c.b16 %v572, %v571
    %v616 = vpack.c.b16 %v574, %v573
    %v617 = vpack.c.b16 %v576, %v575
    %v618 = vpack.c.b16 %v578, %v577
    %v619 = vpack.c.b16 %v580, %v579
    %v620 = vpack.c.b16 %v582, %v581
    %v621 = vpack.c.b16 %v584, %v583
    %v622 = vpack.c.b16 %v586, %v585
    %v623 = vpack.c.b16 %v588, %v587
    %v624 = vpack.c.b16 %v590, %v589
    %v625 = vpack.c.b16 %v592, %v591
    %v626 = vpack.c.b16 %v594, %v593
    %v627 = vpack.c.b16 %v596, %v595
    %v628 = vpack.c.b16 %v598, %v597
    %v629 = vpack.c.b16 %v600, %v599
    %v630 = vpack.c.b16 %v602, %v601
    %v631 = vpack.c.b16 %v604, %v603
    %v632 = vpack.c.b16 %v606, %v605
    %v633 = vpack.c.b16 %v608, %v607
    %v634 = vpack.c.b16 %v610, %v609
    %659 = vmatprep.subr.bf16.mxu0 0
    %660 = vmatpush1.bf16.msra.mxu0 %v618
    %661 = vmatprep.subr.bf16.mxu0 0
    %662 = vmatpush1.bf16.msra.mxu0 %v617
    %663 = vmatprep.subr.bf16.mxu0 0
    %664 = vmatpush1.bf16.msra.mxu0 %v616
    %665 = vmatprep.subr.bf16.mxu0 0
    %666 = vmatpush1.bf16.msra.mxu0 %v615
    %667 = vmatprep.subr.bf16.mxu0 0
    %668 = vmatpush1.bf16.msra.mxu0 %v614
    %669 = vmatprep.subr.bf16.mxu0 0
    %670 = vmatpush1.bf16.msra.mxu0 %v613
    %671 = vmatprep.subr.bf16.mxu0 0
    %672 = vmatpush1.bf16.msra.mxu0 %v612
    %673 = vmatprep.subr.bf16.mxu0 0
    %674 = vmatpush1.bf16.msra.mxu0 %v611
    %675 = vmatprep.subr.bf16.mxu0 0
    %676 = vmatpush2.bf16.msra.mxu0 %v626
    %677 = vmatprep.subr.bf16.mxu0 0
    %678 = vmatpush2.bf16.msra.mxu0 %v625
    %679 = vmatprep.subr.bf16.mxu0 0
    %680 = vmatpush2.bf16.msra.mxu0 %v624
    %681 = vmatprep.subr.bf16.mxu0 0
    %682 = vmatpush2.bf16.msra.mxu0 %v623
    %683 = vmatprep.subr.bf16.mxu0 0
    %684 = vmatpush2.bf16.msra.mxu0 %v622
    %685 = vmatprep.subr.bf16.mxu0 0
    %686 = vmatpush2.bf16.msra.mxu0 %v621
    %687 = vmatprep.subr.bf16.mxu0 0
    %688 = vmatpush2.bf16.msra.mxu0 %v620
    %689 = vmatprep.subr.bf16.mxu0 0
    %690 = vmatpush2.bf16.msra.mxu0 %v619
    %691 = vmatprep.mubr.bf16.mxu0 %v459
    %692 = vmatmul.mubr.bf16.gmra.mxu0 %v453
    %v693 = vpop.f32.mrf.mxu0
    %v694 = vadd.f32 0.0, %v693
    %v695 = vpop.f32.mrf.mxu0
    %v696 = vpop.f32.mrf.mxu0
    %v697 = vadd.f32 0.0, %v696
    %v698 = vpop.f32.mrf.mxu0
    %699 = vmatprep.mubr.bf16.mxu0 %v460
    %700 = vmatmul.mubr.bf16.gmra.mxu0 %v454
    %v701 = vpop.f32.mrf.mxu0
    %v702 = vadd.f32 0.0, %v701
    %v703 = vpop.f32.mrf.mxu0
    %v704 = vpop.f32.mrf.mxu0
    %v705 = vadd.f32 0.0, %v704
    %v706 = vpop.f32.mrf.mxu0
    %707 = vdwg.mxu0
    %708 = vmatprep.subr.bf16.mxu0 0
    %709 = vmatpush1.bf16.msra.mxu0 %v634
    %710 = vmatprep.subr.bf16.mxu0 0
    %711 = vmatpush1.bf16.msra.mxu0 %v633
    %712 = vmatprep.subr.bf16.mxu0 0
    %713 = vmatpush1.bf16.msra.mxu0 %v632
    %714 = vmatprep.subr.bf16.mxu0 0
    %715 = vmatpush1.bf16.msra.mxu0 %v631
    %716 = vmatprep.subr.bf16.mxu0 0
    %717 = vmatpush1.bf16.msra.mxu0 %v630
    %718 = vmatprep.subr.bf16.mxu0 0
    %719 = vmatpush1.bf16.msra.mxu0 %v629
    %720 = vmatprep.subr.bf16.mxu0 0
    %721 = vmatpush1.bf16.msra.mxu0 %v628
    %722 = vmatprep.subr.bf16.mxu0 0
    %723 = vmatpush1.bf16.msra.mxu0 %v627
    %724 = vmatprep.subr.bf16.mxu0 0
    %725 = vmatpush2.bf16.msra.mxu0 0
    %726 = vmatprep.subr.bf16.mxu0 0
    %727 = vmatpush2.bf16.msra.mxu0 0
    %728 = vmatprep.subr.bf16.mxu0 0
    %729 = vmatpush2.bf16.msra.mxu0 0
    %730 = vmatprep.subr.bf16.mxu0 0
    %731 = vmatpush2.bf16.msra.mxu0 0
    %732 = vmatprep.subr.bf16.mxu0 0
    %733 = vmatpush2.bf16.msra.mxu0 0
    %734 = vmatprep.subr.bf16.mxu0 0
    %735 = vmatpush2.bf16.msra.mxu0 0
    %736 = vmatprep.subr.bf16.mxu0 0
    %737 = vmatpush2.bf16.msra.mxu0 0
    %738 = vmatprep.subr.bf16.mxu0 0
    %739 = vmatpush2.bf16.msra.mxu0 0
    %740 = vmatprep.mubr.bf16.mxu0 0
    %741 = vmatmul.mubr.bf16.gmra.mxu0 %v465
    %v742 = vpop.f32.mrf.mxu0
    %v743 = vadd.f32 %v694, %v742
    %v744 = vpop.f32.mrf.mxu0
    %v745 = vpop.f32.mrf.mxu0
    %v746 = vadd.f32 %v697, %v745
    %v747 = vpop.f32.mrf.mxu0
    %748 = vmatprep.mubr.bf16.mxu0 0
    %749 = vmatmul.mubr.bf16.gmra.mxu0 %v466
    %v750 = vpop.f32.mrf.mxu0
    %v751 = vadd.f32 %v702, %v750
    %v752 = vpop.f32.mrf.mxu0
    %v753 = vpop.f32.mrf.mxu0
    %v754 = vadd.f32 %v705, %v753
    %v755 = vpop.f32.mrf.mxu0
    %756 = vdwg.mxu0
    %v757 = vadd.f32 %v743, %v746
    %v758 = vadd.f32 %v757, %v751
    %v759 = vadd.f32 %v758, %v754
    %v760 = vrot.slane %v759, 4
    %v761 = vadd.f32 %v759, %v760
    %v762 = vrot.slane %v761, 2
    %v763 = vadd.f32 %v761, %v762
    %v764 = vrot.slane %v763, 1
    %v765 = vadd.f32 %v763, %v764
    %v766 = vmul.f32 %v743, %v743
    %v767 = vmul.f32 %v746, %v746
    %v768 = vmul.f32 %v751, %v751
    %v769 = vmul.f32 %v754, %v754
    %v770 = vadd.f32 %v766, %v767
    %v771 = vadd.f32 %v770, %v768
    %v772 = vadd.f32 %v771, %v769
    %v773 = vrot.slane %v772, 4
    %v774 = vadd.f32 %v772, %v773
    %v775 = vrot.slane %v774, 2
    %v776 = vadd.f32 %v774, %v775
    %v777 = vrot.slane %v776, 1
    %v778 = vadd.f32 %v776, %v777
    %779 = vrot.lane.b32.xlu0 %v765, 8
    %v780 = vpop.permute.xlu0 %779
    %v781 = vadd.f32 %v765, %v780
    %782 = vrot.lane.b32.xlu0 %v778, 8
    %v783 = vpop.permute.xlu0 %782
    %v784 = vadd.f32 %v778, %v783
    %785 = vrot.lane.b32.xlu0 %v781, 16
    %v786 = vpop.permute.xlu0 %785
    %v787 = vadd.f32 %v781, %v786
    %788 = vrot.lane.b32.xlu0 %v784, 16
    %v789 = vpop.permute.xlu0 %788
    %v790 = vadd.f32 %v784, %v789
    %791 = vrot.lane.b32.xlu0 %v787, 32
    %v792 = vpop.permute.xlu0 %791
    %v793 = vadd.f32 %v787, %v792
    %794 = vrot.lane.b32.xlu0 %v790, 32
    %v795 = vpop.permute.xlu0 %794
    %v796 = vadd.f32 %v790, %v795
    %797 = vrot.lane.b32.xlu0 %v793, 64
    %v798 = vpop.permute.xlu0 %797
    %v799 = vadd.f32 %v793, %v798
    %800 = vrot.lane.b32.xlu0 %v796, 64
    %v801 = vpop.permute.xlu0 %800
    %v802 = vadd.f32 %v796, %v801
    %v803 = vmul.f32 %v799, 0.001953125
    %v804 = vmul.f32 %v802, 0.001953125
    %v805 = vmul.f32 %v803, %v803
    %v806 = vsub.f32 %v804, %v805
    %v807 = vmax.f32 %v806, 0.0
    %v808 = vld [vmem:[%s5] sm:$0x1]
    %v809 = vadd.f32 %v807, 1e-05
    %v810 = vrsqrt.pop %v809
    %v811 = vmul.f32 %v808, %v810
    %v812 = vld [vmem:[%s6] sm:$0x1]
    %v813 = vmul.f32 %v803, %v811
    %v814 = vsub.f32 %v812, %v813
    %v816 = vlaneseq
    %v817 = vshrl.u32 %v816, 7
    %v818 = vsub.s32 0, %v817
    %v819 = vrot.slane %v811, %v818
    %v821 = vmul.f32 %v743, %v819
    %v822 = vmul.f32 %v746, %v819
    %v823 = vmul.f32 %v751, %v819
    %v824 = vmul.f32 %v754, %v819
    %v826 = vlaneseq
    %v827 = vshrl.u32 %v826, 7
    %v828 = vsub.s32 0, %v827
    %v829 = vrot.slane %v814, %v828
    %v831 = vadd.f32 %v821, %v829
    %v832 = vadd.f32 %v822, %v829
    %v833 = vadd.f32 %v823, %v829
    %v834 = vadd.f32 %v824, %v829
    %v835 = vmax.f32 %v831, 0.0
    %v836 = vmax.f32 %v832, 0.0
    %v837 = vmax.f32 %v833, 0.0
    %v838 = vmax.f32 %v834, 0.0
    %839 = vst [vmem:[#allocation2 + $0x1] sm:$0xff] %v835
    %840 = vst [vmem:[#allocation2 + $0x9] sm:$0xff] %v836
    %841 = vst [vmem:[#allocation2 + $0x19] sm:$0xff] %v837
    %842 = vst [vmem:[#allocation2 + $0x21] sm:$0xff] %v838
    %v843 = vld [vmem:[#allocation2] sm:$0xff]
    %v844 = vld [vmem:[#allocation2 + $0x8] sm:$0xff]
    %v845 = vld [vmem:[#allocation2 + $0x18] sm:$0xff]
    %v846 = vld [vmem:[#allocation2 + $0x20] sm:$0xff]
    %v847 = vpack.c.bf16 %v844, %v843
    %v848 = vpack.c.bf16 %v846, %v845
    %v849 = vld [vmem:[#allocation2 + $0x1] sm:$0xff]
    %v850 = vld [vmem:[#allocation2 + $0x9] sm:$0xff]
    %v851 = vld [vmem:[#allocation2 + $0x19] sm:$0xff]
    %v852 = vld [vmem:[#allocation2 + $0x21] sm:$0xff]
    %v853 = vpack.c.bf16 %v850, %v849
    %v854 = vpack.c.bf16 %v852, %v851
    %v855 = vld [vmem:[#allocation2 + $0x2] sm:$0xff]
    %v856 = vld [vmem:[#allocation2 + $0xa] sm:$0xff]
    %v857 = vld [vmem:[#allocation2 + $0x1a] sm:$0xff]
    %v858 = vld [vmem:[#allocation2 + $0x22] sm:$0xff]
    %v859 = vpack.c.bf16 %v856, %v855
    %v860 = vpack.c.bf16 %v858, %v857
    %v861 = vld [vmem:[%s7] sm:$0xf]
    %v862 = vld [vmem:[%s7 + $0x4] sm:$0xf]
    %v863 = vld [vmem:[%s7 + $0x8] sm:$0xf]
    %v864 = vld [vmem:[%s7 + $0xc] sm:$0xf]
    %v865 = vld [vmem:[%s7 + $0x10] sm:$0xf]
    %v866 = vld [vmem:[%s7 + $0x14] sm:$0xf]
    %v867 = vld [vmem:[%s7 + $0x18] sm:$0xf]
    %v868 = vld [vmem:[%s7 + $0x1c] sm:$0xf]
    %v869 = vld [vmem:[%s7 + $0x20] sm:$0xf]
    %v870 = vld [vmem:[%s7 + $0x24] sm:$0xf]
    %v871 = vld [vmem:[%s7 + $0x28] sm:$0xf]
    %v872 = vld [vmem:[%s7 + $0x2c] sm:$0xf]
    %v873 = vld [vmem:[%s7 + $0x30] sm:$0xf]
    %v874 = vld [vmem:[%s7 + $0x34] sm:$0xf]
    %v875 = vld [vmem:[%s7 + $0x38] sm:$0xf]
    %v876 = vld [vmem:[%s7 + $0x3c] sm:$0xf]
    %v877 = vld [vmem:[%s7 + $0x40] sm:$0xf]
    %v878 = vld [vmem:[%s7 + $0x44] sm:$0xf]
    %v879 = vld [vmem:[%s7 + $0x48] sm:$0xf]
    %v880 = vld [vmem:[%s7 + $0x4c] sm:$0xf]
    %v881 = vld [vmem:[%s7 + $0x50] sm:$0xf]
    %v882 = vld [vmem:[%s7 + $0x54] sm:$0xf]
    %v883 = vld [vmem:[%s7 + $0x58] sm:$0xf]
    %v884 = vld [vmem:[%s7 + $0x5c] sm:$0xf]
    %v885 = vld [vmem:[%s7 + $0x60] sm:$0xf]
    %v886 = vld [vmem:[%s7 + $0x64] sm:$0xf]
    %v887 = vld [vmem:[%s7 + $0x68] sm:$0xf]
    %v888 = vld [vmem:[%s7 + $0x6c] sm:$0xf]
    %v889 = vld [vmem:[%s7 + $0x70] sm:$0xf]
    %v890 = vld [vmem:[%s7 + $0x74] sm:$0xf]
    %v891 = vld [vmem:[%s7 + $0x78] sm:$0xf]
    %v892 = vld [vmem:[%s7 + $0x7c] sm:$0xf]
    %v893 = vld [vmem:[%s7 + $0x80] sm:$0xf]
    %v894 = vld [vmem:[%s7 + $0x84] sm:$0xf]
    %v895 = vld [vmem:[%s7 + $0x88] sm:$0xf]
    %v896 = vld [vmem:[%s7 + $0x8c] sm:$0xf]
    %v897 = vld [vmem:[%s7 + $0x90] sm:$0xf]
    %v898 = vld [vmem:[%s7 + $0x94] sm:$0xf]
    %v899 = vld [vmem:[%s7 + $0x98] sm:$0xf]
    %v900 = vld [vmem:[%s7 + $0x9c] sm:$0xf]
    %v901 = vld [vmem:[%s7 + $0xa0] sm:$0xf]
    %v902 = vld [vmem:[%s7 + $0xa4] sm:$0xf]
    %v903 = vld [vmem:[%s7 + $0xa8] sm:$0xf]
    %v904 = vld [vmem:[%s7 + $0xac] sm:$0xf]
    %v905 = vld [vmem:[%s7 + $0xb0] sm:$0xf]
    %v906 = vld [vmem:[%s7 + $0xb4] sm:$0xf]
    %v907 = vld [vmem:[%s7 + $0xb8] sm:$0xf]
    %v908 = vld [vmem:[%s7 + $0xbc] sm:$0xf]
    %v957 = vunpack.c.l.b16 %v861
    %v958 = vunpack.c.l.b16 %v862
    %v959 = vunpack.c.l.b16 %v863
    %v960 = vunpack.c.l.b16 %v864
    %v961 = vunpack.c.l.b16 %v865
    %v962 = vunpack.c.l.b16 %v866
    %v963 = vunpack.c.l.b16 %v867
    %v964 = vunpack.c.l.b16 %v868
    %v965 = vunpack.c.l.b16 %v869
    %v966 = vunpack.c.l.b16 %v870
    %v967 = vunpack.c.l.b16 %v871
    %v968 = vunpack.c.l.b16 %v872
    %v969 = vunpack.c.l.b16 %v873
    %v970 = vunpack.c.l.b16 %v874
    %v971 = vunpack.c.l.b16 %v875
    %v972 = vunpack.c.l.b16 %v876
    %v973 = vunpack.c.l.b16 %v877
    %v974 = vunpack.c.l.b16 %v878
    %v975 = vunpack.c.l.b16 %v879
    %v976 = vunpack.c.l.b16 %v880
    %v977 = vunpack.c.l.b16 %v881
    %v978 = vunpack.c.l.b16 %v882
    %v979 = vunpack.c.l.b16 %v883
    %v980 = vunpack.c.l.b16 %v884
    %v981 = vunpack.c.l.b16 %v885
    %v982 = vunpack.c.l.b16 %v886
    %v983 = vunpack.c.l.b16 %v887
    %v984 = vunpack.c.l.b16 %v888
    %v985 = vunpack.c.l.b16 %v889
    %v986 = vunpack.c.l.b16 %v890
    %v987 = vunpack.c.l.b16 %v891
    %v988 = vunpack.c.l.b16 %v892
    %v989 = vunpack.c.l.b16 %v893
    %v990 = vunpack.c.l.b16 %v894
    %v991 = vunpack.c.l.b16 %v895
    %v992 = vunpack.c.l.b16 %v896
    %v993 = vunpack.c.l.b16 %v897
    %v994 = vunpack.c.l.b16 %v898
    %v995 = vunpack.c.l.b16 %v899
    %v996 = vunpack.c.l.b16 %v900
    %v997 = vunpack.c.l.b16 %v901
    %v998 = vunpack.c.l.b16 %v902
    %v999 = vunpack.c.l.b16 %v903
    %v1000 = vunpack.c.l.b16 %v904
    %v1001 = vunpack.c.l.b16 %v905
    %v1002 = vunpack.c.l.b16 %v906
    %v1003 = vunpack.c.l.b16 %v907
    %v1004 = vunpack.c.l.b16 %v908
    %v1005 = vpack.c.b16 %v958, %v957
    %v1006 = vpack.c.b16 %v960, %v959
    %v1007 = vpack.c.b16 %v962, %v961
    %v1008 = vpack.c.b16 %v964, %v963
    %v1009 = vpack.c.b16 %v966, %v965
    %v1010 = vpack.c.b16 %v968, %v967
    %v1011 = vpack.c.b16 %v970, %v969
    %v1012 = vpack.c.b16 %v972, %v971
    %v1013 = vpack.c.b16 %v974, %v973
    %v1014 = vpack.c.b16 %v976, %v975
    %v1015 = vpack.c.b16 %v978, %v977
    %v1016 = vpack.c.b16 %v980, %v979
    %v1017 = vpack.c.b16 %v982, %v981
    %v1018 = vpack.c.b16 %v984, %v983
    %v1019 = vpack.c.b16 %v986, %v985
    %v1020 = vpack.c.b16 %v988, %v987
    %v1021 = vpack.c.b16 %v990, %v989
    %v1022 = vpack.c.b16 %v992, %v991
    %v1023 = vpack.c.b16 %v994, %v993
    %v1024 = vpack.c.b16 %v996, %v995
    %v1025 = vpack.c.b16 %v998, %v997
    %v1026 = vpack.c.b16 %v1000, %v999
    %v1027 = vpack.c.b16 %v1002, %v1001
    %v1028 = vpack.c.b16 %v1004, %v1003
    %1053 = vmatprep.subr.bf16.mxu0 0
    %1054 = vmatpush1.bf16.msra.mxu0 %v1012
    %1055 = vmatprep.subr.bf16.mxu0 0
    %1056 = vmatpush1.bf16.msra.mxu0 %v1011
    %1057 = vmatprep.subr.bf16.mxu0 0
    %1058 = vmatpush1.bf16.msra.mxu0 %v1010
    %1059 = vmatprep.subr.bf16.mxu0 0
    %1060 = vmatpush1.bf16.msra.mxu0 %v1009
    %1061 = vmatprep.subr.bf16.mxu0 0
    %1062 = vmatpush1.bf16.msra.mxu0 %v1008
    %1063 = vmatprep.subr.bf16.mxu0 0
    %1064 = vmatpush1.bf16.msra.mxu0 %v1007
    %1065 = vmatprep.subr.bf16.mxu0 0
    %1066 = vmatpush1.bf16.msra.mxu0 %v1006
    %1067 = vmatprep.subr.bf16.mxu0 0
    %1068 = vmatpush1.bf16.msra.mxu0 %v1005
    %1069 = vmatprep.subr.bf16.mxu0 0
    %1070 = vmatpush2.bf16.msra.mxu0 %v1020
    %1071 = vmatprep.subr.bf16.mxu0 0
    %1072 = vmatpush2.bf16.msra.mxu0 %v1019
    %1073 = vmatprep.subr.bf16.mxu0 0
    %1074 = vmatpush2.bf16.msra.mxu0 %v1018
    %1075 = vmatprep.subr.bf16.mxu0 0
    %1076 = vmatpush2.bf16.msra.mxu0 %v1017
    %1077 = vmatprep.subr.bf16.mxu0 0
    %1078 = vmatpush2.bf16.msra.mxu0 %v1016
    %1079 = vmatprep.subr.bf16.mxu0 0
    %1080 = vmatpush2.bf16.msra.mxu0 %v1015
    %1081 = vmatprep.subr.bf16.mxu0 0
    %1082 = vmatpush2.bf16.msra.mxu0 %v1014
    %1083 = vmatprep.subr.bf16.mxu0 0
    %1084 = vmatpush2.bf16.msra.mxu0 %v1013
    %1085 = vmatprep.mubr.bf16.mxu0 %v853
    %1086 = vmatmul.mubr.bf16.gmra.mxu0 %v847
    %v1087 = vpop.f32.mrf.mxu0
    %v1088 = vadd.f32 0.0, %v1087
    %v1089 = vpop.f32.mrf.mxu0
    %v1090 = vpop.f32.mrf.mxu0
    %v1091 = vadd.f32 0.0, %v1090
    %v1092 = vpop.f32.mrf.mxu0
    %1093 = vmatprep.mubr.bf16.mxu0 %v854
    %1094 = vmatmul.mubr.bf16.gmra.mxu0 %v848
    %v1095 = vpop.f32.mrf.mxu0
    %v1096 = vadd.f32 0.0, %v1095
    %v1097 = vpop.f32.mrf.mxu0
    %v1098 = vpop.f32.mrf.mxu0
    %v1099 = vadd.f32 0.0, %v1098
    %v1100 = vpop.f32.mrf.mxu0
    %1101 = vdwg.mxu0
    %1102 = vmatprep.subr.bf16.mxu0 0
    %1103 = vmatpush1.bf16.msra.mxu0 %v1028
    %1104 = vmatprep.subr.bf16.mxu0 0
    %1105 = vmatpush1.bf16.msra.mxu0 %v1027
    %1106 = vmatprep.subr.bf16.mxu0 0
    %1107 = vmatpush1.bf16.msra.mxu0 %v1026
    %1108 = vmatprep.subr.bf16.mxu0 0
    %1109 = vmatpush1.bf16.msra.mxu0 %v1025
    %1110 = vmatprep.subr.bf16.mxu0 0
    %1111 = vmatpush1.bf16.msra.mxu0 %v1024
    %1112 = vmatprep.subr.bf16.mxu0 0
    %1113 = vmatpush1.bf16.msra.mxu0 %v1023
    %1114 = vmatprep.subr.bf16.mxu0 0
    %1115 = vmatpush1.bf16.msra.mxu0 %v1022
    %1116 = vmatprep.subr.bf16.mxu0 0
    %1117 = vmatpush1.bf16.msra.mxu0 %v1021
    %1118 = vmatprep.subr.bf16.mxu0 0
    %1119 = vmatpush2.bf16.msra.mxu0 0
    %1120 = vmatprep.subr.bf16.mxu0 0
    %1121 = vmatpush2.bf16.msra.mxu0 0
    %1122 = vmatprep.subr.bf16.mxu0 0
    %1123 = vmatpush2.bf16.msra.mxu0 0
    %1124 = vmatprep.subr.bf16.mxu0 0
    %1125 = vmatpush2.bf16.msra.mxu0 0
    %1126 = vmatprep.subr.bf16.mxu0 0
    %1127 = vmatpush2.bf16.msra.mxu0 0
    %1128 = vmatprep.subr.bf16.mxu0 0
    %1129 = vmatpush2.bf16.msra.mxu0 0
    %1130 = vmatprep.subr.bf16.mxu0 0
    %1131 = vmatpush2.bf16.msra.mxu0 0
    %1132 = vmatprep.subr.bf16.mxu0 0
    %1133 = vmatpush2.bf16.msra.mxu0 0
    %1134 = vmatprep.mubr.bf16.mxu0 0
    %1135 = vmatmul.mubr.bf16.gmra.mxu0 %v859
    %v1136 = vpop.f32.mrf.mxu0
    %v1137 = vadd.f32 %v1088, %v1136
    %v1138 = vpop.f32.mrf.mxu0
    %v1139 = vpop.f32.mrf.mxu0
    %v1140 = vadd.f32 %v1091, %v1139
    %v1141 = vpop.f32.mrf.mxu0
    %1142 = vmatprep.mubr.bf16.mxu0 0
    %1143 = vmatmul.mubr.bf16.gmra.mxu0 %v860
    %v1144 = vpop.f32.mrf.mxu0
    %v1145 = vadd.f32 %v1096, %v1144
    %v1146 = vpop.f32.mrf.mxu0
    %v1147 = vpop.f32.mrf.mxu0
    %v1148 = vadd.f32 %v1099, %v1147
    %v1149 = vpop.f32.mrf.mxu0
    %1150 = vdwg.mxu0
    %v1151 = vadd.f32 %v1137, %v1140
    %v1152 = vadd.f32 %v1151, %v1145
    %v1153 = vadd.f32 %v1152, %v1148
    %v1154 = vrot.slane %v1153, 4
    %v1155 = vadd.f32 %v1153, %v1154
    %v1156 = vrot.slane %v1155, 2
    %v1157 = vadd.f32 %v1155, %v1156
    %v1158 = vrot.slane %v1157, 1
    %v1159 = vadd.f32 %v1157, %v1158
    %v1160 = vmul.f32 %v1137, %v1137
    %v1161 = vmul.f32 %v1140, %v1140
    %v1162 = vmul.f32 %v1145, %v1145
    %v1163 = vmul.f32 %v1148, %v1148
    %v1164 = vadd.f32 %v1160, %v1161
    %v1165 = vadd.f32 %v1164, %v1162
    %v1166 = vadd.f32 %v1165, %v1163
    %v1167 = vrot.slane %v1166, 4
    %v1168 = vadd.f32 %v1166, %v1167
    %v1169 = vrot.slane %v1168, 2
    %v1170 = vadd.f32 %v1168, %v1169
    %v1171 = vrot.slane %v1170, 1
    %v1172 = vadd.f32 %v1170, %v1171
    %1173 = vrot.lane.b32.xlu0 %v1159, 8
    %v1174 = vpop.permute.xlu0 %1173
    %v1175 = vadd.f32 %v1159, %v1174
    %1176 = vrot.lane.b32.xlu0 %v1172, 8
    %v1177 = vpop.permute.xlu0 %1176
    %v1178 = vadd.f32 %v1172, %v1177
    %1179 = vrot.lane.b32.xlu0 %v1175, 16
    %v1180 = vpop.permute.xlu0 %1179
    %v1181 = vadd.f32 %v1175, %v1180
    %1182 = vrot.lane.b32.xlu0 %v1178, 16
    %v1183 = vpop.permute.xlu0 %1182
    %v1184 = vadd.f32 %v1178, %v1183
    %1185 = vrot.lane.b32.xlu0 %v1181, 32
    %v1186 = vpop.permute.xlu0 %1185
    %v1187 = vadd.f32 %v1181, %v1186
    %1188 = vrot.lane.b32.xlu0 %v1184, 32
    %v1189 = vpop.permute.xlu0 %1188
    %v1190 = vadd.f32 %v1184, %v1189
    %1191 = vrot.lane.b32.xlu0 %v1187, 64
    %v1192 = vpop.permute.xlu0 %1191
    %v1193 = vadd.f32 %v1187, %v1192
    %1194 = vrot.lane.b32.xlu0 %v1190, 64
    %v1195 = vpop.permute.xlu0 %1194
    %v1196 = vadd.f32 %v1190, %v1195
    %v1197 = vmul.f32 %v1193, 0.001953125
    %v1198 = vmul.f32 %v1196, 0.001953125
    %v1199 = vmul.f32 %v1197, %v1197
    %v1200 = vsub.f32 %v1198, %v1199
    %v1201 = vmax.f32 %v1200, 0.0
    %v1202 = vld [vmem:[%s8] sm:$0x1]
    %v1203 = vadd.f32 %v1201, 1e-05
    %v1204 = vrsqrt.pop %v1203
    %v1205 = vmul.f32 %v1202, %v1204
    %v1206 = vld [vmem:[%s9] sm:$0x1]
    %v1207 = vmul.f32 %v1197, %v1205
    %v1208 = vsub.f32 %v1206, %v1207
    %v1210 = vlaneseq
    %v1211 = vshrl.u32 %v1210, 7
    %v1212 = vsub.s32 0, %v1211
    %v1213 = vrot.slane %v1205, %v1212
    %v1215 = vmul.f32 %v1137, %v1213
    %v1216 = vmul.f32 %v1140, %v1213
    %v1217 = vmul.f32 %v1145, %v1213
    %v1218 = vmul.f32 %v1148, %v1213
    %v1220 = vlaneseq
    %v1221 = vshrl.u32 %v1220, 7
    %v1222 = vsub.s32 0, %v1221
    %v1223 = vrot.slane %v1208, %v1222
    %v1225 = vadd.f32 %v1215, %v1223
    %v1226 = vadd.f32 %v1216, %v1223
    %v1227 = vadd.f32 %v1217, %v1223
    %v1228 = vadd.f32 %v1218, %v1223
    %v1229 = vmax.f32 %v1225, 0.0
    %v1230 = vmax.f32 %v1226, 0.0
    %v1231 = vmax.f32 %v1227, 0.0
    %v1232 = vmax.f32 %v1228, 0.0
    %1233 = vst [vmem:[#allocation3] sm:$0xff] %v1229
    %1234 = vst [vmem:[#allocation3 + $0x8] sm:$0xff] %v1230
    %1235 = vst [vmem:[#allocation3 + $0x10] sm:$0xff] %v1231
    %1236 = vst [vmem:[#allocation3 + $0x18] sm:$0xff] %v1232
    %v1237 = vld [vmem:[#allocation3] sm:$0x1]
    %1238 = vst [vmem:[#allocation4] sm:$0x1] %v1237
    %v1239 = vld [vmem:[#allocation3 + $0x1] sm:$0x1]
    %1240 = vst [vmem:[#allocation4 + $0x2] sm:$0x1] %v1239
    %v1241 = vld [vmem:[#allocation3 + $0x2] sm:$0x1]
    %1242 = vst [vmem:[#allocation4 + $0x4] sm:$0x1] %v1241
    %v1243 = vld [vmem:[#allocation3 + $0x3] sm:$0x1]
    %1244 = vst [vmem:[#allocation4 + $0x6] sm:$0x1] %v1243
    %v1245 = vld [vmem:[#allocation3 + $0x4] sm:$0x1]
    %1246 = vst [vmem:[#allocation4 + $0x8] sm:$0x1] %v1245
    %v1247 = vld [vmem:[#allocation3 + $0x5] sm:$0x1]
    %1248 = vst [vmem:[#allocation4 + $0xa] sm:$0x1] %v1247
    %v1249 = vld [vmem:[#allocation3 + $0x6] sm:$0x1]
    %1250 = vst [vmem:[#allocation4 + $0xc] sm:$0x1] %v1249
    %v1251 = vld [vmem:[#allocation3 + $0x7] sm:$0x1]
    %1252 = vst [vmem:[#allocation4 + $0xe] sm:$0x1] %v1251
    %v1253 = vld [vmem:[#allocation3 + $0x8] sm:$0x1]
    %1254 = vst [vmem:[#allocation4 + $0x10] sm:$0x1] %v1253
    %v1255 = vld [vmem:[#allocation3 + $0x9] sm:$0x1]
    %1256 = vst [vmem:[#allocation4 + $0x12] sm:$0x1] %v1255
    %v1257 = vld [vmem:[#allocation3 + $0xa] sm:$0x1]
    %1258 = vst [vmem:[#allocation4 + $0x14] sm:$0x1] %v1257
    %v1259 = vld [vmem:[#allocation3 + $0xb] sm:$0x1]
    %1260 = vst [vmem:[#allocation4 + $0x16] sm:$0x1] %v1259
    %v1261 = vld [vmem:[#allocation3 + $0xc] sm:$0x1]
    %1262 = vst [vmem:[#allocation4 + $0x18] sm:$0x1] %v1261
    %v1263 = vld [vmem:[#allocation3 + $0xd] sm:$0x1]
    %1264 = vst [vmem:[#allocation4 + $0x1a] sm:$0x1] %v1263
    %v1265 = vld [vmem:[#allocation3 + $0xe] sm:$0x1]
    %1266 = vst [vmem:[#allocation4 + $0x1c] sm:$0x1] %v1265
    %v1267 = vld [vmem:[#allocation3 + $0xf] sm:$0x1]
    %1268 = vst [vmem:[#allocation4 + $0x1e] sm:$0x1] %v1267
    %v1269 = vld [vmem:[#allocation3 + $0x10] sm:$0x1]
    %1270 = vst [vmem:[#allocation4 + $0x1] sm:$0x1] %v1269
    %v1271 = vld [vmem:[#allocation3 + $0x11] sm:$0x1]
    %1272 = vst [vmem:[#allocation4 + $0x3] sm:$0x1] %v1271
    %v1273 = vld [vmem:[#allocation3 + $0x12] sm:$0x1]
    %1274 = vst [vmem:[#allocation4 + $0x5] sm:$0x1] %v1273
    %v1275 = vld [vmem:[#allocation3 + $0x13] sm:$0x1]
    %1276 = vst [vmem:[#allocation4 + $0x7] sm:$0x1] %v1275
    %v1277 = vld [vmem:[#allocation3 + $0x14] sm:$0x1]
    %1278 = vst [vmem:[#allocation4 + $0x9] sm:$0x1] %v1277
    %v1279 = vld [vmem:[#allocation3 + $0x15] sm:$0x1]
    %1280 = vst [vmem:[#allocation4 + $0xb] sm:$0x1] %v1279
    %v1281 = vld [vmem:[#allocation3 + $0x16] sm:$0x1]
    %1282 = vst [vmem:[#allocation4 + $0xd] sm:$0x1] %v1281
    %v1283 = vld [vmem:[#allocation3 + $0x17] sm:$0x1]
    %1284 = vst [vmem:[#allocation4 + $0xf] sm:$0x1] %v1283
    %v1285 = vld [vmem:[#allocation3 + $0x18] sm:$0x1]
    %1286 = vst [vmem:[#allocation4 + $0x11] sm:$0x1] %v1285
    %v1287 = vld [vmem:[#allocation3 + $0x19] sm:$0x1]
    %1288 = vst [vmem:[#allocation4 + $0x13] sm:$0x1] %v1287
    %v1289 = vld [vmem:[#allocation3 + $0x1a] sm:$0x1]
    %1290 = vst [vmem:[#allocation4 + $0x15] sm:$0x1] %v1289
    %v1291 = vld [vmem:[#allocation3 + $0x1b] sm:$0x1]
    %1292 = vst [vmem:[#allocation4 + $0x17] sm:$0x1] %v1291
    %v1293 = vld [vmem:[#allocation3 + $0x1c] sm:$0x1]
    %1294 = vst [vmem:[#allocation4 + $0x19] sm:$0x1] %v1293
    %v1295 = vld [vmem:[#allocation3 + $0x1d] sm:$0x1]
    %1296 = vst [vmem:[#allocation4 + $0x1b] sm:$0x1] %v1295
    %v1297 = vld [vmem:[#allocation3 + $0x1e] sm:$0x1]
    %1298 = vst [vmem:[#allocation4 + $0x1d] sm:$0x1] %v1297
    %v1299 = vld [vmem:[#allocation3 + $0x1f] sm:$0x1]
    %1300 = vst [vmem:[#allocation4 + $0x1f] sm:$0x1] %v1299
    %v1301 = vld [vmem:[#allocation4] sm:$0xff]
    %v1302 = vld [vmem:[#allocation4 + $0x8] sm:$0xff]
    %v1303 = vld [vmem:[#allocation4 + $0x10] sm:$0xff]
    %v1304 = vld [vmem:[#allocation4 + $0x18] sm:$0xff]
    %v1309 = vcombine.high %v1301, %v1301
    %v1311 = vunpack.c.l.s4 1983009808
    %v1312 = vunpack.c.0.s8 %v1311
    %v1313 = vlaneseq
    %v1314 = vshrl.u32 %v1313, 7
    %v1315 = vsub.s32 %v1312, %v1314
    %v1316 = vrot.slane %v1301, %v1315
    %v1318 = vunpack.c.l.s4 1983009808
    %v1319 = vunpack.c.0.s8 %v1318
    %v1320 = vlaneseq
    %v1321 = vshrl.u32 %v1320, 7
    %v1322 = vsub.s32 %v1319, %v1321
    %v1323 = vrot.slane %v1309, %v1322
    %v1324 = vcombine.high %v1316, %v1316
    %v1325 = vcombine.high %v1323, %v1323
    %v1326 = vcombine.high %v1302, %v1302
    %v1328 = vunpack.c.l.s4 1983009808
    %v1329 = vunpack.c.0.s8 %v1328
    %v1330 = vlaneseq
    %v1331 = vshrl.u32 %v1330, 7
    %v1332 = vsub.s32 %v1329, %v1331
    %v1333 = vrot.slane %v1302, %v1332
    %v1335 = vunpack.c.l.s4 1983009808
    %v1336 = vunpack.c.0.s8 %v1335
    %v1337 = vlaneseq
    %v1338 = vshrl.u32 %v1337, 7
    %v1339 = vsub.s32 %v1336, %v1338
    %v1340 = vrot.slane %v1326, %v1339
    %v1341 = vcombine.high %v1333, %v1333
    %v1342 = vcombine.high %v1340, %v1340
    %v1343 = vcombine.high %v1303, %v1303
    %v1345 = vunpack.c.l.s4 1983009808
    %v1346 = vunpack.c.0.s8 %v1345
    %v1347 = vlaneseq
    %v1348 = vshrl.u32 %v1347, 7
    %v1349 = vsub.s32 %v1346, %v1348
    %v1350 = vrot.slane %v1303, %v1349
    %v1352 = vunpack.c.l.s4 1983009808
    %v1353 = vunpack.c.0.s8 %v1352
    %v1354 = vlaneseq
    %v1355 = vshrl.u32 %v1354, 7
    %v1356 = vsub.s32 %v1353, %v1355
    %v1357 = vrot.slane %v1343, %v1356
    %v1358 = vcombine.high %v1350, %v1350
    %v1359 = vcombine.high %v1357, %v1357
    %v1360 = vcombine.high %v1304, %v1304
    %v1362 = vunpack.c.l.s4 1983009808
    %v1363 = vunpack.c.0.s8 %v1362
    %v1364 = vlaneseq
    %v1365 = vshrl.u32 %v1364, 7
    %v1366 = vsub.s32 %v1363, %v1365
    %v1367 = vrot.slane %v1304, %v1366
    %v1369 = vunpack.c.l.s4 1983009808
    %v1370 = vunpack.c.0.s8 %v1369
    %v1371 = vlaneseq
    %v1372 = vshrl.u32 %v1371, 7
    %v1373 = vsub.s32 %v1370, %v1372
    %v1374 = vrot.slane %v1360, %v1373
    %v1375 = vcombine.high %v1367, %v1367
    %v1376 = vcombine.high %v1374, %v1374
    %v1393 = vpack.c.bf16 %v1316, %v1316
    %v1394 = vpack.c.bf16 %v1324, %v1324
    %v1395 = vpack.c.bf16 %v1323, %v1323
    %v1396 = vpack.c.bf16 %v1325, %v1325
    %v1397 = vpack.c.bf16 %v1333, %v1333
    %v1398 = vpack.c.bf16 %v1341, %v1341
    %v1399 = vpack.c.bf16 %v1340, %v1340
    %v1400 = vpack.c.bf16 %v1342, %v1342
    %v1401 = vpack.c.bf16 %v1350, %v1350
    %v1402 = vpack.c.bf16 %v1358, %v1358
    %v1403 = vpack.c.bf16 %v1357, %v1357
    %v1404 = vpack.c.bf16 %v1359, %v1359
    %v1405 = vpack.c.bf16 %v1367, %v1367
    %v1406 = vpack.c.bf16 %v1375, %v1375
    %v1407 = vpack.c.bf16 %v1374, %v1374
    %v1408 = vpack.c.bf16 %v1376, %v1376
    %v1409 = vld [vmem:[%s10] sm:$0xf]
    %v1410 = vld [vmem:[%s10 + $0x4] sm:$0xf]
    %v1411 = vld [vmem:[%s10 + $0x8] sm:$0xf]
    %v1412 = vld [vmem:[%s10 + $0xc] sm:$0xf]
    %v1413 = vld [vmem:[%s10 + $0x10] sm:$0xf]
    %v1414 = vld [vmem:[%s10 + $0x14] sm:$0xf]
    %v1415 = vld [vmem:[%s10 + $0x18] sm:$0xf]
    %v1416 = vld [vmem:[%s10 + $0x1c] sm:$0xf]
    %v1417 = vld [vmem:[%s10 + $0x20] sm:$0xf]
    %v1418 = vld [vmem:[%s10 + $0x24] sm:$0xf]
    %v1419 = vld [vmem:[%s10 + $0x28] sm:$0xf]
    %v1420 = vld [vmem:[%s10 + $0x2c] sm:$0xf]
    %v1421 = vld [vmem:[%s10 + $0x30] sm:$0xf]
    %v1422 = vld [vmem:[%s10 + $0x34] sm:$0xf]
    %v1423 = vld [vmem:[%s10 + $0x38] sm:$0xf]
    %v1424 = vld [vmem:[%s10 + $0x3c] sm:$0xf]
    %v1425 = vld [vmem:[%s10 + $0x40] sm:$0xf]
    %v1426 = vld [vmem:[%s10 + $0x44] sm:$0xf]
    %v1427 = vld [vmem:[%s10 + $0x48] sm:$0xf]
    %v1428 = vld [vmem:[%s10 + $0x4c] sm:$0xf]
    %v1429 = vld [vmem:[%s10 + $0x50] sm:$0xf]
    %v1430 = vld [vmem:[%s10 + $0x54] sm:$0xf]
    %v1431 = vld [vmem:[%s10 + $0x58] sm:$0xf]
    %v1432 = vld [vmem:[%s10 + $0x5c] sm:$0xf]
    %v1433 = vld [vmem:[%s10 + $0x60] sm:$0xf]
    %v1434 = vld [vmem:[%s10 + $0x64] sm:$0xf]
    %v1435 = vld [vmem:[%s10 + $0x68] sm:$0xf]
    %v1436 = vld [vmem:[%s10 + $0x6c] sm:$0xf]
    %v1437 = vld [vmem:[%s10 + $0x70] sm:$0xf]
    %v1438 = vld [vmem:[%s10 + $0x74] sm:$0xf]
    %v1439 = vld [vmem:[%s10 + $0x78] sm:$0xf]
    %v1440 = vld [vmem:[%s10 + $0x7c] sm:$0xf]
    %v1441 = vld [vmem:[%s10 + $0x80] sm:$0xf]
    %v1442 = vld [vmem:[%s10 + $0x84] sm:$0xf]
    %v1443 = vld [vmem:[%s10 + $0x88] sm:$0xf]
    %v1444 = vld [vmem:[%s10 + $0x8c] sm:$0xf]
    %v1445 = vld [vmem:[%s10 + $0x90] sm:$0xf]
    %v1446 = vld [vmem:[%s10 + $0x94] sm:$0xf]
    %v1447 = vld [vmem:[%s10 + $0x98] sm:$0xf]
    %v1448 = vld [vmem:[%s10 + $0x9c] sm:$0xf]
    %v1449 = vld [vmem:[%s10 + $0xa0] sm:$0xf]
    %v1450 = vld [vmem:[%s10 + $0xa4] sm:$0xf]
    %v1451 = vld [vmem:[%s10 + $0xa8] sm:$0xf]
    %v1452 = vld [vmem:[%s10 + $0xac] sm:$0xf]
    %v1453 = vld [vmem:[%s10 + $0xb0] sm:$0xf]
    %v1454 = vld [vmem:[%s10 + $0xb4] sm:$0xf]
    %v1455 = vld [vmem:[%s10 + $0xb8] sm:$0xf]
    %v1456 = vld [vmem:[%s10 + $0xbc] sm:$0xf]
    %v1457 = vld [vmem:[%s10 + $0xc0] sm:$0xf]
    %v1458 = vld [vmem:[%s10 + $0xc4] sm:$0xf]
    %v1459 = vld [vmem:[%s10 + $0xc8] sm:$0xf]
    %v1460 = vld [vmem:[%s10 + $0xcc] sm:$0xf]
    %v1461 = vld [vmem:[%s10 + $0xd0] sm:$0xf]
    %v1462 = vld [vmem:[%s10 + $0xd4] sm:$0xf]
    %v1463 = vld [vmem:[%s10 + $0xd8] sm:$0xf]
    %v1464 = vld [vmem:[%s10 + $0xdc] sm:$0xf]
    %v1465 = vld [vmem:[%s10 + $0xe0] sm:$0xf]
    %v1466 = vld [vmem:[%s10 + $0xe4] sm:$0xf]
    %v1467 = vld [vmem:[%s10 + $0xe8] sm:$0xf]
    %v1468 = vld [vmem:[%s10 + $0xec] sm:$0xf]
    %v1469 = vld [vmem:[%s10 + $0xf0] sm:$0xf]
    %v1470 = vld [vmem:[%s10 + $0xf4] sm:$0xf]
    %v1471 = vld [vmem:[%s10 + $0xf8] sm:$0xf]
    %v1472 = vld [vmem:[%s10 + $0xfc] sm:$0xf]
    %v1473 = vld [vmem:[%s10 + $0x100] sm:$0xf]
    %v1474 = vld [vmem:[%s10 + $0x104] sm:$0xf]
    %v1475 = vld [vmem:[%s10 + $0x108] sm:$0xf]
    %v1476 = vld [vmem:[%s10 + $0x10c] sm:$0xf]
    %v1477 = vld [vmem:[%s10 + $0x110] sm:$0xf]
    %v1478 = vld [vmem:[%s10 + $0x114] sm:$0xf]
    %v1479 = vld [vmem:[%s10 + $0x118] sm:$0xf]
    %v1480 = vld [vmem:[%s10 + $0x11c] sm:$0xf]
    %v1481 = vld [vmem:[%s10 + $0x120] sm:$0xf]
    %v1482 = vld [vmem:[%s10 + $0x124] sm:$0xf]
    %v1483 = vld [vmem:[%s10 + $0x128] sm:$0xf]
    %v1484 = vld [vmem:[%s10 + $0x12c] sm:$0xf]
    %v1485 = vld [vmem:[%s10 + $0x130] sm:$0xf]
    %v1486 = vld [vmem:[%s10 + $0x134] sm:$0xf]
    %v1487 = vld [vmem:[%s10 + $0x138] sm:$0xf]
    %v1488 = vld [vmem:[%s10 + $0x13c] sm:$0xf]
    %v1489 = vld [vmem:[%s10 + $0x140] sm:$0xf]
    %v1490 = vld [vmem:[%s10 + $0x144] sm:$0xf]
    %v1491 = vld [vmem:[%s10 + $0x148] sm:$0xf]
    %v1492 = vld [vmem:[%s10 + $0x14c] sm:$0xf]
    %v1493 = vld [vmem:[%s10 + $0x150] sm:$0xf]
    %v1494 = vld [vmem:[%s10 + $0x154] sm:$0xf]
    %v1495 = vld [vmem:[%s10 + $0x158] sm:$0xf]
    %v1496 = vld [vmem:[%s10 + $0x15c] sm:$0xf]
    %v1497 = vld [vmem:[%s10 + $0x160] sm:$0xf]
    %v1498 = vld [vmem:[%s10 + $0x164] sm:$0xf]
    %v1499 = vld [vmem:[%s10 + $0x168] sm:$0xf]
    %v1500 = vld [vmem:[%s10 + $0x16c] sm:$0xf]
    %v1501 = vld [vmem:[%s10 + $0x170] sm:$0xf]
    %v1502 = vld [vmem:[%s10 + $0x174] sm:$0xf]
    %v1503 = vld [vmem:[%s10 + $0x178] sm:$0xf]
    %v1504 = vld [vmem:[%s10 + $0x17c] sm:$0xf]
    %v1505 = vld [vmem:[%s10 + $0x180] sm:$0xf]
    %v1506 = vld [vmem:[%s10 + $0x184] sm:$0xf]
    %v1507 = vld [vmem:[%s10 + $0x188] sm:$0xf]
    %v1508 = vld [vmem:[%s10 + $0x18c] sm:$0xf]
    %v1509 = vld [vmem:[%s10 + $0x190] sm:$0xf]
    %v1510 = vld [vmem:[%s10 + $0x194] sm:$0xf]
    %v1511 = vld [vmem:[%s10 + $0x198] sm:$0xf]
    %v1512 = vld [vmem:[%s10 + $0x19c] sm:$0xf]
    %v1513 = vld [vmem:[%s10 + $0x1a0] sm:$0xf]
    %v1514 = vld [vmem:[%s10 + $0x1a4] sm:$0xf]
    %v1515 = vld [vmem:[%s10 + $0x1a8] sm:$0xf]
    %v1516 = vld [vmem:[%s10 + $0x1ac] sm:$0xf]
    %v1517 = vld [vmem:[%s10 + $0x1b0] sm:$0xf]
    %v1518 = vld [vmem:[%s10 + $0x1b4] sm:$0xf]
    %v1519 = vld [vmem:[%s10 + $0x1b8] sm:$0xf]
    %v1520 = vld [vmem:[%s10 + $0x1bc] sm:$0xf]
    %v1521 = vld [vmem:[%s10 + $0x1c0] sm:$0xf]
    %v1522 = vld [vmem:[%s10 + $0x1c4] sm:$0xf]
    %v1523 = vld [vmem:[%s10 + $0x1c8] sm:$0xf]
    %v1524 = vld [vmem:[%s10 + $0x1cc] sm:$0xf]
    %v1525 = vld [vmem:[%s10 + $0x1d0] sm:$0xf]
    %v1526 = vld [vmem:[%s10 + $0x1d4] sm:$0xf]
    %v1527 = vld [vmem:[%s10 + $0x1d8] sm:$0xf]
    %v1528 = vld [vmem:[%s10 + $0x1dc] sm:$0xf]
    %v1529 = vld [vmem:[%s10 + $0x1e0] sm:$0xf]
    %v1530 = vld [vmem:[%s10 + $0x1e4] sm:$0xf]
    %v1531 = vld [vmem:[%s10 + $0x1e8] sm:$0xf]
    %v1532 = vld [vmem:[%s10 + $0x1ec] sm:$0xf]
    %v1533 = vld [vmem:[%s10 + $0x1f0] sm:$0xf]
    %v1534 = vld [vmem:[%s10 + $0x1f4] sm:$0xf]
    %v1535 = vld [vmem:[%s10 + $0x1f8] sm:$0xf]
    %v1536 = vld [vmem:[%s10 + $0x1fc] sm:$0xf]
    %v1537 = vld [vmem:[%s10 + $0x200] sm:$0xf]
    %v1538 = vld [vmem:[%s10 + $0x204] sm:$0xf]
    %v1539 = vld [vmem:[%s10 + $0x208] sm:$0xf]
    %v1540 = vld [vmem:[%s10 + $0x20c] sm:$0xf]
    %v1541 = vld [vmem:[%s10 + $0x210] sm:$0xf]
    %v1542 = vld [vmem:[%s10 + $0x214] sm:$0xf]
    %v1543 = vld [vmem:[%s10 + $0x218] sm:$0xf]
    %v1544 = vld [vmem:[%s10 + $0x21c] sm:$0xf]
    %v1545 = vld [vmem:[%s10 + $0x220] sm:$0xf]
    %v1546 = vld [vmem:[%s10 + $0x224] sm:$0xf]
    %v1547 = vld [vmem:[%s10 + $0x228] sm:$0xf]
    %v1548 = vld [vmem:[%s10 + $0x22c] sm:$0xf]
    %v1549 = vld [vmem:[%s10 + $0x230] sm:$0xf]
    %v1550 = vld [vmem:[%s10 + $0x234] sm:$0xf]
    %v1551 = vld [vmem:[%s10 + $0x238] sm:$0xf]
    %v1552 = vld [vmem:[%s10 + $0x23c] sm:$0xf]
    %v1553 = vld [vmem:[%s10 + $0x240] sm:$0xf]
    %v1554 = vld [vmem:[%s10 + $0x244] sm:$0xf]
    %v1555 = vld [vmem:[%s10 + $0x248] sm:$0xf]
    %v1556 = vld [vmem:[%s10 + $0x24c] sm:$0xf]
    %v1557 = vld [vmem:[%s10 + $0x250] sm:$0xf]
    %v1558 = vld [vmem:[%s10 + $0x254] sm:$0xf]
    %v1559 = vld [vmem:[%s10 + $0x258] sm:$0xf]
    %v1560 = vld [vmem:[%s10 + $0x25c] sm:$0xf]
    %v1561 = vld [vmem:[%s10 + $0x260] sm:$0xf]
    %v1562 = vld [vmem:[%s10 + $0x264] sm:$0xf]
    %v1563 = vld [vmem:[%s10 + $0x268] sm:$0xf]
    %v1564 = vld [vmem:[%s10 + $0x26c] sm:$0xf]
    %v1565 = vld [vmem:[%s10 + $0x270] sm:$0xf]
    %v1566 = vld [vmem:[%s10 + $0x274] sm:$0xf]
    %v1567 = vld [vmem:[%s10 + $0x278] sm:$0xf]
    %v1568 = vld [vmem:[%s10 + $0x27c] sm:$0xf]
    %v1569 = vld [vmem:[%s10 + $0x280] sm:$0xf]
    %v1570 = vld [vmem:[%s10 + $0x284] sm:$0xf]
    %v1571 = vld [vmem:[%s10 + $0x288] sm:$0xf]
    %v1572 = vld [vmem:[%s10 + $0x28c] sm:$0xf]
    %v1573 = vld [vmem:[%s10 + $0x290] sm:$0xf]
    %v1574 = vld [vmem:[%s10 + $0x294] sm:$0xf]
    %v1575 = vld [vmem:[%s10 + $0x298] sm:$0xf]
    %v1576 = vld [vmem:[%s10 + $0x29c] sm:$0xf]
    %v1577 = vld [vmem:[%s10 + $0x2a0] sm:$0xf]
    %v1578 = vld [vmem:[%s10 + $0x2a4] sm:$0xf]
    %v1579 = vld [vmem:[%s10 + $0x2a8] sm:$0xf]
    %v1580 = vld [vmem:[%s10 + $0x2ac] sm:$0xf]
    %v1581 = vld [vmem:[%s10 + $0x2b0] sm:$0xf]
    %v1582 = vld [vmem:[%s10 + $0x2b4] sm:$0xf]
    %v1583 = vld [vmem:[%s10 + $0x2b8] sm:$0xf]
    %v1584 = vld [vmem:[%s10 + $0x2bc] sm:$0xf]
    %v1585 = vld [vmem:[%s10 + $0x2c0] sm:$0xf]
    %v1586 = vld [vmem:[%s10 + $0x2c4] sm:$0xf]
    %v1587 = vld [vmem:[%s10 + $0x2c8] sm:$0xf]
    %v1588 = vld [vmem:[%s10 + $0x2cc] sm:$0xf]
    %v1589 = vld [vmem:[%s10 + $0x2d0] sm:$0xf]
    %v1590 = vld [vmem:[%s10 + $0x2d4] sm:$0xf]
    %v1591 = vld [vmem:[%s10 + $0x2d8] sm:$0xf]
    %v1592 = vld [vmem:[%s10 + $0x2dc] sm:$0xf]
    %v1593 = vld [vmem:[%s10 + $0x2e0] sm:$0xf]
    %v1594 = vld [vmem:[%s10 + $0x2e4] sm:$0xf]
    %v1595 = vld [vmem:[%s10 + $0x2e8] sm:$0xf]
    %v1596 = vld [vmem:[%s10 + $0x2ec] sm:$0xf]
    %v1597 = vld [vmem:[%s10 + $0x2f0] sm:$0xf]
    %v1598 = vld [vmem:[%s10 + $0x2f4] sm:$0xf]
    %v1599 = vld [vmem:[%s10 + $0x2f8] sm:$0xf]
    %v1600 = vld [vmem:[%s10 + $0x2fc] sm:$0xf]
    %v1601 = vld [vmem:[%s10 + $0x300] sm:$0xf]
    %v1602 = vld [vmem:[%s10 + $0x304] sm:$0xf]
    %v1603 = vld [vmem:[%s10 + $0x308] sm:$0xf]
    %v1604 = vld [vmem:[%s10 + $0x30c] sm:$0xf]
    %v1605 = vld [vmem:[%s10 + $0x310] sm:$0xf]
    %v1606 = vld [vmem:[%s10 + $0x314] sm:$0xf]
    %v1607 = vld [vmem:[%s10 + $0x318] sm:$0xf]
    %v1608 = vld [vmem:[%s10 + $0x31c] sm:$0xf]
    %v1609 = vld [vmem:[%s10 + $0x320] sm:$0xf]
    %v1610 = vld [vmem:[%s10 + $0x324] sm:$0xf]
    %v1611 = vld [vmem:[%s10 + $0x328] sm:$0xf]
    %v1612 = vld [vmem:[%s10 + $0x32c] sm:$0xf]
    %v1613 = vld [vmem:[%s10 + $0x330] sm:$0xf]
    %v1614 = vld [vmem:[%s10 + $0x334] sm:$0xf]
    %v1615 = vld [vmem:[%s10 + $0x338] sm:$0xf]
    %v1616 = vld [vmem:[%s10 + $0x33c] sm:$0xf]
    %v1617 = vld [vmem:[%s10 + $0x340] sm:$0xf]
    %v1618 = vld [vmem:[%s10 + $0x344] sm:$0xf]
    %v1619 = vld [vmem:[%s10 + $0x348] sm:$0xf]
    %v1620 = vld [vmem:[%s10 + $0x34c] sm:$0xf]
    %v1621 = vld [vmem:[%s10 + $0x350] sm:$0xf]
    %v1622 = vld [vmem:[%s10 + $0x354] sm:$0xf]
    %v1623 = vld [vmem:[%s10 + $0x358] sm:$0xf]
    %v1624 = vld [vmem:[%s10 + $0x35c] sm:$0xf]
    %v1625 = vld [vmem:[%s10 + $0x360] sm:$0xf]
    %v1626 = vld [vmem:[%s10 + $0x364] sm:$0xf]
    %v1627 = vld [vmem:[%s10 + $0x368] sm:$0xf]
    %v1628 = vld [vmem:[%s10 + $0x36c] sm:$0xf]
    %v1629 = vld [vmem:[%s10 + $0x370] sm:$0xf]
    %v1630 = vld [vmem:[%s10 + $0x374] sm:$0xf]
    %v1631 = vld [vmem:[%s10 + $0x378] sm:$0xf]
    %v1632 = vld [vmem:[%s10 + $0x37c] sm:$0xf]
    %v1633 = vld [vmem:[%s10 + $0x380] sm:$0xf]
    %v1634 = vld [vmem:[%s10 + $0x384] sm:$0xf]
    %v1635 = vld [vmem:[%s10 + $0x388] sm:$0xf]
    %v1636 = vld [vmem:[%s10 + $0x38c] sm:$0xf]
    %v1637 = vld [vmem:[%s10 + $0x390] sm:$0xf]
    %v1638 = vld [vmem:[%s10 + $0x394] sm:$0xf]
    %v1639 = vld [vmem:[%s10 + $0x398] sm:$0xf]
    %v1640 = vld [vmem:[%s10 + $0x39c] sm:$0xf]
    %v1641 = vld [vmem:[%s10 + $0x3a0] sm:$0xf]
    %v1642 = vld [vmem:[%s10 + $0x3a4] sm:$0xf]
    %v1643 = vld [vmem:[%s10 + $0x3a8] sm:$0xf]
    %v1644 = vld [vmem:[%s10 + $0x3ac] sm:$0xf]
    %v1645 = vld [vmem:[%s10 + $0x3b0] sm:$0xf]
    %v1646 = vld [vmem:[%s10 + $0x3b4] sm:$0xf]
    %v1647 = vld [vmem:[%s10 + $0x3b8] sm:$0xf]
    %v1648 = vld [vmem:[%s10 + $0x3bc] sm:$0xf]
    %v1649 = vld [vmem:[%s10 + $0x3c0] sm:$0xf]
    %v1650 = vld [vmem:[%s10 + $0x3c4] sm:$0xf]
    %v1651 = vld [vmem:[%s10 + $0x3c8] sm:$0xf]
    %v1652 = vld [vmem:[%s10 + $0x3cc] sm:$0xf]
    %v1653 = vld [vmem:[%s10 + $0x3d0] sm:$0xf]
    %v1654 = vld [vmem:[%s10 + $0x3d4] sm:$0xf]
    %v1655 = vld [vmem:[%s10 + $0x3d8] sm:$0xf]
    %v1656 = vld [vmem:[%s10 + $0x3dc] sm:$0xf]
    %v1657 = vld [vmem:[%s10 + $0x3e0] sm:$0xf]
    %v1658 = vld [vmem:[%s10 + $0x3e4] sm:$0xf]
    %v1659 = vld [vmem:[%s10 + $0x3e8] sm:$0xf]
    %v1660 = vld [vmem:[%s10 + $0x3ec] sm:$0xf]
    %v1661 = vld [vmem:[%s10 + $0x3f0] sm:$0xf]
    %v1662 = vld [vmem:[%s10 + $0x3f4] sm:$0xf]
    %v1663 = vld [vmem:[%s10 + $0x3f8] sm:$0xf]
    %v1664 = vld [vmem:[%s10 + $0x3fc] sm:$0xf]
    %v1665 = vld [vmem:[%s11] sm:$0x1]
    %v1667 = vlaneseq
    %v1668 = vshrl.u32 %v1667, 7
    %v1669 = vsub.s32 0, %v1668
    %v1670 = vrot.slane %v1665, %v1669
    %v1928 = vunpack.c.l.b16 %v1409
    %v1929 = vunpack.c.l.b16 %v1410
    %v1930 = vunpack.c.l.b16 %v1411
    %v1931 = vunpack.c.l.b16 %v1412
    %v1932 = vunpack.c.l.b16 %v1413
    %v1933 = vunpack.c.l.b16 %v1414
    %v1934 = vunpack.c.l.b16 %v1415
    %v1935 = vunpack.c.l.b16 %v1416
    %v1936 = vunpack.c.l.b16 %v1417
    %v1937 = vunpack.c.l.b16 %v1418
    %v1938 = vunpack.c.l.b16 %v1419
    %v1939 = vunpack.c.l.b16 %v1420
    %v1940 = vunpack.c.l.b16 %v1421
    %v1941 = vunpack.c.l.b16 %v1422
    %v1942 = vunpack.c.l.b16 %v1423
    %v1943 = vunpack.c.l.b16 %v1424
    %v1944 = vunpack.c.l.b16 %v1425
    %v1945 = vunpack.c.l.b16 %v1426
    %v1946 = vunpack.c.l.b16 %v1427
    %v1947 = vunpack.c.l.b16 %v1428
    %v1948 = vunpack.c.l.b16 %v1429
    %v1949 = vunpack.c.l.b16 %v1430
    %v1950 = vunpack.c.l.b16 %v1431
    %v1951 = vunpack.c.l.b16 %v1432
    %v1952 = vunpack.c.l.b16 %v1433
    %v1953 = vunpack.c.l.b16 %v1434
    %v1954 = vunpack.c.l.b16 %v1435
    %v1955 = vunpack.c.l.b16 %v1436
    %v1956 = vunpack.c.l.b16 %v1437
    %v1957 = vunpack.c.l.b16 %v1438
    %v1958 = vunpack.c.l.b16 %v1439
    %v1959 = vunpack.c.l.b16 %v1440
    %v1960 = vunpack.c.l.b16 %v1441
    %v1961 = vunpack.c.l.b16 %v1442
    %v1962 = vunpack.c.l.b16 %v1443
    %v1963 = vunpack.c.l.b16 %v1444
    %v1964 = vunpack.c.l.b16 %v1445
    %v1965 = vunpack.c.l.b16 %v1446
    %v1966 = vunpack.c.l.b16 %v1447
    %v1967 = vunpack.c.l.b16 %v1448
    %v1968 = vunpack.c.l.b16 %v1449
    %v1969 = vunpack.c.l.b16 %v1450
    %v1970 = vunpack.c.l.b16 %v1451
    %v1971 = vunpack.c.l.b16 %v1452
    %v1972 = vunpack.c.l.b16 %v1453
    %v1973 = vunpack.c.l.b16 %v1454
    %v1974 = vunpack.c.l.b16 %v1455
    %v1975 = vunpack.c.l.b16 %v1456
    %v1976 = vunpack.c.l.b16 %v1457
    %v1977 = vunpack.c.l.b16 %v1458
    %v1978 = vunpack.c.l.b16 %v1459
    %v1979 = vunpack.c.l.b16 %v1460
    %v1980 = vunpack.c.l.b16 %v1461
    %v1981 = vunpack.c.l.b16 %v1462
    %v1982 = vunpack.c.l.b16 %v1463
    %v1983 = vunpack.c.l.b16 %v1464
    %v1984 = vunpack.c.l.b16 %v1465
    %v1985 = vunpack.c.l.b16 %v1466
    %v1986 = vunpack.c.l.b16 %v1467
    %v1987 = vunpack.c.l.b16 %v1468
    %v1988 = vunpack.c.l.b16 %v1469
    %v1989 = vunpack.c.l.b16 %v1470
    %v1990 = vunpack.c.l.b16 %v1471
    %v1991 = vunpack.c.l.b16 %v1472
    %v1992 = vunpack.c.l.b16 %v1473
    %v1993 = vunpack.c.l.b16 %v1474
    %v1994 = vunpack.c.l.b16 %v1475
    %v1995 = vunpack.c.l.b16 %v1476
    %v1996 = vunpack.c.l.b16 %v1477
    %v1997 = vunpack.c.l.b16 %v1478
    %v1998 = vunpack.c.l.b16 %v1479
    %v1999 = vunpack.c.l.b16 %v1480
    %v2000 = vunpack.c.l.b16 %v1481
    %v2001 = vunpack.c.l.b16 %v1482
    %v2002 = vunpack.c.l.b16 %v1483
    %v2003 = vunpack.c.l.b16 %v1484
    %v2004 = vunpack.c.l.b16 %v1485
    %v2005 = vunpack.c.l.b16 %v1486
    %v2006 = vunpack.c.l.b16 %v1487
    %v2007 = vunpack.c.l.b16 %v1488
    %v2008 = vunpack.c.l.b16 %v1489
    %v2009 = vunpack.c.l.b16 %v1490
    %v2010 = vunpack.c.l.b16 %v1491
    %v2011 = vunpack.c.l.b16 %v1492
    %v2012 = vunpack.c.l.b16 %v1493
    %v2013 = vunpack.c.l.b16 %v1494
    %v2014 = vunpack.c.l.b16 %v1495
    %v2015 = vunpack.c.l.b16 %v1496
    %v2016 = vunpack.c.l.b16 %v1497
    %v2017 = vunpack.c.l.b16 %v1498
    %v2018 = vunpack.c.l.b16 %v1499
    %v2019 = vunpack.c.l.b16 %v1500
    %v2020 = vunpack.c.l.b16 %v1501
    %v2021 = vunpack.c.l.b16 %v1502
    %v2022 = vunpack.c.l.b16 %v1503
    %v2023 = vunpack.c.l.b16 %v1504
    %v2024 = vunpack.c.l.b16 %v1505
    %v2025 = vunpack.c.l.b16 %v1506
    %v2026 = vunpack.c.l.b16 %v1507
    %v2027 = vunpack.c.l.b16 %v1508
    %v2028 = vunpack.c.l.b16 %v1509
    %v2029 = vunpack.c.l.b16 %v1510
    %v2030 = vunpack.c.l.b16 %v1511
    %v2031 = vunpack.c.l.b16 %v1512
    %v2032 = vunpack.c.l.b16 %v1513
    %v2033 = vunpack.c.l.b16 %v1514
    %v2034 = vunpack.c.l.b16 %v1515
    %v2035 = vunpack.c.l.b16 %v1516
    %v2036 = vunpack.c.l.b16 %v1517
    %v2037 = vunpack.c.l.b16 %v1518
    %v2038 = vunpack.c.l.b16 %v1519
    %v2039 = vunpack.c.l.b16 %v1520
    %v2040 = vunpack.c.l.b16 %v1521
    %v2041 = vunpack.c.l.b16 %v1522
    %v2042 = vunpack.c.l.b16 %v1523
    %v2043 = vunpack.c.l.b16 %v1524
    %v2044 = vunpack.c.l.b16 %v1525
    %v2045 = vunpack.c.l.b16 %v1526
    %v2046 = vunpack.c.l.b16 %v1527
    %v2047 = vunpack.c.l.b16 %v1528
    %v2048 = vunpack.c.l.b16 %v1529
    %v2049 = vunpack.c.l.b16 %v1530
    %v2050 = vunpack.c.l.b16 %v1531
    %v2051 = vunpack.c.l.b16 %v1532
    %v2052 = vunpack.c.l.b16 %v1533
    %v2053 = vunpack.c.l.b16 %v1534
    %v2054 = vunpack.c.l.b16 %v1535
    %v2055 = vunpack.c.l.b16 %v1536
    %v2056 = vunpack.c.l.b16 %v1537
    %v2057 = vunpack.c.l.b16 %v1538
    %v2058 = vunpack.c.l.b16 %v1539
    %v2059 = vunpack.c.l.b16 %v1540
    %v2060 = vunpack.c.l.b16 %v1541
    %v2061 = vunpack.c.l.b16 %v1542
    %v2062 = vunpack.c.l.b16 %v1543
    %v2063 = vunpack.c.l.b16 %v1544
    %v2064 = vunpack.c.l.b16 %v1545
    %v2065 = vunpack.c.l.b16 %v1546
    %v2066 = vunpack.c.l.b16 %v1547
    %v2067 = vunpack.c.l.b16 %v1548
    %v2068 = vunpack.c.l.b16 %v1549
    %v2069 = vunpack.c.l.b16 %v1550
    %v2070 = vunpack.c.l.b16 %v1551
    %v2071 = vunpack.c.l.b16 %v1552
    %v2072 = vunpack.c.l.b16 %v1553
    %v2073 = vunpack.c.l.b16 %v1554
    %v2074 = vunpack.c.l.b16 %v1555
    %v2075 = vunpack.c.l.b16 %v1556
    %v2076 = vunpack.c.l.b16 %v1557
    %v2077 = vunpack.c.l.b16 %v1558
    %v2078 = vunpack.c.l.b16 %v1559
    %v2079 = vunpack.c.l.b16 %v1560
    %v2080 = vunpack.c.l.b16 %v1561
    %v2081 = vunpack.c.l.b16 %v1562
    %v2082 = vunpack.c.l.b16 %v1563
    %v2083 = vunpack.c.l.b16 %v1564
    %v2084 = vunpack.c.l.b16 %v1565
    %v2085 = vunpack.c.l.b16 %v1566
    %v2086 = vunpack.c.l.b16 %v1567
    %v2087 = vunpack.c.l.b16 %v1568
    %v2088 = vunpack.c.l.b16 %v1569
    %v2089 = vunpack.c.l.b16 %v1570
    %v2090 = vunpack.c.l.b16 %v1571
    %v2091 = vunpack.c.l.b16 %v1572
    %v2092 = vunpack.c.l.b16 %v1573
    %v2093 = vunpack.c.l.b16 %v1574
    %v2094 = vunpack.c.l.b16 %v1575
    %v2095 = vunpack.c.l.b16 %v1576
    %v2096 = vunpack.c.l.b16 %v1577
    %v2097 = vunpack.c.l.b16 %v1578
    %v2098 = vunpack.c.l.b16 %v1579
    %v2099 = vunpack.c.l.b16 %v1580
    %v2100 = vunpack.c.l.b16 %v1581
    %v2101 = vunpack.c.l.b16 %v1582
    %v2102 = vunpack.c.l.b16 %v1583
    %v2103 = vunpack.c.l.b16 %v1584
    %v2104 = vunpack.c.l.b16 %v1585
    %v2105 = vunpack.c.l.b16 %v1586
    %v2106 = vunpack.c.l.b16 %v1587
    %v2107 = vunpack.c.l.b16 %v1588
    %v2108 = vunpack.c.l.b16 %v1589
    %v2109 = vunpack.c.l.b16 %v1590
    %v2110 = vunpack.c.l.b16 %v1591
    %v2111 = vunpack.c.l.b16 %v1592
    %v2112 = vunpack.c.l.b16 %v1593
    %v2113 = vunpack.c.l.b16 %v1594
    %v2114 = vunpack.c.l.b16 %v1595
    %v2115 = vunpack.c.l.b16 %v1596
    %v2116 = vunpack.c.l.b16 %v1597
    %v2117 = vunpack.c.l.b16 %v1598
    %v2118 = vunpack.c.l.b16 %v1599
    %v2119 = vunpack.c.l.b16 %v1600
    %v2120 = vunpack.c.l.b16 %v1601
    %v2121 = vunpack.c.l.b16 %v1602
    %v2122 = vunpack.c.l.b16 %v1603
    %v2123 = vunpack.c.l.b16 %v1604
    %v2124 = vunpack.c.l.b16 %v1605
    %v2125 = vunpack.c.l.b16 %v1606
    %v2126 = vunpack.c.l.b16 %v1607
    %v2127 = vunpack.c.l.b16 %v1608
    %v2128 = vunpack.c.l.b16 %v1609
    %v2129 = vunpack.c.l.b16 %v1610
    %v2130 = vunpack.c.l.b16 %v1611
    %v2131 = vunpack.c.l.b16 %v1612
    %v2132 = vunpack.c.l.b16 %v1613
    %v2133 = vunpack.c.l.b16 %v1614
    %v2134 = vunpack.c.l.b16 %v1615
    %v2135 = vunpack.c.l.b16 %v1616
    %v2136 = vunpack.c.l.b16 %v1617
    %v2137 = vunpack.c.l.b16 %v1618
    %v2138 = vunpack.c.l.b16 %v1619
    %v2139 = vunpack.c.l.b16 %v1620
    %v2140 = vunpack.c.l.b16 %v1621
    %v2141 = vunpack.c.l.b16 %v1622
    %v2142 = vunpack.c.l.b16 %v1623
    %v2143 = vunpack.c.l.b16 %v1624
    %v2144 = vunpack.c.l.b16 %v1625
    %v2145 = vunpack.c.l.b16 %v1626
    %v2146 = vunpack.c.l.b16 %v1627
    %v2147 = vunpack.c.l.b16 %v1628
    %v2148 = vunpack.c.l.b16 %v1629
    %v2149 = vunpack.c.l.b16 %v1630
    %v2150 = vunpack.c.l.b16 %v1631
    %v2151 = vunpack.c.l.b16 %v1632
    %v2152 = vunpack.c.l.b16 %v1633
    %v2153 = vunpack.c.l.b16 %v1634
    %v2154 = vunpack.c.l.b16 %v1635
    %v2155 = vunpack.c.l.b16 %v1636
    %v2156 = vunpack.c.l.b16 %v1637
    %v2157 = vunpack.c.l.b16 %v1638
    %v2158 = vunpack.c.l.b16 %v1639
    %v2159 = vunpack.c.l.b16 %v1640
    %v2160 = vunpack.c.l.b16 %v1641
    %v2161 = vunpack.c.l.b16 %v1642
    %v2162 = vunpack.c.l.b16 %v1643
    %v2163 = vunpack.c.l.b16 %v1644
    %v2164 = vunpack.c.l.b16 %v1645
    %v2165 = vunpack.c.l.b16 %v1646
    %v2166 = vunpack.c.l.b16 %v1647
    %v2167 = vunpack.c.l.b16 %v1648
    %v2168 = vunpack.c.l.b16 %v1649
    %v2169 = vunpack.c.l.b16 %v1650
    %v2170 = vunpack.c.l.b16 %v1651
    %v2171 = vunpack.c.l.b16 %v1652
    %v2172 = vunpack.c.l.b16 %v1653
    %v2173 = vunpack.c.l.b16 %v1654
    %v2174 = vunpack.c.l.b16 %v1655
    %v2175 = vunpack.c.l.b16 %v1656
    %v2176 = vunpack.c.l.b16 %v1657
    %v2177 = vunpack.c.l.b16 %v1658
    %v2178 = vunpack.c.l.b16 %v1659
    %v2179 = vunpack.c.l.b16 %v1660
    %v2180 = vunpack.c.l.b16 %v1661
    %v2181 = vunpack.c.l.b16 %v1662
    %v2182 = vunpack.c.l.b16 %v1663
    %v2183 = vunpack.c.l.b16 %v1664
    %v2184 = vpack.c.b16 %v1929, %v1928
    %v2185 = vpack.c.b16 %v1931, %v1930
    %v2186 = vpack.c.b16 %v1933, %v1932
    %v2187 = vpack.c.b16 %v1935, %v1934
    %v2188 = vpack.c.b16 %v1937, %v1936
    %v2189 = vpack.c.b16 %v1939, %v1938
    %v2190 = vpack.c.b16 %v1941, %v1940
    %v2191 = vpack.c.b16 %v1943, %v1942
    %v2192 = vpack.c.b16 %v1945, %v1944
    %v2193 = vpack.c.b16 %v1947, %v1946
    %v2194 = vpack.c.b16 %v1949, %v1948
    %v2195 = vpack.c.b16 %v1951, %v1950
    %v2196 = vpack.c.b16 %v1953, %v1952
    %v2197 = vpack.c.b16 %v1955, %v1954
    %v2198 = vpack.c.b16 %v1957, %v1956
    %v2199 = vpack.c.b16 %v1959, %v1958
    %v2200 = vpack.c.b16 %v1961, %v1960
    %v2201 = vpack.c.b16 %v1963, %v1962
    %v2202 = vpack.c.b16 %v1965, %v1964
    %v2203 = vpack.c.b16 %v1967, %v1966
    %v2204 = vpack.c.b16 %v1969, %v1968
    %v2205 = vpack.c.b16 %v1971, %v1970
    %v2206 = vpack.c.b16 %v1973, %v1972
    %v2207 = vpack.c.b16 %v1975, %v1974
    %v2208 = vpack.c.b16 %v1977, %v1976
    %v2209 = vpack.c.b16 %v1979, %v1978
    %v2210 = vpack.c.b16 %v1981, %v1980
    %v2211 = vpack.c.b16 %v1983, %v1982
    %v2212 = vpack.c.b16 %v1985, %v1984
    %v2213 = vpack.c.b16 %v1987, %v1986
    %v2214 = vpack.c.b16 %v1989, %v1988
    %v2215 = vpack.c.b16 %v1991, %v1990
    %v2216 = vpack.c.b16 %v1993, %v1992
    %v2217 = vpack.c.b16 %v1995, %v1994
    %v2218 = vpack.c.b16 %v1997, %v1996
    %v2219 = vpack.c.b16 %v1999, %v1998
    %v2220 = vpack.c.b16 %v2001, %v2000
    %v2221 = vpack.c.b16 %v2003, %v2002
    %v2222 = vpack.c.b16 %v2005, %v2004
    %v2223 = vpack.c.b16 %v2007, %v2006
    %v2224 = vpack.c.b16 %v2009, %v2008
    %v2225 = vpack.c.b16 %v2011, %v2010
    %v2226 = vpack.c.b16 %v2013, %v2012
    %v2227 = vpack.c.b16 %v2015, %v2014
    %v2228 = vpack.c.b16 %v2017, %v2016
    %v2229 = vpack.c.b16 %v2019, %v2018
    %v2230 = vpack.c.b16 %v2021, %v2020
    %v2231 = vpack.c.b16 %v2023, %v2022
    %v2232 = vpack.c.b16 %v2025, %v2024
    %v2233 = vpack.c.b16 %v2027, %v2026
    %v2234 = vpack.c.b16 %v2029, %v2028
    %v2235 = vpack.c.b16 %v2031, %v2030
    %v2236 = vpack.c.b16 %v2033, %v2032
    %v2237 = vpack.c.b16 %v2035, %v2034
    %v2238 = vpack.c.b16 %v2037, %v2036
    %v2239 = vpack.c.b16 %v2039, %v2038
    %v2240 = vpack.c.b16 %v2041, %v2040
    %v2241 = vpack.c.b16 %v2043, %v2042
    %v2242 = vpack.c.b16 %v2045, %v2044
    %v2243 = vpack.c.b16 %v2047, %v2046
    %v2244 = vpack.c.b16 %v2049, %v2048
    %v2245 = vpack.c.b16 %v2051, %v2050
    %v2246 = vpack.c.b16 %v2053, %v2052
    %v2247 = vpack.c.b16 %v2055, %v2054
    %v2248 = vpack.c.b16 %v2057, %v2056
    %v2249 = vpack.c.b16 %v2059, %v2058
    %v2250 = vpack.c.b16 %v2061, %v2060
    %v2251 = vpack.c.b16 %v2063, %v2062
    %v2252 = vpack.c.b16 %v2065, %v2064
    %v2253 = vpack.c.b16 %v2067, %v2066
    %v2254 = vpack.c.b16 %v2069, %v2068
    %v2255 = vpack.c.b16 %v2071, %v2070
    %v2256 = vpack.c.b16 %v2073, %v2072
    %v2257 = vpack.c.b16 %v2075, %v2074
    %v2258 = vpack.c.b16 %v2077, %v2076
    %v2259 = vpack.c.b16 %v2079, %v2078
    %v2260 = vpack.c.b16 %v2081, %v2080
    %v2261 = vpack.c.b16 %v2083, %v2082
    %v2262 = vpack.c.b16 %v2085, %v2084
    %v2263 = vpack.c.b16 %v2087, %v2086
    %v2264 = vpack.c.b16 %v2089, %v2088
    %v2265 = vpack.c.b16 %v2091, %v2090
    %v2266 = vpack.c.b16 %v2093, %v2092
    %v2267 = vpack.c.b16 %v2095, %v2094
    %v2268 = vpack.c.b16 %v2097, %v2096
    %v2269 = vpack.c.b16 %v2099, %v2098
    %v2270 = vpack.c.b16 %v2101, %v2100
    %v2271 = vpack.c.b16 %v2103, %v2102
    %v2272 = vpack.c.b16 %v2105, %v2104
    %v2273 = vpack.c.b16 %v2107, %v2106
    %v2274 = vpack.c.b16 %v2109, %v2108
    %v2275 = vpack.c.b16 %v2111, %v2110
    %v2276 = vpack.c.b16 %v2113, %v2112
    %v2277 = vpack.c.b16 %v2115, %v2114
    %v2278 = vpack.c.b16 %v2117, %v2116
    %v2279 = vpack.c.b16 %v2119, %v2118
    %v2280 = vpack.c.b16 %v2121, %v2120
    %v2281 = vpack.c.b16 %v2123, %v2122
    %v2282 = vpack.c.b16 %v2125, %v2124
    %v2283 = vpack.c.b16 %v2127, %v2126
    %v2284 = vpack.c.b16 %v2129, %v2128
    %v2285 = vpack.c.b16 %v2131, %v2130
    %v2286 = vpack.c.b16 %v2133, %v2132
    %v2287 = vpack.c.b16 %v2135, %v2134
    %v2288 = vpack.c.b16 %v2137, %v2136
    %v2289 = vpack.c.b16 %v2139, %v2138
    %v2290 = vpack.c.b16 %v2141, %v2140
    %v2291 = vpack.c.b16 %v2143, %v2142
    %v2292 = vpack.c.b16 %v2145, %v2144
    %v2293 = vpack.c.b16 %v2147, %v2146
    %v2294 = vpack.c.b16 %v2149, %v2148
    %v2295 = vpack.c.b16 %v2151, %v2150
    %v2296 = vpack.c.b16 %v2153, %v2152
    %v2297 = vpack.c.b16 %v2155, %v2154
    %v2298 = vpack.c.b16 %v2157, %v2156
    %v2299 = vpack.c.b16 %v2159, %v2158
    %v2300 = vpack.c.b16 %v2161, %v2160
    %v2301 = vpack.c.b16 %v2163, %v2162
    %v2302 = vpack.c.b16 %v2165, %v2164
    %v2303 = vpack.c.b16 %v2167, %v2166
    %v2304 = vpack.c.b16 %v2169, %v2168
    %v2305 = vpack.c.b16 %v2171, %v2170
    %v2306 = vpack.c.b16 %v2173, %v2172
    %v2307 = vpack.c.b16 %v2175, %v2174
    %v2308 = vpack.c.b16 %v2177, %v2176
    %v2309 = vpack.c.b16 %v2179, %v2178
    %v2310 = vpack.c.b16 %v2181, %v2180
    %v2311 = vpack.c.b16 %v2183, %v2182
    %2440 = vmatprep.subr.bf16.mxu0 0
    %2441 = vmatpush1.bf16.msra.mxu0 %v2191
    %2442 = vmatprep.subr.bf16.mxu0 0
    %2443 = vmatpush1.bf16.msra.mxu0 %v2190
    %2444 = vmatprep.subr.bf16.mxu0 0
    %2445 = vmatpush1.bf16.msra.mxu0 %v2189
    %2446 = vmatprep.subr.bf16.mxu0 0
    %2447 = vmatpush1.bf16.msra.mxu0 %v2188
    %2448 = vmatprep.subr.bf16.mxu0 0
    %2449 = vmatpush1.bf16.msra.mxu0 %v2187
    %2450 = vmatprep.subr.bf16.mxu0 0
    %2451 = vmatpush1.bf16.msra.mxu0 %v2186
    %2452 = vmatprep.subr.bf16.mxu0 0
    %2453 = vmatpush1.bf16.msra.mxu0 %v2185
    %2454 = vmatprep.subr.bf16.mxu0 0
    %2455 = vmatpush1.bf16.msra.mxu0 %v2184
    %2456 = vmatprep.subr.bf16.mxu0 0
    %2457 = vmatpush2.bf16.msra.mxu0 %v2199
    %2458 = vmatprep.subr.bf16.mxu0 0
    %2459 = vmatpush2.bf16.msra.mxu0 %v2198
    %2460 = vmatprep.subr.bf16.mxu0 0
    %2461 = vmatpush2.bf16.msra.mxu0 %v2197
    %2462 = vmatprep.subr.bf16.mxu0 0
    %2463 = vmatpush2.bf16.msra.mxu0 %v2196
    %2464 = vmatprep.subr.bf16.mxu0 0
    %2465 = vmatpush2.bf16.msra.mxu0 %v2195
    %2466 = vmatprep.subr.bf16.mxu0 0
    %2467 = vmatpush2.bf16.msra.mxu0 %v2194
    %2468 = vmatprep.subr.bf16.mxu0 0
    %2469 = vmatpush2.bf16.msra.mxu0 %v2193
    %2470 = vmatprep.subr.bf16.mxu0 0
    %2471 = vmatpush2.bf16.msra.mxu0 %v2192
    %2472 = vmatprep.mubr.bf16.mxu0 %v1394
    %2473 = vmatmul.mubr.bf16.gmra.mxu0 %v1393
    %v2474 = vpop.f32.mrf.mxu0
    %v2475 = vadd.f32 %v1670, %v2474
    %v2476 = vpop.f32.mrf.mxu0
    %v2477 = vpop.f32.mrf.mxu0
    %v2478 = vpop.f32.mrf.mxu0
    %2479 = vdwg.mxu0
    %2480 = vmatprep.subr.bf16.mxu0 0
    %2481 = vmatpush1.bf16.msra.mxu0 %v2207
    %2482 = vmatprep.subr.bf16.mxu0 0
    %2483 = vmatpush1.bf16.msra.mxu0 %v2206
    %2484 = vmatprep.subr.bf16.mxu0 0
    %2485 = vmatpush1.bf16.msra.mxu0 %v2205
    %2486 = vmatprep.subr.bf16.mxu0 0
    %2487 = vmatpush1.bf16.msra.mxu0 %v2204
    %2488 = vmatprep.subr.bf16.mxu0 0
    %2489 = vmatpush1.bf16.msra.mxu0 %v2203
    %2490 = vmatprep.subr.bf16.mxu0 0
    %2491 = vmatpush1.bf16.msra.mxu0 %v2202
    %2492 = vmatprep.subr.bf16.mxu0 0
    %2493 = vmatpush1.bf16.msra.mxu0 %v2201
    %2494 = vmatprep.subr.bf16.mxu0 0
    %2495 = vmatpush1.bf16.msra.mxu0 %v2200
    %2496 = vmatprep.subr.bf16.mxu0 0
    %2497 = vmatpush2.bf16.msra.mxu0 %v2215
    %2498 = vmatprep.subr.bf16.mxu0 0
    %2499 = vmatpush2.bf16.msra.mxu0 %v2214
    %2500 = vmatprep.subr.bf16.mxu0 0
    %2501 = vmatpush2.bf16.msra.mxu0 %v2213
    %2502 = vmatprep.subr.bf16.mxu0 0
    %2503 = vmatpush2.bf16.msra.mxu0 %v2212
    %2504 = vmatprep.subr.bf16.mxu0 0
    %2505 = vmatpush2.bf16.msra.mxu0 %v2211
    %2506 = vmatprep.subr.bf16.mxu0 0
    %2507 = vmatpush2.bf16.msra.mxu0 %v2210
    %2508 = vmatprep.subr.bf16.mxu0 0
    %2509 = vmatpush2.bf16.msra.mxu0 %v2209
    %2510 = vmatprep.subr.bf16.mxu0 0
    %2511 = vmatpush2.bf16.msra.mxu0 %v2208
    %2512 = vmatprep.mubr.bf16.mxu0 %v1396
    %2513 = vmatmul.mubr.bf16.gmra.mxu0 %v1395
    %v2514 = vpop.f32.mrf.mxu0
    %v2515 = vadd.f32 %v2475, %v2514
    %v2516 = vpop.f32.mrf.mxu0
    %v2517 = vpop.f32.mrf.mxu0
    %v2518 = vpop.f32.mrf.mxu0
    %2519 = vdwg.mxu0
    %2520 = vmatprep.subr.bf16.mxu0 0
    %2521 = vmatpush1.bf16.msra.mxu0 %v2223
    %2522 = vmatprep.subr.bf16.mxu0 0
    %2523 = vmatpush1.bf16.msra.mxu0 %v2222
    %2524 = vmatprep.subr.bf16.mxu0 0
    %2525 = vmatpush1.bf16.msra.mxu0 %v2221
    %2526 = vmatprep.subr.bf16.mxu0 0
    %2527 = vmatpush1.bf16.msra.mxu0 %v2220
    %2528 = vmatprep.subr.bf16.mxu0 0
    %2529 = vmatpush1.bf16.msra.mxu0 %v2219
    %2530 = vmatprep.subr.bf16.mxu0 0
    %2531 = vmatpush1.bf16.msra.mxu0 %v2218
    %2532 = vmatprep.subr.bf16.mxu0 0
    %2533 = vmatpush1.bf16.msra.mxu0 %v2217
    %2534 = vmatprep.subr.bf16.mxu0 0
    %2535 = vmatpush1.bf16.msra.mxu0 %v2216
    %2536 = vmatprep.subr.bf16.mxu0 0
    %2537 = vmatpush2.bf16.msra.mxu0 %v2231
    %2538 = vmatprep.subr.bf16.mxu0 0
    %2539 = vmatpush2.bf16.msra.mxu0 %v2230
    %2540 = vmatprep.subr.bf16.mxu0 0
    %2541 = vmatpush2.bf16.msra.mxu0 %v2229
    %2542 = vmatprep.subr.bf16.mxu0 0
    %2543 = vmatpush2.bf16.msra.mxu0 %v2228
    %2544 = vmatprep.subr.bf16.mxu0 0
    %2545 = vmatpush2.bf16.msra.mxu0 %v2227
    %2546 = vmatprep.subr.bf16.mxu0 0
    %2547 = vmatpush2.bf16.msra.mxu0 %v2226
    %2548 = vmatprep.subr.bf16.mxu0 0
    %2549 = vmatpush2.bf16.msra.mxu0 %v2225
    %2550 = vmatprep.subr.bf16.mxu0 0
    %2551 = vmatpush2.bf16.msra.mxu0 %v2224
    %2552 = vmatprep.mubr.bf16.mxu0 %v1398
    %2553 = vmatmul.mubr.bf16.gmra.mxu0 %v1397
    %v2554 = vpop.f32.mrf.mxu0
    %v2555 = vadd.f32 %v2515, %v2554
    %v2556 = vpop.f32.mrf.mxu0
    %v2557 = vpop.f32.mrf.mxu0
    %v2558 = vpop.f32.mrf.mxu0
    %2559 = vdwg.mxu0
    %2560 = vmatprep.subr.bf16.mxu0 0
    %2561 = vmatpush1.bf16.msra.mxu0 %v2239
    %2562 = vmatprep.subr.bf16.mxu0 0
    %2563 = vmatpush1.bf16.msra.mxu0 %v2238
    %2564 = vmatprep.subr.bf16.mxu0 0
    %2565 = vmatpush1.bf16.msra.mxu0 %v2237
    %2566 = vmatprep.subr.bf16.mxu0 0
    %2567 = vmatpush1.bf16.msra.mxu0 %v2236
    %2568 = vmatprep.subr.bf16.mxu0 0
    %2569 = vmatpush1.bf16.msra.mxu0 %v2235
    %2570 = vmatprep.subr.bf16.mxu0 0
    %2571 = vmatpush1.bf16.msra.mxu0 %v2234
    %2572 = vmatprep.subr.bf16.mxu0 0
    %2573 = vmatpush1.bf16.msra.mxu0 %v2233
    %2574 = vmatprep.subr.bf16.mxu0 0
    %2575 = vmatpush1.bf16.msra.mxu0 %v2232
    %2576 = vmatprep.subr.bf16.mxu0 0
    %2577 = vmatpush2.bf16.msra.mxu0 %v2247
    %2578 = vmatprep.subr.bf16.mxu0 0
    %2579 = vmatpush2.bf16.msra.mxu0 %v2246
    %2580 = vmatprep.subr.bf16.mxu0 0
    %2581 = vmatpush2.bf16.msra.mxu0 %v2245
    %2582 = vmatprep.subr.bf16.mxu0 0
    %2583 = vmatpush2.bf16.msra.mxu0 %v2244
    %2584 = vmatprep.subr.bf16.mxu0 0
    %2585 = vmatpush2.bf16.msra.mxu0 %v2243
    %2586 = vmatprep.subr.bf16.mxu0 0
    %2587 = vmatpush2.bf16.msra.mxu0 %v2242
    %2588 = vmatprep.subr.bf16.mxu0 0
    %2589 = vmatpush2.bf16.msra.mxu0 %v2241
    %2590 = vmatprep.subr.bf16.mxu0 0
    %2591 = vmatpush2.bf16.msra.mxu0 %v2240
    %2592 = vmatprep.mubr.bf16.mxu0 %v1400
    %2593 = vmatmul.mubr.bf16.gmra.mxu0 %v1399
    %v2594 = vpop.f32.mrf.mxu0
    %v2595 = vadd.f32 %v2555, %v2594
    %v2596 = vpop.f32.mrf.mxu0
    %v2597 = vpop.f32.mrf.mxu0
    %v2598 = vpop.f32.mrf.mxu0
    %2599 = vdwg.mxu0
    %2600 = vmatprep.subr.bf16.mxu0 0
    %2601 = vmatpush1.bf16.msra.mxu0 %v2255
    %2602 = vmatprep.subr.bf16.mxu0 0
    %2603 = vmatpush1.bf16.msra.mxu0 %v2254
    %2604 = vmatprep.subr.bf16.mxu0 0
    %2605 = vmatpush1.bf16.msra.mxu0 %v2253
    %2606 = vmatprep.subr.bf16.mxu0 0
    %2607 = vmatpush1.bf16.msra.mxu0 %v2252
    %2608 = vmatprep.subr.bf16.mxu0 0
    %2609 = vmatpush1.bf16.msra.mxu0 %v2251
    %2610 = vmatprep.subr.bf16.mxu0 0
    %2611 = vmatpush1.bf16.msra.mxu0 %v2250
    %2612 = vmatprep.subr.bf16.mxu0 0
    %2613 = vmatpush1.bf16.msra.mxu0 %v2249
    %2614 = vmatprep.subr.bf16.mxu0 0
    %2615 = vmatpush1.bf16.msra.mxu0 %v2248
    %2616 = vmatprep.subr.bf16.mxu0 0
    %2617 = vmatpush2.bf16.msra.mxu0 %v2263
    %2618 = vmatprep.subr.bf16.mxu0 0
    %2619 = vmatpush2.bf16.msra.mxu0 %v2262
    %2620 = vmatprep.subr.bf16.mxu0 0
    %2621 = vmatpush2.bf16.msra.mxu0 %v2261
    %2622 = vmatprep.subr.bf16.mxu0 0
    %2623 = vmatpush2.bf16.msra.mxu0 %v2260
    %2624 = vmatprep.subr.bf16.mxu0 0
    %2625 = vmatpush2.bf16.msra.mxu0 %v2259
    %2626 = vmatprep.subr.bf16.mxu0 0
    %2627 = vmatpush2.bf16.msra.mxu0 %v2258
    %2628 = vmatprep.subr.bf16.mxu0 0
    %2629 = vmatpush2.bf16.msra.mxu0 %v2257
    %2630 = vmatprep.subr.bf16.mxu0 0
    %2631 = vmatpush2.bf16.msra.mxu0 %v2256
    %2632 = vmatprep.mubr.bf16.mxu0 %v1402
    %2633 = vmatmul.mubr.bf16.gmra.mxu0 %v1401
    %v2634 = vpop.f32.mrf.mxu0
    %v2635 = vadd.f32 %v2595, %v2634
    %v2636 = vpop.f32.mrf.mxu0
    %v2637 = vpop.f32.mrf.mxu0
    %v2638 = vpop.f32.mrf.mxu0
    %2639 = vdwg.mxu0
    %2640 = vmatprep.subr.bf16.mxu0 0
    %2641 = vmatpush1.bf16.msra.mxu0 %v2271
    %2642 = vmatprep.subr.bf16.mxu0 0
    %2643 = vmatpush1.bf16.msra.mxu0 %v2270
    %2644 = vmatprep.subr.bf16.mxu0 0
    %2645 = vmatpush1.bf16.msra.mxu0 %v2269
    %2646 = vmatprep.subr.bf16.mxu0 0
    %2647 = vmatpush1.bf16.msra.mxu0 %v2268
    %2648 = vmatprep.subr.bf16.mxu0 0
    %2649 = vmatpush1.bf16.msra.mxu0 %v2267
    %2650 = vmatprep.subr.bf16.mxu0 0
    %2651 = vmatpush1.bf16.msra.mxu0 %v2266
    %2652 = vmatprep.subr.bf16.mxu0 0
    %2653 = vmatpush1.bf16.msra.mxu0 %v2265
    %2654 = vmatprep.subr.bf16.mxu0 0
    %2655 = vmatpush1.bf16.msra.mxu0 %v2264
    %2656 = vmatprep.subr.bf16.mxu0 0
    %2657 = vmatpush2.bf16.msra.mxu0 %v2279
    %2658 = vmatprep.subr.bf16.mxu0 0
    %2659 = vmatpush2.bf16.msra.mxu0 %v2278
    %2660 = vmatprep.subr.bf16.mxu0 0
    %2661 = vmatpush2.bf16.msra.mxu0 %v2277
    %2662 = vmatprep.subr.bf16.mxu0 0
    %2663 = vmatpush2.bf16.msra.mxu0 %v2276
    %2664 = vmatprep.subr.bf16.mxu0 0
    %2665 = vmatpush2.bf16.msra.mxu0 %v2275
    %2666 = vmatprep.subr.bf16.mxu0 0
    %2667 = vmatpush2.bf16.msra.mxu0 %v2274
    %2668 = vmatprep.subr.bf16.mxu0 0
    %2669 = vmatpush2.bf16.msra.mxu0 %v2273
    %2670 = vmatprep.subr.bf16.mxu0 0
    %2671 = vmatpush2.bf16.msra.mxu0 %v2272
    %2672 = vmatprep.mubr.bf16.mxu0 %v1404
    %2673 = vmatmul.mubr.bf16.gmra.mxu0 %v1403
    %v2674 = vpop.f32.mrf.mxu0
    %v2675 = vadd.f32 %v2635, %v2674
    %v2676 = vpop.f32.mrf.mxu0
    %v2677 = vpop.f32.mrf.mxu0
    %v2678 = vpop.f32.mrf.mxu0
    %2679 = vdwg.mxu0
    %2680 = vmatprep.subr.bf16.mxu0 0
    %2681 = vmatpush1.bf16.msra.mxu0 %v2287
    %2682 = vmatprep.subr.bf16.mxu0 0
    %2683 = vmatpush1.bf16.msra.mxu0 %v2286
    %2684 = vmatprep.subr.bf16.mxu0 0
    %2685 = vmatpush1.bf16.msra.mxu0 %v2285
    %2686 = vmatprep.subr.bf16.mxu0 0
    %2687 = vmatpush1.bf16.msra.mxu0 %v2284
    %2688 = vmatprep.subr.bf16.mxu0 0
    %2689 = vmatpush1.bf16.msra.mxu0 %v2283
    %2690 = vmatprep.subr.bf16.mxu0 0
    %2691 = vmatpush1.bf16.msra.mxu0 %v2282
    %2692 = vmatprep.subr.bf16.mxu0 0
    %2693 = vmatpush1.bf16.msra.mxu0 %v2281
    %2694 = vmatprep.subr.bf16.mxu0 0
    %2695 = vmatpush1.bf16.msra.mxu0 %v2280
    %2696 = vmatprep.subr.bf16.mxu0 0
    %2697 = vmatpush2.bf16.msra.mxu0 %v2295
    %2698 = vmatprep.subr.bf16.mxu0 0
    %2699 = vmatpush2.bf16.msra.mxu0 %v2294
    %2700 = vmatprep.subr.bf16.mxu0 0
    %2701 = vmatpush2.bf16.msra.mxu0 %v2293
    %2702 = vmatprep.subr.bf16.mxu0 0
    %2703 = vmatpush2.bf16.msra.mxu0 %v2292
    %2704 = vmatprep.subr.bf16.mxu0 0
    %2705 = vmatpush2.bf16.msra.mxu0 %v2291
    %2706 = vmatprep.subr.bf16.mxu0 0
    %2707 = vmatpush2.bf16.msra.mxu0 %v2290
    %2708 = vmatprep.subr.bf16.mxu0 0
    %2709 = vmatpush2.bf16.msra.mxu0 %v2289
    %2710 = vmatprep.subr.bf16.mxu0 0
    %2711 = vmatpush2.bf16.msra.mxu0 %v2288
    %2712 = vmatprep.mubr.bf16.mxu0 %v1406
    %2713 = vmatmul.mubr.bf16.gmra.mxu0 %v1405
    %v2714 = vpop.f32.mrf.mxu0
    %v2715 = vadd.f32 %v2675, %v2714
    %v2716 = vpop.f32.mrf.mxu0
    %v2717 = vpop.f32.mrf.mxu0
    %v2718 = vpop.f32.mrf.mxu0
    %2719 = vdwg.mxu0
    %2720 = vmatprep.subr.bf16.mxu0 0
    %2721 = vmatpush1.bf16.msra.mxu0 %v2303
    %2722 = vmatprep.subr.bf16.mxu0 0
    %2723 = vmatpush1.bf16.msra.mxu0 %v2302
    %2724 = vmatprep.subr.bf16.mxu0 0
    %2725 = vmatpush1.bf16.msra.mxu0 %v2301
    %2726 = vmatprep.subr.bf16.mxu0 0
    %2727 = vmatpush1.bf16.msra.mxu0 %v2300
    %2728 = vmatprep.subr.bf16.mxu0 0
    %2729 = vmatpush1.bf16.msra.mxu0 %v2299
    %2730 = vmatprep.subr.bf16.mxu0 0
    %2731 = vmatpush1.bf16.msra.mxu0 %v2298
    %2732 = vmatprep.subr.bf16.mxu0 0
    %2733 = vmatpush1.bf16.msra.mxu0 %v2297
    %2734 = vmatprep.subr.bf16.mxu0 0
    %2735 = vmatpush1.bf16.msra.mxu0 %v2296
    %2736 = vmatprep.subr.bf16.mxu0 0
    %2737 = vmatpush2.bf16.msra.mxu0 %v2311
    %2738 = vmatprep.subr.bf16.mxu0 0
    %2739 = vmatpush2.bf16.msra.mxu0 %v2310
    %2740 = vmatprep.subr.bf16.mxu0 0
    %2741 = vmatpush2.bf16.msra.mxu0 %v2309
    %2742 = vmatprep.subr.bf16.mxu0 0
    %2743 = vmatpush2.bf16.msra.mxu0 %v2308
    %2744 = vmatprep.subr.bf16.mxu0 0
    %2745 = vmatpush2.bf16.msra.mxu0 %v2307
    %2746 = vmatprep.subr.bf16.mxu0 0
    %2747 = vmatpush2.bf16.msra.mxu0 %v2306
    %2748 = vmatprep.subr.bf16.mxu0 0
    %2749 = vmatpush2.bf16.msra.mxu0 %v2305
    %2750 = vmatprep.subr.bf16.mxu0 0
    %2751 = vmatpush2.bf16.msra.mxu0 %v2304
    %2752 = vmatprep.mubr.bf16.mxu0 %v1408
    %2753 = vmatmul.mubr.bf16.gmra.mxu0 %v1407
    %v2754 = vpop.f32.mrf.mxu0
    %v2755 = vadd.f32 %v2715, %v2754
    %v2756 = vpop.f32.mrf.mxu0
    %v2757 = vpop.f32.mrf.mxu0
    %v2758 = vpop.f32.mrf.mxu0
    %2759 = vdwg.mxu0
    %vm2760 = vcmask 254976
    %2761 = vst.msk [vmem:[#allocation5] sm:$0x3] %vm2760, %v2755
    // Predicated region
    $region50: #{encoder_forward.1} parent=1 // pred_check
      _
    $region51: #{encoder_forward.1} parent=1 // pred_check_branch
      %2763 = sbr.rel (0) target = $region53
    $region52: #{encoder_forward.1} parent=1 // pred_region
      %s2765 = ssub.s32 32, 32
      %2766 = vsyncadd [#allocation6], %s2765
      %s2768 = sshll.u32 [#allocation5], 4
      %s2769 = int_to_ptr.vmem [resolvable:$true] %s2768
      %2771 = dma.vmem_to_hbm [thread:$0]  %s2769, 32, %s12, [#allocation6]
    $region53: #{encoder_forward.1} parent=1 // pred_fallthru
      _
    // Predicated region
    $region54: #{encoder_forward.1} parent=1 // pred_check
      _
    $region55: #{encoder_forward.1} parent=1 // pred_check_branch
      %2773 = sbr.rel (0) target = $region57
    $region56: #{encoder_forward.1} parent=1 // pred_region
      %2774 = dma.done [#allocation6], 32
    $region57: #{encoder_forward.1} parent=1 // pred_fallthru
      _
    %2775 = vsyncpa [#allocation6], 1

</llo_original>
